<compile_context>
chip_gen: v7x
topology: tpu7x:2x2x1
jax: 0.10.0
libtpu: 0.0.40
codegen_flags: <defaults>
</compile_context>

<pallas_src>
import math
import functools

import jax
import jax.numpy as jnp
from jax.experimental import pallas as pl
from jax.experimental.pallas import tpu as pltpu


# ----------------------------------------------------------------------------
# Kernel body (whole forward for one batch element)
# ----------------------------------------------------------------------------
def _layernorm(x, gamma, beta, eps=1e-5):
    mu = jnp.mean(x, axis=-1, keepdims=True)
    var = jnp.mean((x - mu) ** 2, axis=-1, keepdims=True)
    return (x - mu) * jax.lax.rsqrt(var + eps) * gamma + beta


def _fused_encoder_kernel(
    x_ref, pos_ref, bias_ref,
    wq_ref, bq_ref, wk_ref, bk_ref, wv_ref, bv_ref, wo_ref, bo_ref,
    g1_ref, be1_ref, w1_ref, bf1_ref, w2_ref, bf2_ref, g2_ref, be2_ref,
    wz_ref, bz_ref, wh_ref, bh_ref,
    o_ref,
    *, num_layers, num_heads, chunk_size, scale,
):
    L, D = x_ref.shape                      # (num_chunks*chunk_size, hidden)
    H = num_heads
    Dh = D // H
    K = chunk_size
    C = L // K
    inv_sqrt_dh = 1.0 / math.sqrt(Dh)
    bf16 = jnp.bfloat16

    # embedding scale + per-chunk positional encoding (elementwise, f32)
    x = x_ref[...].astype(jnp.float32) * scale + pos_ref[...].astype(jnp.float32)

    # block-diagonal additive bias: 0 within a chunk, -1e30 across chunks
    attn_bias = bias_ref[...]

    for l in range(num_layers):             # static unroll (num_layers is tiny)
        xb = x.astype(bf16)
        attn = jnp.zeros((L, D), jnp.float32)
        for h in range(H):                  # static unroll over heads
            i = l * H + h
            q = jnp.dot(xb, wq_ref[i], preferred_element_type=jnp.float32) + bq_ref[i]
            k = jnp.dot(xb, wk_ref[i], preferred_element_type=jnp.float32) + bk_ref[i]
            v = jnp.dot(xb, wv_ref[i], preferred_element_type=jnp.float32) + bv_ref[i]
            s = jax.lax.dot_general(
                q.astype(bf16), k.astype(bf16),
                (((1,), (1,)), ((), ())),
                preferred_element_type=jnp.float32,
            ) * inv_sqrt_dh + attn_bias                       # (L, L)
            s = s - jnp.max(s, axis=-1, keepdims=True)
            p = jnp.exp(s)
            p = p * pl.reciprocal(jnp.sum(p, axis=-1, keepdims=True), approx=True)
            ctx = jnp.dot(p.astype(bf16), v.astype(bf16),
                          preferred_element_type=jnp.float32)  # (L, Dh)
            attn = attn + jnp.dot(ctx.astype(bf16), wo_ref[i],
                                  preferred_element_type=jnp.float32)
        attn = attn + bo_ref[l]

        # AddNorm 1
        y = _layernorm(x + attn, g1_ref[l], be1_ref[l])

        # Position-wise FFN (Linear -> ReLU -> Linear)
        h1 = jnp.maximum(
            jnp.dot(y.astype(bf16), w1_ref[l], preferred_element_type=jnp.float32)
            + bf1_ref[l], 0.0)
        ffn = jnp.dot(h1.astype(bf16), w2_ref[l],
                      preferred_element_type=jnp.float32) + bf2_ref[l]

        # AddNorm 2
        x = _layernorm(y + ffn, g2_ref[l], be2_ref[l])

    # Chunk summaries (last token of each chunk) feed the MinGRU recurrence.
    # Only the final hidden state is needed (== x[:, -1] after the MinGRU).
    wz = wz_ref[...]; bz = bz_ref[...]
    wh = wh_ref[...]; bh = bh_ref[...]
    h_state = jnp.zeros((1, D), jnp.float32)
    for c in range(C):                      # static unroll (C is tiny)
        xc = x[c * K + K - 1: c * K + K, :].astype(bf16)       # (1, D)
        z = jax.nn.sigmoid(
            jnp.dot(xc, wz, preferred_element_type=jnp.float32) + bz)
        h_til = jnp.dot(xc, wh, preferred_element_type=jnp.float32) + bh
        h_state = (1.0 - z) * h_state + z * h_til
    o_ref[...] = h_state[None].astype(o_ref.dtype)             # (1, 1, D)


# ----------------------------------------------------------------------------
# Parameter preprocessing (plain JAX glue, done once per call)
# ----------------------------------------------------------------------------
def _stack_layer_params(layers, num_heads):
    NL = len(layers)
    D = layers[0]["wq"].shape[0]
    H = num_heads
    Dh = D // H
    bf16 = jnp.bfloat16

    def stack(name):
        return jnp.stack([lp[name] for lp in layers])          # (NL, ...)

    def head_cols_w(w):   # (NL, D, D) -> (NL*H, D, Dh): split output columns
        return w.reshape(NL, D, H, Dh).transpose(0, 2, 1, 3).reshape(NL * H, D, Dh)

    def head_cols_b(b):   # (NL, 1, D) -> (NL*H, 1, Dh)
        return b.reshape(NL, 1, H, Dh).transpose(0, 2, 1, 3).reshape(NL * H, 1, Dh)

    def head_rows_w(w):   # (NL, D, D) -> (NL*H, Dh, D): split input rows
        return w.reshape(NL, H, Dh, D).reshape(NL * H, Dh, D)

    return {
        "wq": head_cols_w(stack("wq")).astype(bf16), "bq": head_cols_b(stack("bq")),
        "wk": head_cols_w(stack("wk")).astype(bf16), "bk": head_cols_b(stack("bk")),
        "wv": head_cols_w(stack("wv")).astype(bf16), "bv": head_cols_b(stack("bv")),
        "wo": head_rows_w(stack("wo")).astype(bf16), "bo": stack("bo"),
        "g1": stack("g1"), "be1": stack("be1"),
        "w1": stack("w1").astype(bf16), "bf1": stack("bf1"),
        "w2": stack("w2").astype(bf16), "bf2": stack("bf2"),
        "g2": stack("g2"), "be2": stack("be2"),
    }


# ----------------------------------------------------------------------------
# Pallas wrapper (single fused pallas_call, grid over batch)
# ----------------------------------------------------------------------------
def fused_transformer_encoder(x_emb, pos_full, attn_bias, sp, gp, *,
                              num_heads, num_layers, chunk_size):
    B, L, D = x_emb.shape
    x2d = x_emb.reshape(B * L, D)           # lane=hidden, sublane=seq (2-D slab)

    kernel = functools.partial(
        _fused_encoder_kernel,
        num_layers=num_layers, num_heads=num_heads,
        chunk_size=chunk_size, scale=math.sqrt(D))

    def full(arr):                           # fully VMEM-resident weight block
        return pl.BlockSpec(arr.shape, lambda b, _nd=arr.ndim: (0,) * _nd)

    weight_args = [
        sp["wq"], sp["bq"], sp["wk"], sp["bk"], sp["wv"], sp["bv"],
        sp["wo"], sp["bo"], sp["g1"], sp["be1"],
        sp["w1"], sp["bf1"], sp["w2"], sp["bf2"], sp["g2"], sp["be2"],
        gp["wz"], gp["bz"], gp["wh"], gp["bh"],
    ]

    out = pl.pallas_call(
        kernel,
        out_shape=jax.ShapeDtypeStruct((B, 1, D), jnp.float32),
        grid=(B,),
        in_specs=[
            pl.BlockSpec((L, D), lambda b: (b, 0)),     # this batch's token slab
            pl.BlockSpec((L, D), lambda b: (0, 0)),     # tiled positional enc
            pl.BlockSpec((L, L), lambda b: (0, 0)),     # block-diag attn bias
        ] + [full(a) for a in weight_args],
        out_specs=pl.BlockSpec((1, 1, D), lambda b: (b, 0, 0)),
        compiler_params=pltpu.CompilerParams(dimension_semantics=("parallel",)),
    )(x2d, pos_full, attn_bias, *weight_args)
    return out[:, 0, :]                                  # (B, D)


# ----------------------------------------------------------------------------
# Parameter init, positional table & full forward
# ----------------------------------------------------------------------------
def make_positional_encoding(max_len, d):
    pos = jnp.arange(max_len, dtype=jnp.float32)[:, None]
    i = jnp.arange(0, d, 2, dtype=jnp.float32)[None, :]
    angle = pos / jnp.power(10000.0, i / d)
    pe = jnp.zeros((max_len, d), jnp.float32)
    pe = pe.at[:, 0::2].set(jnp.sin(angle))
    pe = pe.at[:, 1::2].set(jnp.cos(angle))
    return pe[None, :, :]                                # (1, max_len, d)


def init_params(key, vocab_size, num_layers, D, F):
    keys = jax.random.split(key, 4 + num_layers)
    params = {
        "embedding": 0.02 * jax.random.normal(keys[0], (vocab_size, D), jnp.float32),
        "layers": [],
        "mingru": {
            "wz": 0.02 * jax.random.normal(keys[1], (D, D), jnp.float32),
            "bz": jnp.zeros((1, D), jnp.float32),
            "wh": 0.02 * jax.random.normal(keys[2], (D, D), jnp.float32),
            "bh": jnp.zeros((1, D), jnp.float32),
        },
    }
    for l in range(num_layers):
        ks = jax.random.split(keys[4 + l], 6)
        params["layers"].append({
            "wq": 0.02 * jax.random.normal(ks[0], (D, D), jnp.float32),
            "bq": jnp.zeros((1, D), jnp.float32),
            "wk": 0.02 * jax.random.normal(ks[1], (D, D), jnp.float32),
            "bk": jnp.zeros((1, D), jnp.float32),
            "wv": 0.02 * jax.random.normal(ks[2], (D, D), jnp.float32),
            "bv": jnp.zeros((1, D), jnp.float32),
            "wo": 0.02 * jax.random.normal(ks[3], (D, D), jnp.float32),
            "bo": jnp.zeros((1, D), jnp.float32),
            "g1": jnp.ones((1, D), jnp.float32),
            "be1": jnp.zeros((1, D), jnp.float32),
            "w1": 0.02 * jax.random.normal(ks[4], (D, F), jnp.float32),
            "bf1": jnp.zeros((1, F), jnp.float32),
            "w2": 0.02 * jax.random.normal(ks[5], (F, D), jnp.float32),
            "bf2": jnp.zeros((1, D), jnp.float32),
            "g2": jnp.ones((1, D), jnp.float32),
            "be2": jnp.zeros((1, D), jnp.float32),
        })
    return params


def transformer_encoder_forward(tokens, params, *, num_heads, num_hiddens,
                                chunk_size, pos_table):
    # tokens: (batch, seq_len) int32 ; mirrors TransformerEncoder.forward (mask=None).
    B, L = tokens.shape
    D = num_hiddens
    K = chunk_size
    assert L % K == 0, "seq_len must be divisible by chunk_size"
    assert pos_table.shape[1] >= K, "positional table shorter than chunk_size"
    C = L // K

    # Embedding gather stays in plain JAX (glue); everything else is in-kernel.
    x_emb = jnp.take(params["embedding"], tokens, axis=0)      # (B, L, D)

    # Per-chunk positional encoding tiled over the chunk axis (indices reset per chunk).
    pos_full = jnp.tile(pos_table[0, :K, :], (C, 1))           # (L, D)

    # Block-diagonal additive attention bias (chunks attend only within themselves).
    chunk_id = jnp.arange(L, dtype=jnp.int32) // K
    attn_bias = jnp.where(chunk_id[:, None] == chunk_id[None, :],
                          0.0, -1e30).astype(jnp.float32)      # (L, L)

    sp = _stack_layer_params(params["layers"], num_heads)
    mg = params["mingru"]
    gp = {"wz": mg["wz"].astype(jnp.bfloat16), "bz": mg["bz"],
          "wh": mg["wh"].astype(jnp.bfloat16), "bh": mg["bh"]}

    return fused_transformer_encoder(
        x_emb, pos_full, attn_bias, sp, gp,
        num_heads=num_heads, num_layers=len(params["layers"]), chunk_size=K)


# ----------------------------------------------------------------------------
if __name__ == "__main__":
    vocab_size = 50
    num_heads = 2
    num_layers = 2
    num_hiddens = 32
    ffn_num_hiddens = 64
    chunk_size = 4
    batch, seq_len = 2, 8

    key = jax.random.PRNGKey(0)
    k_tok, k_par = jax.random.split(key)
    tokens = jax.random.randint(k_tok, (batch, seq_len), 0, vocab_size, dtype=jnp.int32)

    params = init_params(k_par, vocab_size, num_layers, num_hiddens, ffn_num_hiddens)
    pos_table = make_positional_encoding(chunk_size, num_hiddens)

    out = transformer_encoder_forward(
        tokens, params,
        num_heads=num_heads, num_hiddens=num_hiddens,
        chunk_size=chunk_size, pos_table=pos_table,
    )
    out = jax.block_until_ready(out)
    assert out.shape == (batch, num_hiddens)
    assert bool(jnp.all(jnp.isfinite(out)))
    print("KERNEL_OK")
</pallas_src>

<mosaic_0001>
module attributes {stable_mosaic.version = 11 : i64} {
  func.func @_fused_encoder_kernel(%arg0: i32, %arg1: memref<8x32xf32, #tpu.memory_space<vmem>>, %arg2: memref<8x32xf32, #tpu.memory_space<vmem>>, %arg3: memref<8x8xf32, #tpu.memory_space<vmem>>, %arg4: memref<4x32x16xbf16, #tpu.memory_space<vmem>>, %arg5: memref<4x1x16xf32, #tpu.memory_space<vmem>>, %arg6: memref<4x32x16xbf16, #tpu.memory_space<vmem>>, %arg7: memref<4x1x16xf32, #tpu.memory_space<vmem>>, %arg8: memref<4x32x16xbf16, #tpu.memory_space<vmem>>, %arg9: memref<4x1x16xf32, #tpu.memory_space<vmem>>, %arg10: memref<4x16x32xbf16, #tpu.memory_space<vmem>>, %arg11: memref<2x1x32xf32, #tpu.memory_space<vmem>>, %arg12: memref<2x1x32xf32, #tpu.memory_space<vmem>>, %arg13: memref<2x1x32xf32, #tpu.memory_space<vmem>>, %arg14: memref<2x32x64xbf16, #tpu.memory_space<vmem>>, %arg15: memref<2x1x64xf32, #tpu.memory_space<vmem>>, %arg16: memref<2x64x32xbf16, #tpu.memory_space<vmem>>, %arg17: memref<2x1x32xf32, #tpu.memory_space<vmem>>, %arg18: memref<2x1x32xf32, #tpu.memory_space<vmem>>, %arg19: memref<2x1x32xf32, #tpu.memory_space<vmem>>, %arg20: memref<32x32xbf16, #tpu.memory_space<vmem>>, %arg21: memref<1x32xf32, #tpu.memory_space<vmem>>, %arg22: memref<32x32xbf16, #tpu.memory_space<vmem>>, %arg23: memref<1x32xf32, #tpu.memory_space<vmem>>, %arg24: memref<1x1x32xf32, #tpu.memory_space<vmem>>) attributes {dimension_semantics = [#tpu.dimension_semantics<parallel>], iteration_bounds = array<i64: 2>, scalar_prefetch = 0 : i64, scratch_operands = 0 : i64, tpu.core_type = #tpu.core_type<tc>, window_params = [{transform_indices = @transform_0, window_bounds = array<i64: 8, 32>}, {pipeline_mode = #tpu.pipeline_mode<synchronous>, transform_indices = @transform_1, window_bounds = array<i64: 8, 32>}, {pipeline_mode = #tpu.pipeline_mode<synchronous>, transform_indices = @transform_2, window_bounds = array<i64: 8, 8>}, {pipeline_mode = #tpu.pipeline_mode<synchronous>, transform_indices = @transform_3, window_bounds = array<i64: 4, 32, 16>}, {pipeline_mode = #tpu.pipeline_mode<synchronous>, transform_indices = @transform_4, window_bounds = array<i64: 4, 1, 16>}, {pipeline_mode = #tpu.pipeline_mode<synchronous>, transform_indices = @transform_5, window_bounds = array<i64: 4, 32, 16>}, {pipeline_mode = #tpu.pipeline_mode<synchronous>, transform_indices = @transform_6, window_bounds = array<i64: 4, 1, 16>}, {pipeline_mode = #tpu.pipeline_mode<synchronous>, transform_indices = @transform_7, window_bounds = array<i64: 4, 32, 16>}, {pipeline_mode = #tpu.pipeline_mode<synchronous>, transform_indices = @transform_8, window_bounds = array<i64: 4, 1, 16>}, {pipeline_mode = #tpu.pipeline_mode<synchronous>, transform_indices = @transform_9, window_bounds = array<i64: 4, 16, 32>}, {pipeline_mode = #tpu.pipeline_mode<synchronous>, transform_indices = @transform_10, window_bounds = array<i64: 2, 1, 32>}, {pipeline_mode = #tpu.pipeline_mode<synchronous>, transform_indices = @transform_11, window_bounds = array<i64: 2, 1, 32>}, {pipeline_mode = #tpu.pipeline_mode<synchronous>, transform_indices = @transform_12, window_bounds = array<i64: 2, 1, 32>}, {pipeline_mode = #tpu.pipeline_mode<synchronous>, transform_indices = @transform_13, window_bounds = array<i64: 2, 32, 64>}, {pipeline_mode = #tpu.pipeline_mode<synchronous>, transform_indices = @transform_14, window_bounds = array<i64: 2, 1, 64>}, {pipeline_mode = #tpu.pipeline_mode<synchronous>, transform_indices = @transform_15, window_bounds = array<i64: 2, 64, 32>}, {pipeline_mode = #tpu.pipeline_mode<synchronous>, transform_indices = @transform_16, window_bounds = array<i64: 2, 1, 32>}, {pipeline_mode = #tpu.pipeline_mode<synchronous>, transform_indices = @transform_17, window_bounds = array<i64: 2, 1, 32>}, {pipeline_mode = #tpu.pipeline_mode<synchronous>, transform_indices = @transform_18, window_bounds = array<i64: 2, 1, 32>}, {pipeline_mode = #tpu.pipeline_mode<synchronous>, transform_indices = @transform_19, window_bounds = array<i64: 32, 32>}, {pipeline_mode = #tpu.pipeline_mode<synchronous>, transform_indices = @transform_20, window_bounds = array<i64: 1, 32>}, {pipeline_mode = #tpu.pipeline_mode<synchronous>, transform_indices = @transform_21, window_bounds = array<i64: 32, 32>}, {pipeline_mode = #tpu.pipeline_mode<synchronous>, transform_indices = @transform_22, window_bounds = array<i64: 1, 32>}, {transform_indices = @transform_23, window_bounds = array<i64: 1, 1, 32>}]} {
    %c0 = arith.constant 0 : index
    %c0_0 = arith.constant 0 : index
    %0 = vector.load %arg1[%c0, %c0_0] : memref<8x32xf32, #tpu.memory_space<vmem>>, vector<8x32xf32>
    %cst = arith.constant 5.65685415 : f32
    %1 = vector.broadcast %cst : f32 to vector<8x32xf32>
    %2 = arith.mulf %0, %1 : vector<8x32xf32>
    %c0_1 = arith.constant 0 : index
    %c0_2 = arith.constant 0 : index
    %3 = vector.load %arg2[%c0_1, %c0_2] : memref<8x32xf32, #tpu.memory_space<vmem>>, vector<8x32xf32>
    %4 = arith.addf %2, %3 : vector<8x32xf32>
    %c0_3 = arith.constant 0 : index
    %c0_4 = arith.constant 0 : index
    %5 = vector.load %arg3[%c0_3, %c0_4] : memref<8x8xf32, #tpu.memory_space<vmem>>, vector<8x8xf32>
    %6 = arith.truncf %4 : vector<8x32xf32> to vector<8x32xbf16>
    %cst_5 = arith.constant 0.000000e+00 : f32
    %7 = vector.broadcast %cst_5 : f32 to vector<8x32xf32>
    %c0_6 = arith.constant 0 : index
    %c0_7 = arith.constant 0 : index
    %c0_8 = arith.constant 0 : index
    %8 = vector.load %arg4[%c0_6, %c0_7, %c0_8] : memref<4x32x16xbf16, #tpu.memory_space<vmem>>, vector<1x32x16xbf16>
    %9 = vector.shape_cast %8 : vector<1x32x16xbf16> to vector<32x16xbf16>
    %cst_9 = arith.constant dense<0.000000e+00> : vector<8x16xf32>
    %10 = tpu.matmul %6, %9, %cst_9 {dimension_numbers = #tpu.dot_dimension_numbers<[1], [0], [0], [1], [0, 0, 1, 1], [], []>} : vector<8x32xbf16>, vector<32x16xbf16>, vector<8x16xf32> -> vector<8x16xf32>
    %c0_10 = arith.constant 0 : index
    %c0_11 = arith.constant 0 : index
    %c0_12 = arith.constant 0 : index
    %11 = vector.load %arg5[%c0_10, %c0_11, %c0_12] : memref<4x1x16xf32, #tpu.memory_space<vmem>>, vector<1x1x16xf32>
    %12 = vector.shape_cast %11 : vector<1x1x16xf32> to vector<1x16xf32>
    %13 = vector.broadcast %12 : vector<1x16xf32> to vector<8x16xf32>
    %14 = arith.addf %10, %13 : vector<8x16xf32>
    %c0_13 = arith.constant 0 : index
    %c0_14 = arith.constant 0 : index
    %c0_15 = arith.constant 0 : index
    %15 = vector.load %arg6[%c0_13, %c0_14, %c0_15] : memref<4x32x16xbf16, #tpu.memory_space<vmem>>, vector<1x32x16xbf16>
    %16 = vector.shape_cast %15 : vector<1x32x16xbf16> to vector<32x16xbf16>
    %cst_16 = arith.constant dense<0.000000e+00> : vector<8x16xf32>
    %17 = tpu.matmul %6, %16, %cst_16 {dimension_numbers = #tpu.dot_dimension_numbers<[1], [0], [0], [1], [0, 0, 1, 1], [], []>} : vector<8x32xbf16>, vector<32x16xbf16>, vector<8x16xf32> -> vector<8x16xf32>
    %c0_17 = arith.constant 0 : index
    %c0_18 = arith.constant 0 : index
    %c0_19 = arith.constant 0 : index
    %18 = vector.load %arg7[%c0_17, %c0_18, %c0_19] : memref<4x1x16xf32, #tpu.memory_space<vmem>>, vector<1x1x16xf32>
    %19 = vector.shape_cast %18 : vector<1x1x16xf32> to vector<1x16xf32>
    %20 = vector.broadcast %19 : vector<1x16xf32> to vector<8x16xf32>
    %21 = arith.addf %17, %20 : vector<8x16xf32>
    %c0_20 = arith.constant 0 : index
    %c0_21 = arith.constant 0 : index
    %c0_22 = arith.constant 0 : index
    %22 = vector.load %arg8[%c0_20, %c0_21, %c0_22] : memref<4x32x16xbf16, #tpu.memory_space<vmem>>, vector<1x32x16xbf16>
    %23 = vector.shape_cast %22 : vector<1x32x16xbf16> to vector<32x16xbf16>
    %cst_23 = arith.constant dense<0.000000e+00> : vector<8x16xf32>
    %24 = tpu.matmul %6, %23, %cst_23 {dimension_numbers = #tpu.dot_dimension_numbers<[1], [0], [0], [1], [0, 0, 1, 1], [], []>} : vector<8x32xbf16>, vector<32x16xbf16>, vector<8x16xf32> -> vector<8x16xf32>
    %c0_24 = arith.constant 0 : index
    %c0_25 = arith.constant 0 : index
    %c0_26 = arith.constant 0 : index
    %25 = vector.load %arg9[%c0_24, %c0_25, %c0_26] : memref<4x1x16xf32, #tpu.memory_space<vmem>>, vector<1x1x16xf32>
    %26 = vector.shape_cast %25 : vector<1x1x16xf32> to vector<1x16xf32>
    %27 = vector.broadcast %26 : vector<1x16xf32> to vector<8x16xf32>
    %28 = arith.addf %24, %27 : vector<8x16xf32>
    %29 = arith.truncf %14 : vector<8x16xf32> to vector<8x16xbf16>
    %30 = arith.truncf %21 : vector<8x16xf32> to vector<8x16xbf16>
    %cst_27 = arith.constant dense<0.000000e+00> : vector<8x8xf32>
    %31 = tpu.matmul %29, %30, %cst_27 {dimension_numbers = #tpu.dot_dimension_numbers<[1], [1], [0], [0], [0, 0, 1, 0], [], []>} : vector<8x16xbf16>, vector<8x16xbf16>, vector<8x8xf32> -> vector<8x8xf32>
    %cst_28 = arith.constant 2.500000e-01 : f32
    %32 = vector.broadcast %cst_28 : f32 to vector<8x8xf32>
    %33 = arith.mulf %31, %32 : vector<8x8xf32>
    %34 = arith.addf %33, %5 : vector<8x8xf32>
    %cst_29 = arith.constant dense<0xFF800000> : vector<8xf32>
    %35 = vector.multi_reduction <maximumf>, %34, %cst_29 [1] : vector<8x8xf32> to vector<8xf32>
    %36 = vector.shape_cast %35 : vector<8xf32> to vector<8x1xf32>
    %37 = vector.broadcast %36 : vector<8x1xf32> to vector<8x8xf32>
    %38 = arith.subf %34, %37 : vector<8x8xf32>
    %39 = math.exp %38 : vector<8x8xf32>
    %cst_30 = arith.constant dense<0.000000e+00> : vector<8xf32>
    %40 = vector.multi_reduction <add>, %39, %cst_30 [1] : vector<8x8xf32> to vector<8xf32>
    %41 = vector.shape_cast %40 : vector<8xf32> to vector<8x1xf32>
    %42 = tpu.reciprocal %41 {approx = true} : vector<8x1xf32> -> vector<8x1xf32>
    %43 = vector.broadcast %42 : vector<8x1xf32> to vector<8x8xf32>
    %44 = arith.mulf %39, %43 : vector<8x8xf32>
    %45 = arith.truncf %44 : vector<8x8xf32> to vector<8x8xbf16>
    %46 = arith.truncf %28 : vector<8x16xf32> to vector<8x16xbf16>
    %cst_31 = arith.constant dense<0.000000e+00> : vector<8x16xf32>
    %47 = tpu.matmul %45, %46, %cst_31 {dimension_numbers = #tpu.dot_dimension_numbers<[1], [0], [0], [1], [0, 0, 1, 1], [], []>} : vector<8x8xbf16>, vector<8x16xbf16>, vector<8x16xf32> -> vector<8x16xf32>
    %48 = arith.truncf %47 : vector<8x16xf32> to vector<8x16xbf16>
    %c0_32 = arith.constant 0 : index
    %c0_33 = arith.constant 0 : index
    %c0_34 = arith.constant 0 : index
    %49 = vector.load %arg10[%c0_32, %c0_33, %c0_34] : memref<4x16x32xbf16, #tpu.memory_space<vmem>>, vector<1x16x32xbf16>
    %50 = vector.shape_cast %49 : vector<1x16x32xbf16> to vector<16x32xbf16>
    %cst_35 = arith.constant dense<0.000000e+00> : vector<8x32xf32>
    %51 = tpu.matmul %48, %50, %cst_35 {dimension_numbers = #tpu.dot_dimension_numbers<[1], [0], [0], [1], [0, 0, 1, 1], [], []>} : vector<8x16xbf16>, vector<16x32xbf16>, vector<8x32xf32> -> vector<8x32xf32>
    %52 = arith.addf %7, %51 : vector<8x32xf32>
    %c1 = arith.constant 1 : index
    %c0_36 = arith.constant 0 : index
    %c0_37 = arith.constant 0 : index
    %53 = vector.load %arg4[%c1, %c0_36, %c0_37] : memref<4x32x16xbf16, #tpu.memory_space<vmem>>, vector<1x32x16xbf16>
    %54 = vector.shape_cast %53 : vector<1x32x16xbf16> to vector<32x16xbf16>
    %cst_38 = arith.constant dense<0.000000e+00> : vector<8x16xf32>
    %55 = tpu.matmul %6, %54, %cst_38 {dimension_numbers = #tpu.dot_dimension_numbers<[1], [0], [0], [1], [0, 0, 1, 1], [], []>} : vector<8x32xbf16>, vector<32x16xbf16>, vector<8x16xf32> -> vector<8x16xf32>
    %c1_39 = arith.constant 1 : index
    %c0_40 = arith.constant 0 : index
    %c0_41 = arith.constant 0 : index
    %56 = vector.load %arg5[%c1_39, %c0_40, %c0_41] : memref<4x1x16xf32, #tpu.memory_space<vmem>>, vector<1x1x16xf32>
    %57 = vector.shape_cast %56 : vector<1x1x16xf32> to vector<1x16xf32>
    %58 = vector.broadcast %57 : vector<1x16xf32> to vector<8x16xf32>
    %59 = arith.addf %55, %58 : vector<8x16xf32>
    %c1_42 = arith.constant 1 : index
    %c0_43 = arith.constant 0 : index
    %c0_44 = arith.constant 0 : index
    %60 = vector.load %arg6[%c1_42, %c0_43, %c0_44] : memref<4x32x16xbf16, #tpu.memory_space<vmem>>, vector<1x32x16xbf16>
    %61 = vector.shape_cast %60 : vector<1x32x16xbf16> to vector<32x16xbf16>
    %cst_45 = arith.constant dense<0.000000e+00> : vector<8x16xf32>
    %62 = tpu.matmul %6, %61, %cst_45 {dimension_numbers = #tpu.dot_dimension_numbers<[1], [0], [0], [1], [0, 0, 1, 1], [], []>} : vector<8x32xbf16>, vector<32x16xbf16>, vector<8x16xf32> -> vector<8x16xf32>
    %c1_46 = arith.constant 1 : index
    %c0_47 = arith.constant 0 : index
    %c0_48 = arith.constant 0 : index
    %63 = vector.load %arg7[%c1_46, %c0_47, %c0_48] : memref<4x1x16xf32, #tpu.memory_space<vmem>>, vector<1x1x16xf32>
    %64 = vector.shape_cast %63 : vector<1x1x16xf32> to vector<1x16xf32>
    %65 = vector.broadcast %64 : vector<1x16xf32> to vector<8x16xf32>
    %66 = arith.addf %62, %65 : vector<8x16xf32>
    %c1_49 = arith.constant 1 : index
    %c0_50 = arith.constant 0 : index
    %c0_51 = arith.constant 0 : index
    %67 = vector.load %arg8[%c1_49, %c0_50, %c0_51] : memref<4x32x16xbf16, #tpu.memory_space<vmem>>, vector<1x32x16xbf16>
    %68 = vector.shape_cast %67 : vector<1x32x16xbf16> to vector<32x16xbf16>
    %cst_52 = arith.constant dense<0.000000e+00> : vector<8x16xf32>
    %69 = tpu.matmul %6, %68, %cst_52 {dimension_numbers = #tpu.dot_dimension_numbers<[1], [0], [0], [1], [0, 0, 1, 1], [], []>} : vector<8x32xbf16>, vector<32x16xbf16>, vector<8x16xf32> -> vector<8x16xf32>
    %c1_53 = arith.constant 1 : index
    %c0_54 = arith.constant 0 : index
    %c0_55 = arith.constant 0 : index
    %70 = vector.load %arg9[%c1_53, %c0_54, %c0_55] : memref<4x1x16xf32, #tpu.memory_space<vmem>>, vector<1x1x16xf32>
    %71 = vector.shape_cast %70 : vector<1x1x16xf32> to vector<1x16xf32>
    %72 = vector.broadcast %71 : vector<1x16xf32> to vector<8x16xf32>
    %73 = arith.addf %69, %72 : vector<8x16xf32>
    %74 = arith.truncf %59 : vector<8x16xf32> to vector<8x16xbf16>
    %75 = arith.truncf %66 : vector<8x16xf32> to vector<8x16xbf16>
    %cst_56 = arith.constant dense<0.000000e+00> : vector<8x8xf32>
    %76 = tpu.matmul %74, %75, %cst_56 {dimension_numbers = #tpu.dot_dimension_numbers<[1], [1], [0], [0], [0, 0, 1, 0], [], []>} : vector<8x16xbf16>, vector<8x16xbf16>, vector<8x8xf32> -> vector<8x8xf32>
    %cst_57 = arith.constant 2.500000e-01 : f32
    %77 = vector.broadcast %cst_57 : f32 to vector<8x8xf32>
    %78 = arith.mulf %76, %77 : vector<8x8xf32>
    %79 = arith.addf %78, %5 : vector<8x8xf32>
    %cst_58 = arith.constant dense<0xFF800000> : vector<8xf32>
    %80 = vector.multi_reduction <maximumf>, %79, %cst_58 [1] : vector<8x8xf32> to vector<8xf32>
    %81 = vector.shape_cast %80 : vector<8xf32> to vector<8x1xf32>
    %82 = vector.broadcast %81 : vector<8x1xf32> to vector<8x8xf32>
    %83 = arith.subf %79, %82 : vector<8x8xf32>
    %84 = math.exp %83 : vector<8x8xf32>
    %cst_59 = arith.constant dense<0.000000e+00> : vector<8xf32>
    %85 = vector.multi_reduction <add>, %84, %cst_59 [1] : vector<8x8xf32> to vector<8xf32>
    %86 = vector.shape_cast %85 : vector<8xf32> to vector<8x1xf32>
    %87 = tpu.reciprocal %86 {approx = true} : vector<8x1xf32> -> vector<8x1xf32>
    %88 = vector.broadcast %87 : vector<8x1xf32> to vector<8x8xf32>
    %89 = arith.mulf %84, %88 : vector<8x8xf32>
    %90 = arith.truncf %89 : vector<8x8xf32> to vector<8x8xbf16>
    %91 = arith.truncf %73 : vector<8x16xf32> to vector<8x16xbf16>
    %cst_60 = arith.constant dense<0.000000e+00> : vector<8x16xf32>
    %92 = tpu.matmul %90, %91, %cst_60 {dimension_numbers = #tpu.dot_dimension_numbers<[1], [0], [0], [1], [0, 0, 1, 1], [], []>} : vector<8x8xbf16>, vector<8x16xbf16>, vector<8x16xf32> -> vector<8x16xf32>
    %93 = arith.truncf %92 : vector<8x16xf32> to vector<8x16xbf16>
    %c1_61 = arith.constant 1 : index
    %c0_62 = arith.constant 0 : index
    %c0_63 = arith.constant 0 : index
    %94 = vector.load %arg10[%c1_61, %c0_62, %c0_63] : memref<4x16x32xbf16, #tpu.memory_space<vmem>>, vector<1x16x32xbf16>
    %95 = vector.shape_cast %94 : vector<1x16x32xbf16> to vector<16x32xbf16>
    %cst_64 = arith.constant dense<0.000000e+00> : vector<8x32xf32>
    %96 = tpu.matmul %93, %95, %cst_64 {dimension_numbers = #tpu.dot_dimension_numbers<[1], [0], [0], [1], [0, 0, 1, 1], [], []>} : vector<8x16xbf16>, vector<16x32xbf16>, vector<8x32xf32> -> vector<8x32xf32>
    %97 = arith.addf %52, %96 : vector<8x32xf32>
    %c0_65 = arith.constant 0 : index
    %c0_66 = arith.constant 0 : index
    %c0_67 = arith.constant 0 : index
    %98 = vector.load %arg11[%c0_65, %c0_66, %c0_67] : memref<2x1x32xf32, #tpu.memory_space<vmem>>, vector<1x1x32xf32>
    %99 = vector.shape_cast %98 : vector<1x1x32xf32> to vector<1x32xf32>
    %100 = vector.broadcast %99 : vector<1x32xf32> to vector<8x32xf32>
    %101 = arith.addf %97, %100 : vector<8x32xf32>
    %102 = arith.addf %4, %101 : vector<8x32xf32>
    %c0_68 = arith.constant 0 : index
    %c0_69 = arith.constant 0 : index
    %c0_70 = arith.constant 0 : index
    %103 = vector.load %arg12[%c0_68, %c0_69, %c0_70] : memref<2x1x32xf32, #tpu.memory_space<vmem>>, vector<1x1x32xf32>
    %104 = vector.shape_cast %103 : vector<1x1x32xf32> to vector<1x32xf32>
    %c0_71 = arith.constant 0 : index
    %c0_72 = arith.constant 0 : index
    %c0_73 = arith.constant 0 : index
    %105 = vector.load %arg13[%c0_71, %c0_72, %c0_73] : memref<2x1x32xf32, #tpu.memory_space<vmem>>, vector<1x1x32xf32>
    %106 = vector.shape_cast %105 : vector<1x1x32xf32> to vector<1x32xf32>
    %cst_74 = arith.constant dense<0.000000e+00> : vector<8xf32>
    %107 = vector.multi_reduction <add>, %102, %cst_74 [1] : vector<8x32xf32> to vector<8xf32>
    %108 = vector.shape_cast %107 : vector<8xf32> to vector<8x1xf32>
    %cst_75 = arith.constant 3.200000e+01 : f32
    %109 = vector.broadcast %cst_75 : f32 to vector<8x1xf32>
    %110 = arith.divf %108, %109 : vector<8x1xf32>
    %111 = vector.broadcast %110 : vector<8x1xf32> to vector<8x32xf32>
    %112 = arith.subf %102, %111 : vector<8x32xf32>
    %113 = arith.mulf %112, %112 : vector<8x32xf32>
    %cst_76 = arith.constant dense<0.000000e+00> : vector<8xf32>
    %114 = vector.multi_reduction <add>, %113, %cst_76 [1] : vector<8x32xf32> to vector<8xf32>
    %115 = vector.shape_cast %114 : vector<8xf32> to vector<8x1xf32>
    %cst_77 = arith.constant 3.200000e+01 : f32
    %116 = vector.broadcast %cst_77 : f32 to vector<8x1xf32>
    %117 = arith.divf %115, %116 : vector<8x1xf32>
    %118 = vector.broadcast %110 : vector<8x1xf32> to vector<8x32xf32>
    %119 = arith.subf %102, %118 : vector<8x32xf32>
    %cst_78 = arith.constant 9.99999974E-6 : f32
    %120 = vector.broadcast %cst_78 : f32 to vector<8x1xf32>
    %121 = arith.addf %117, %120 : vector<8x1xf32>
    %122 = math.rsqrt %121 : vector<8x1xf32>
    %123 = vector.broadcast %122 : vector<8x1xf32> to vector<8x32xf32>
    %124 = arith.mulf %119, %123 : vector<8x32xf32>
    %125 = vector.broadcast %104 : vector<1x32xf32> to vector<8x32xf32>
    %126 = arith.mulf %124, %125 : vector<8x32xf32>
    %127 = vector.broadcast %106 : vector<1x32xf32> to vector<8x32xf32>
    %128 = arith.addf %126, %127 : vector<8x32xf32>
    %129 = arith.truncf %128 : vector<8x32xf32> to vector<8x32xbf16>
    %c0_79 = arith.constant 0 : index
    %c0_80 = arith.constant 0 : index
    %c0_81 = arith.constant 0 : index
    %130 = vector.load %arg14[%c0_79, %c0_80, %c0_81] : memref<2x32x64xbf16, #tpu.memory_space<vmem>>, vector<1x32x64xbf16>
    %131 = vector.shape_cast %130 : vector<1x32x64xbf16> to vector<32x64xbf16>
    %cst_82 = arith.constant dense<0.000000e+00> : vector<8x64xf32>
    %132 = tpu.matmul %129, %131, %cst_82 {dimension_numbers = #tpu.dot_dimension_numbers<[1], [0], [0], [1], [0, 0, 1, 1], [], []>} : vector<8x32xbf16>, vector<32x64xbf16>, vector<8x64xf32> -> vector<8x64xf32>
    %c0_83 = arith.constant 0 : index
    %c0_84 = arith.constant 0 : index
    %c0_85 = arith.constant 0 : index
    %133 = vector.load %arg15[%c0_83, %c0_84, %c0_85] : memref<2x1x64xf32, #tpu.memory_space<vmem>>, vector<1x1x64xf32>
    %134 = vector.shape_cast %133 : vector<1x1x64xf32> to vector<1x64xf32>
    %135 = vector.broadcast %134 : vector<1x64xf32> to vector<8x64xf32>
    %136 = arith.addf %132, %135 : vector<8x64xf32>
    %cst_86 = arith.constant 0.000000e+00 : f32
    %137 = vector.broadcast %cst_86 : f32 to vector<8x64xf32>
    %138 = arith.maximumf %136, %137 : vector<8x64xf32>
    %139 = arith.truncf %138 : vector<8x64xf32> to vector<8x64xbf16>
    %c0_87 = arith.constant 0 : index
    %c0_88 = arith.constant 0 : index
    %c0_89 = arith.constant 0 : index
    %140 = vector.load %arg16[%c0_87, %c0_88, %c0_89] : memref<2x64x32xbf16, #tpu.memory_space<vmem>>, vector<1x64x32xbf16>
    %141 = vector.shape_cast %140 : vector<1x64x32xbf16> to vector<64x32xbf16>
    %cst_90 = arith.constant dense<0.000000e+00> : vector<8x32xf32>
    %142 = tpu.matmul %139, %141, %cst_90 {dimension_numbers = #tpu.dot_dimension_numbers<[1], [0], [0], [1], [0, 0, 1, 1], [], []>} : vector<8x64xbf16>, vector<64x32xbf16>, vector<8x32xf32> -> vector<8x32xf32>
    %c0_91 = arith.constant 0 : index
    %c0_92 = arith.constant 0 : index
    %c0_93 = arith.constant 0 : index
    %143 = vector.load %arg17[%c0_91, %c0_92, %c0_93] : memref<2x1x32xf32, #tpu.memory_space<vmem>>, vector<1x1x32xf32>
    %144 = vector.shape_cast %143 : vector<1x1x32xf32> to vector<1x32xf32>
    %145 = vector.broadcast %144 : vector<1x32xf32> to vector<8x32xf32>
    %146 = arith.addf %142, %145 : vector<8x32xf32>
    %147 = arith.addf %128, %146 : vector<8x32xf32>
    %c0_94 = arith.constant 0 : index
    %c0_95 = arith.constant 0 : index
    %c0_96 = arith.constant 0 : index
    %148 = vector.load %arg18[%c0_94, %c0_95, %c0_96] : memref<2x1x32xf32, #tpu.memory_space<vmem>>, vector<1x1x32xf32>
    %149 = vector.shape_cast %148 : vector<1x1x32xf32> to vector<1x32xf32>
    %c0_97 = arith.constant 0 : index
    %c0_98 = arith.constant 0 : index
    %c0_99 = arith.constant 0 : index
    %150 = vector.load %arg19[%c0_97, %c0_98, %c0_99] : memref<2x1x32xf32, #tpu.memory_space<vmem>>, vector<1x1x32xf32>
    %151 = vector.shape_cast %150 : vector<1x1x32xf32> to vector<1x32xf32>
    %cst_100 = arith.constant dense<0.000000e+00> : vector<8xf32>
    %152 = vector.multi_reduction <add>, %147, %cst_100 [1] : vector<8x32xf32> to vector<8xf32>
    %153 = vector.shape_cast %152 : vector<8xf32> to vector<8x1xf32>
    %cst_101 = arith.constant 3.200000e+01 : f32
    %154 = vector.broadcast %cst_101 : f32 to vector<8x1xf32>
    %155 = arith.divf %153, %154 : vector<8x1xf32>
    %156 = vector.broadcast %155 : vector<8x1xf32> to vector<8x32xf32>
    %157 = arith.subf %147, %156 : vector<8x32xf32>
    %158 = arith.mulf %157, %157 : vector<8x32xf32>
    %cst_102 = arith.constant dense<0.000000e+00> : vector<8xf32>
    %159 = vector.multi_reduction <add>, %158, %cst_102 [1] : vector<8x32xf32> to vector<8xf32>
    %160 = vector.shape_cast %159 : vector<8xf32> to vector<8x1xf32>
    %cst_103 = arith.constant 3.200000e+01 : f32
    %161 = vector.broadcast %cst_103 : f32 to vector<8x1xf32>
    %162 = arith.divf %160, %161 : vector<8x1xf32>
    %163 = vector.broadcast %155 : vector<8x1xf32> to vector<8x32xf32>
    %164 = arith.subf %147, %163 : vector<8x32xf32>
    %cst_104 = arith.constant 9.99999974E-6 : f32
    %165 = vector.broadcast %cst_104 : f32 to vector<8x1xf32>
    %166 = arith.addf %162, %165 : vector<8x1xf32>
    %167 = math.rsqrt %166 : vector<8x1xf32>
    %168 = vector.broadcast %167 : vector<8x1xf32> to vector<8x32xf32>
    %169 = arith.mulf %164, %168 : vector<8x32xf32>
    %170 = vector.broadcast %149 : vector<1x32xf32> to vector<8x32xf32>
    %171 = arith.mulf %169, %170 : vector<8x32xf32>
    %172 = vector.broadcast %151 : vector<1x32xf32> to vector<8x32xf32>
    %173 = arith.addf %171, %172 : vector<8x32xf32>
    %174 = arith.truncf %173 : vector<8x32xf32> to vector<8x32xbf16>
    %cst_105 = arith.constant 0.000000e+00 : f32
    %175 = vector.broadcast %cst_105 : f32 to vector<8x32xf32>
    %c2 = arith.constant 2 : index
    %c0_106 = arith.constant 0 : index
    %c0_107 = arith.constant 0 : index
    %176 = vector.load %arg4[%c2, %c0_106, %c0_107] : memref<4x32x16xbf16, #tpu.memory_space<vmem>>, vector<1x32x16xbf16>
    %177 = vector.shape_cast %176 : vector<1x32x16xbf16> to vector<32x16xbf16>
    %cst_108 = arith.constant dense<0.000000e+00> : vector<8x16xf32>
    %178 = tpu.matmul %174, %177, %cst_108 {dimension_numbers = #tpu.dot_dimension_numbers<[1], [0], [0], [1], [0, 0, 1, 1], [], []>} : vector<8x32xbf16>, vector<32x16xbf16>, vector<8x16xf32> -> vector<8x16xf32>
    %c2_109 = arith.constant 2 : index
    %c0_110 = arith.constant 0 : index
    %c0_111 = arith.constant 0 : index
    %179 = vector.load %arg5[%c2_109, %c0_110, %c0_111] : memref<4x1x16xf32, #tpu.memory_space<vmem>>, vector<1x1x16xf32>
    %180 = vector.shape_cast %179 : vector<1x1x16xf32> to vector<1x16xf32>
    %181 = vector.broadcast %180 : vector<1x16xf32> to vector<8x16xf32>
    %182 = arith.addf %178, %181 : vector<8x16xf32>
    %c2_112 = arith.constant 2 : index
    %c0_113 = arith.constant 0 : index
    %c0_114 = arith.constant 0 : index
    %183 = vector.load %arg6[%c2_112, %c0_113, %c0_114] : memref<4x32x16xbf16, #tpu.memory_space<vmem>>, vector<1x32x16xbf16>
    %184 = vector.shape_cast %183 : vector<1x32x16xbf16> to vector<32x16xbf16>
    %cst_115 = arith.constant dense<0.000000e+00> : vector<8x16xf32>
    %185 = tpu.matmul %174, %184, %cst_115 {dimension_numbers = #tpu.dot_dimension_numbers<[1], [0], [0], [1], [0, 0, 1, 1], [], []>} : vector<8x32xbf16>, vector<32x16xbf16>, vector<8x16xf32> -> vector<8x16xf32>
    %c2_116 = arith.constant 2 : index
    %c0_117 = arith.constant 0 : index
    %c0_118 = arith.constant 0 : index
    %186 = vector.load %arg7[%c2_116, %c0_117, %c0_118] : memref<4x1x16xf32, #tpu.memory_space<vmem>>, vector<1x1x16xf32>
    %187 = vector.shape_cast %186 : vector<1x1x16xf32> to vector<1x16xf32>
    %188 = vector.broadcast %187 : vector<1x16xf32> to vector<8x16xf32>
    %189 = arith.addf %185, %188 : vector<8x16xf32>
    %c2_119 = arith.constant 2 : index
    %c0_120 = arith.constant 0 : index
    %c0_121 = arith.constant 0 : index
    %190 = vector.load %arg8[%c2_119, %c0_120, %c0_121] : memref<4x32x16xbf16, #tpu.memory_space<vmem>>, vector<1x32x16xbf16>
    %191 = vector.shape_cast %190 : vector<1x32x16xbf16> to vector<32x16xbf16>
    %cst_122 = arith.constant dense<0.000000e+00> : vector<8x16xf32>
    %192 = tpu.matmul %174, %191, %cst_122 {dimension_numbers = #tpu.dot_dimension_numbers<[1], [0], [0], [1], [0, 0, 1, 1], [], []>} : vector<8x32xbf16>, vector<32x16xbf16>, vector<8x16xf32> -> vector<8x16xf32>
    %c2_123 = arith.constant 2 : index
    %c0_124 = arith.constant 0 : index
    %c0_125 = arith.constant 0 : index
    %193 = vector.load %arg9[%c2_123, %c0_124, %c0_125] : memref<4x1x16xf32, #tpu.memory_space<vmem>>, vector<1x1x16xf32>
    %194 = vector.shape_cast %193 : vector<1x1x16xf32> to vector<1x16xf32>
    %195 = vector.broadcast %194 : vector<1x16xf32> to vector<8x16xf32>
    %196 = arith.addf %192, %195 : vector<8x16xf32>
    %197 = arith.truncf %182 : vector<8x16xf32> to vector<8x16xbf16>
    %198 = arith.truncf %189 : vector<8x16xf32> to vector<8x16xbf16>
    %cst_126 = arith.constant dense<0.000000e+00> : vector<8x8xf32>
    %199 = tpu.matmul %197, %198, %cst_126 {dimension_numbers = #tpu.dot_dimension_numbers<[1], [1], [0], [0], [0, 0, 1, 0], [], []>} : vector<8x16xbf16>, vector<8x16xbf16>, vector<8x8xf32> -> vector<8x8xf32>
    %cst_127 = arith.constant 2.500000e-01 : f32
    %200 = vector.broadcast %cst_127 : f32 to vector<8x8xf32>
    %201 = arith.mulf %199, %200 : vector<8x8xf32>
    %202 = arith.addf %201, %5 : vector<8x8xf32>
    %cst_128 = arith.constant dense<0xFF800000> : vector<8xf32>
    %203 = vector.multi_reduction <maximumf>, %202, %cst_128 [1] : vector<8x8xf32> to vector<8xf32>
    %204 = vector.shape_cast %203 : vector<8xf32> to vector<8x1xf32>
    %205 = vector.broadcast %204 : vector<8x1xf32> to vector<8x8xf32>
    %206 = arith.subf %202, %205 : vector<8x8xf32>
    %207 = math.exp %206 : vector<8x8xf32>
    %cst_129 = arith.constant dense<0.000000e+00> : vector<8xf32>
    %208 = vector.multi_reduction <add>, %207, %cst_129 [1] : vector<8x8xf32> to vector<8xf32>
    %209 = vector.shape_cast %208 : vector<8xf32> to vector<8x1xf32>
    %210 = tpu.reciprocal %209 {approx = true} : vector<8x1xf32> -> vector<8x1xf32>
    %211 = vector.broadcast %210 : vector<8x1xf32> to vector<8x8xf32>
    %212 = arith.mulf %207, %211 : vector<8x8xf32>
    %213 = arith.truncf %212 : vector<8x8xf32> to vector<8x8xbf16>
    %214 = arith.truncf %196 : vector<8x16xf32> to vector<8x16xbf16>
    %cst_130 = arith.constant dense<0.000000e+00> : vector<8x16xf32>
    %215 = tpu.matmul %213, %214, %cst_130 {dimension_numbers = #tpu.dot_dimension_numbers<[1], [0], [0], [1], [0, 0, 1, 1], [], []>} : vector<8x8xbf16>, vector<8x16xbf16>, vector<8x16xf32> -> vector<8x16xf32>
    %216 = arith.truncf %215 : vector<8x16xf32> to vector<8x16xbf16>
    %c2_131 = arith.constant 2 : index
    %c0_132 = arith.constant 0 : index
    %c0_133 = arith.constant 0 : index
    %217 = vector.load %arg10[%c2_131, %c0_132, %c0_133] : memref<4x16x32xbf16, #tpu.memory_space<vmem>>, vector<1x16x32xbf16>
    %218 = vector.shape_cast %217 : vector<1x16x32xbf16> to vector<16x32xbf16>
    %cst_134 = arith.constant dense<0.000000e+00> : vector<8x32xf32>
    %219 = tpu.matmul %216, %218, %cst_134 {dimension_numbers = #tpu.dot_dimension_numbers<[1], [0], [0], [1], [0, 0, 1, 1], [], []>} : vector<8x16xbf16>, vector<16x32xbf16>, vector<8x32xf32> -> vector<8x32xf32>
    %220 = arith.addf %175, %219 : vector<8x32xf32>
    %c3 = arith.constant 3 : index
    %c0_135 = arith.constant 0 : index
    %c0_136 = arith.constant 0 : index
    %221 = vector.load %arg4[%c3, %c0_135, %c0_136] : memref<4x32x16xbf16, #tpu.memory_space<vmem>>, vector<1x32x16xbf16>
    %222 = vector.shape_cast %221 : vector<1x32x16xbf16> to vector<32x16xbf16>
    %cst_137 = arith.constant dense<0.000000e+00> : vector<8x16xf32>
    %223 = tpu.matmul %174, %222, %cst_137 {dimension_numbers = #tpu.dot_dimension_numbers<[1], [0], [0], [1], [0, 0, 1, 1], [], []>} : vector<8x32xbf16>, vector<32x16xbf16>, vector<8x16xf32> -> vector<8x16xf32>
    %c3_138 = arith.constant 3 : index
    %c0_139 = arith.constant 0 : index
    %c0_140 = arith.constant 0 : index
    %224 = vector.load %arg5[%c3_138, %c0_139, %c0_140] : memref<4x1x16xf32, #tpu.memory_space<vmem>>, vector<1x1x16xf32>
    %225 = vector.shape_cast %224 : vector<1x1x16xf32> to vector<1x16xf32>
    %226 = vector.broadcast %225 : vector<1x16xf32> to vector<8x16xf32>
    %227 = arith.addf %223, %226 : vector<8x16xf32>
    %c3_141 = arith.constant 3 : index
    %c0_142 = arith.constant 0 : index
    %c0_143 = arith.constant 0 : index
    %228 = vector.load %arg6[%c3_141, %c0_142, %c0_143] : memref<4x32x16xbf16, #tpu.memory_space<vmem>>, vector<1x32x16xbf16>
    %229 = vector.shape_cast %228 : vector<1x32x16xbf16> to vector<32x16xbf16>
    %cst_144 = arith.constant dense<0.000000e+00> : vector<8x16xf32>
    %230 = tpu.matmul %174, %229, %cst_144 {dimension_numbers = #tpu.dot_dimension_numbers<[1], [0], [0], [1], [0, 0, 1, 1], [], []>} : vector<8x32xbf16>, vector<32x16xbf16>, vector<8x16xf32> -> vector<8x16xf32>
    %c3_145 = arith.constant 3 : index
    %c0_146 = arith.constant 0 : index
    %c0_147 = arith.constant 0 : index
    %231 = vector.load %arg7[%c3_145, %c0_146, %c0_147] : memref<4x1x16xf32, #tpu.memory_space<vmem>>, vector<1x1x16xf32>
    %232 = vector.shape_cast %231 : vector<1x1x16xf32> to vector<1x16xf32>
    %233 = vector.broadcast %232 : vector<1x16xf32> to vector<8x16xf32>
    %234 = arith.addf %230, %233 : vector<8x16xf32>
    %c3_148 = arith.constant 3 : index
    %c0_149 = arith.constant 0 : index
    %c0_150 = arith.constant 0 : index
    %235 = vector.load %arg8[%c3_148, %c0_149, %c0_150] : memref<4x32x16xbf16, #tpu.memory_space<vmem>>, vector<1x32x16xbf16>
    %236 = vector.shape_cast %235 : vector<1x32x16xbf16> to vector<32x16xbf16>
    %cst_151 = arith.constant dense<0.000000e+00> : vector<8x16xf32>
    %237 = tpu.matmul %174, %236, %cst_151 {dimension_numbers = #tpu.dot_dimension_numbers<[1], [0], [0], [1], [0, 0, 1, 1], [], []>} : vector<8x32xbf16>, vector<32x16xbf16>, vector<8x16xf32> -> vector<8x16xf32>
    %c3_152 = arith.constant 3 : index
    %c0_153 = arith.constant 0 : index
    %c0_154 = arith.constant 0 : index
    %238 = vector.load %arg9[%c3_152, %c0_153, %c0_154] : memref<4x1x16xf32, #tpu.memory_space<vmem>>, vector<1x1x16xf32>
    %239 = vector.shape_cast %238 : vector<1x1x16xf32> to vector<1x16xf32>
    %240 = vector.broadcast %239 : vector<1x16xf32> to vector<8x16xf32>
    %241 = arith.addf %237, %240 : vector<8x16xf32>
    %242 = arith.truncf %227 : vector<8x16xf32> to vector<8x16xbf16>
    %243 = arith.truncf %234 : vector<8x16xf32> to vector<8x16xbf16>
    %cst_155 = arith.constant dense<0.000000e+00> : vector<8x8xf32>
    %244 = tpu.matmul %242, %243, %cst_155 {dimension_numbers = #tpu.dot_dimension_numbers<[1], [1], [0], [0], [0, 0, 1, 0], [], []>} : vector<8x16xbf16>, vector<8x16xbf16>, vector<8x8xf32> -> vector<8x8xf32>
    %cst_156 = arith.constant 2.500000e-01 : f32
    %245 = vector.broadcast %cst_156 : f32 to vector<8x8xf32>
    %246 = arith.mulf %244, %245 : vector<8x8xf32>
    %247 = arith.addf %246, %5 : vector<8x8xf32>
    %cst_157 = arith.constant dense<0xFF800000> : vector<8xf32>
    %248 = vector.multi_reduction <maximumf>, %247, %cst_157 [1] : vector<8x8xf32> to vector<8xf32>
    %249 = vector.shape_cast %248 : vector<8xf32> to vector<8x1xf32>
    %250 = vector.broadcast %249 : vector<8x1xf32> to vector<8x8xf32>
    %251 = arith.subf %247, %250 : vector<8x8xf32>
    %252 = math.exp %251 : vector<8x8xf32>
    %cst_158 = arith.constant dense<0.000000e+00> : vector<8xf32>
    %253 = vector.multi_reduction <add>, %252, %cst_158 [1] : vector<8x8xf32> to vector<8xf32>
    %254 = vector.shape_cast %253 : vector<8xf32> to vector<8x1xf32>
    %255 = tpu.reciprocal %254 {approx = true} : vector<8x1xf32> -> vector<8x1xf32>
    %256 = vector.broadcast %255 : vector<8x1xf32> to vector<8x8xf32>
    %257 = arith.mulf %252, %256 : vector<8x8xf32>
    %258 = arith.truncf %257 : vector<8x8xf32> to vector<8x8xbf16>
    %259 = arith.truncf %241 : vector<8x16xf32> to vector<8x16xbf16>
    %cst_159 = arith.constant dense<0.000000e+00> : vector<8x16xf32>
    %260 = tpu.matmul %258, %259, %cst_159 {dimension_numbers = #tpu.dot_dimension_numbers<[1], [0], [0], [1], [0, 0, 1, 1], [], []>} : vector<8x8xbf16>, vector<8x16xbf16>, vector<8x16xf32> -> vector<8x16xf32>
    %261 = arith.truncf %260 : vector<8x16xf32> to vector<8x16xbf16>
    %c3_160 = arith.constant 3 : index
    %c0_161 = arith.constant 0 : index
    %c0_162 = arith.constant 0 : index
    %262 = vector.load %arg10[%c3_160, %c0_161, %c0_162] : memref<4x16x32xbf16, #tpu.memory_space<vmem>>, vector<1x16x32xbf16>
    %263 = vector.shape_cast %262 : vector<1x16x32xbf16> to vector<16x32xbf16>
    %cst_163 = arith.constant dense<0.000000e+00> : vector<8x32xf32>
    %264 = tpu.matmul %261, %263, %cst_163 {dimension_numbers = #tpu.dot_dimension_numbers<[1], [0], [0], [1], [0, 0, 1, 1], [], []>} : vector<8x16xbf16>, vector<16x32xbf16>, vector<8x32xf32> -> vector<8x32xf32>
    %265 = arith.addf %220, %264 : vector<8x32xf32>
    %c1_164 = arith.constant 1 : index
    %c0_165 = arith.constant 0 : index
    %c0_166 = arith.constant 0 : index
    %266 = vector.load %arg11[%c1_164, %c0_165, %c0_166] : memref<2x1x32xf32, #tpu.memory_space<vmem>>, vector<1x1x32xf32>
    %267 = vector.shape_cast %266 : vector<1x1x32xf32> to vector<1x32xf32>
    %268 = vector.broadcast %267 : vector<1x32xf32> to vector<8x32xf32>
    %269 = arith.addf %265, %268 : vector<8x32xf32>
    %270 = arith.addf %173, %269 : vector<8x32xf32>
    %c1_167 = arith.constant 1 : index
    %c0_168 = arith.constant 0 : index
    %c0_169 = arith.constant 0 : index
    %271 = vector.load %arg12[%c1_167, %c0_168, %c0_169] : memref<2x1x32xf32, #tpu.memory_space<vmem>>, vector<1x1x32xf32>
    %272 = vector.shape_cast %271 : vector<1x1x32xf32> to vector<1x32xf32>
    %c1_170 = arith.constant 1 : index
    %c0_171 = arith.constant 0 : index
    %c0_172 = arith.constant 0 : index
    %273 = vector.load %arg13[%c1_170, %c0_171, %c0_172] : memref<2x1x32xf32, #tpu.memory_space<vmem>>, vector<1x1x32xf32>
    %274 = vector.shape_cast %273 : vector<1x1x32xf32> to vector<1x32xf32>
    %cst_173 = arith.constant dense<0.000000e+00> : vector<8xf32>
    %275 = vector.multi_reduction <add>, %270, %cst_173 [1] : vector<8x32xf32> to vector<8xf32>
    %276 = vector.shape_cast %275 : vector<8xf32> to vector<8x1xf32>
    %cst_174 = arith.constant 3.200000e+01 : f32
    %277 = vector.broadcast %cst_174 : f32 to vector<8x1xf32>
    %278 = arith.divf %276, %277 : vector<8x1xf32>
    %279 = vector.broadcast %278 : vector<8x1xf32> to vector<8x32xf32>
    %280 = arith.subf %270, %279 : vector<8x32xf32>
    %281 = arith.mulf %280, %280 : vector<8x32xf32>
    %cst_175 = arith.constant dense<0.000000e+00> : vector<8xf32>
    %282 = vector.multi_reduction <add>, %281, %cst_175 [1] : vector<8x32xf32> to vector<8xf32>
    %283 = vector.shape_cast %282 : vector<8xf32> to vector<8x1xf32>
    %cst_176 = arith.constant 3.200000e+01 : f32
    %284 = vector.broadcast %cst_176 : f32 to vector<8x1xf32>
    %285 = arith.divf %283, %284 : vector<8x1xf32>
    %286 = vector.broadcast %278 : vector<8x1xf32> to vector<8x32xf32>
    %287 = arith.subf %270, %286 : vector<8x32xf32>
    %cst_177 = arith.constant 9.99999974E-6 : f32
    %288 = vector.broadcast %cst_177 : f32 to vector<8x1xf32>
    %289 = arith.addf %285, %288 : vector<8x1xf32>
    %290 = math.rsqrt %289 : vector<8x1xf32>
    %291 = vector.broadcast %290 : vector<8x1xf32> to vector<8x32xf32>
    %292 = arith.mulf %287, %291 : vector<8x32xf32>
    %293 = vector.broadcast %272 : vector<1x32xf32> to vector<8x32xf32>
    %294 = arith.mulf %292, %293 : vector<8x32xf32>
    %295 = vector.broadcast %274 : vector<1x32xf32> to vector<8x32xf32>
    %296 = arith.addf %294, %295 : vector<8x32xf32>
    %297 = arith.truncf %296 : vector<8x32xf32> to vector<8x32xbf16>
    %c1_178 = arith.constant 1 : index
    %c0_179 = arith.constant 0 : index
    %c0_180 = arith.constant 0 : index
    %298 = vector.load %arg14[%c1_178, %c0_179, %c0_180] : memref<2x32x64xbf16, #tpu.memory_space<vmem>>, vector<1x32x64xbf16>
    %299 = vector.shape_cast %298 : vector<1x32x64xbf16> to vector<32x64xbf16>
    %cst_181 = arith.constant dense<0.000000e+00> : vector<8x64xf32>
    %300 = tpu.matmul %297, %299, %cst_181 {dimension_numbers = #tpu.dot_dimension_numbers<[1], [0], [0], [1], [0, 0, 1, 1], [], []>} : vector<8x32xbf16>, vector<32x64xbf16>, vector<8x64xf32> -> vector<8x64xf32>
    %c1_182 = arith.constant 1 : index
    %c0_183 = arith.constant 0 : index
    %c0_184 = arith.constant 0 : index
    %301 = vector.load %arg15[%c1_182, %c0_183, %c0_184] : memref<2x1x64xf32, #tpu.memory_space<vmem>>, vector<1x1x64xf32>
    %302 = vector.shape_cast %301 : vector<1x1x64xf32> to vector<1x64xf32>
    %303 = vector.broadcast %302 : vector<1x64xf32> to vector<8x64xf32>
    %304 = arith.addf %300, %303 : vector<8x64xf32>
    %cst_185 = arith.constant 0.000000e+00 : f32
    %305 = vector.broadcast %cst_185 : f32 to vector<8x64xf32>
    %306 = arith.maximumf %304, %305 : vector<8x64xf32>
    %307 = arith.truncf %306 : vector<8x64xf32> to vector<8x64xbf16>
    %c1_186 = arith.constant 1 : index
    %c0_187 = arith.constant 0 : index
    %c0_188 = arith.constant 0 : index
    %308 = vector.load %arg16[%c1_186, %c0_187, %c0_188] : memref<2x64x32xbf16, #tpu.memory_space<vmem>>, vector<1x64x32xbf16>
    %309 = vector.shape_cast %308 : vector<1x64x32xbf16> to vector<64x32xbf16>
    %cst_189 = arith.constant dense<0.000000e+00> : vector<8x32xf32>
    %310 = tpu.matmul %307, %309, %cst_189 {dimension_numbers = #tpu.dot_dimension_numbers<[1], [0], [0], [1], [0, 0, 1, 1], [], []>} : vector<8x64xbf16>, vector<64x32xbf16>, vector<8x32xf32> -> vector<8x32xf32>
    %c1_190 = arith.constant 1 : index
    %c0_191 = arith.constant 0 : index
    %c0_192 = arith.constant 0 : index
    %311 = vector.load %arg17[%c1_190, %c0_191, %c0_192] : memref<2x1x32xf32, #tpu.memory_space<vmem>>, vector<1x1x32xf32>
    %312 = vector.shape_cast %311 : vector<1x1x32xf32> to vector<1x32xf32>
    %313 = vector.broadcast %312 : vector<1x32xf32> to vector<8x32xf32>
    %314 = arith.addf %310, %313 : vector<8x32xf32>
    %315 = arith.addf %296, %314 : vector<8x32xf32>
    %c1_193 = arith.constant 1 : index
    %c0_194 = arith.constant 0 : index
    %c0_195 = arith.constant 0 : index
    %316 = vector.load %arg18[%c1_193, %c0_194, %c0_195] : memref<2x1x32xf32, #tpu.memory_space<vmem>>, vector<1x1x32xf32>
    %317 = vector.shape_cast %316 : vector<1x1x32xf32> to vector<1x32xf32>
    %c1_196 = arith.constant 1 : index
    %c0_197 = arith.constant 0 : index
    %c0_198 = arith.constant 0 : index
    %318 = vector.load %arg19[%c1_196, %c0_197, %c0_198] : memref<2x1x32xf32, #tpu.memory_space<vmem>>, vector<1x1x32xf32>
    %319 = vector.shape_cast %318 : vector<1x1x32xf32> to vector<1x32xf32>
    %cst_199 = arith.constant dense<0.000000e+00> : vector<8xf32>
    %320 = vector.multi_reduction <add>, %315, %cst_199 [1] : vector<8x32xf32> to vector<8xf32>
    %321 = vector.shape_cast %320 : vector<8xf32> to vector<8x1xf32>
    %cst_200 = arith.constant 3.200000e+01 : f32
    %322 = vector.broadcast %cst_200 : f32 to vector<8x1xf32>
    %323 = arith.divf %321, %322 : vector<8x1xf32>
    %324 = vector.broadcast %323 : vector<8x1xf32> to vector<8x32xf32>
    %325 = arith.subf %315, %324 : vector<8x32xf32>
    %326 = arith.mulf %325, %325 : vector<8x32xf32>
    %cst_201 = arith.constant dense<0.000000e+00> : vector<8xf32>
    %327 = vector.multi_reduction <add>, %326, %cst_201 [1] : vector<8x32xf32> to vector<8xf32>
    %328 = vector.shape_cast %327 : vector<8xf32> to vector<8x1xf32>
    %cst_202 = arith.constant 3.200000e+01 : f32
    %329 = vector.broadcast %cst_202 : f32 to vector<8x1xf32>
    %330 = arith.divf %328, %329 : vector<8x1xf32>
    %331 = vector.broadcast %323 : vector<8x1xf32> to vector<8x32xf32>
    %332 = arith.subf %315, %331 : vector<8x32xf32>
    %cst_203 = arith.constant 9.99999974E-6 : f32
    %333 = vector.broadcast %cst_203 : f32 to vector<8x1xf32>
    %334 = arith.addf %330, %333 : vector<8x1xf32>
    %335 = math.rsqrt %334 : vector<8x1xf32>
    %336 = vector.broadcast %335 : vector<8x1xf32> to vector<8x32xf32>
    %337 = arith.mulf %332, %336 : vector<8x32xf32>
    %338 = vector.broadcast %317 : vector<1x32xf32> to vector<8x32xf32>
    %339 = arith.mulf %337, %338 : vector<8x32xf32>
    %340 = vector.broadcast %319 : vector<1x32xf32> to vector<8x32xf32>
    %341 = arith.addf %339, %340 : vector<8x32xf32>
    %c0_204 = arith.constant 0 : index
    %c0_205 = arith.constant 0 : index
    %342 = vector.load %arg20[%c0_204, %c0_205] : memref<32x32xbf16, #tpu.memory_space<vmem>>, vector<32x32xbf16>
    %c0_206 = arith.constant 0 : index
    %c0_207 = arith.constant 0 : index
    %343 = vector.load %arg21[%c0_206, %c0_207] : memref<1x32xf32, #tpu.memory_space<vmem>>, vector<1x32xf32>
    %c0_208 = arith.constant 0 : index
    %c0_209 = arith.constant 0 : index
    %344 = vector.load %arg22[%c0_208, %c0_209] : memref<32x32xbf16, #tpu.memory_space<vmem>>, vector<32x32xbf16>
    %c0_210 = arith.constant 0 : index
    %c0_211 = arith.constant 0 : index
    %345 = vector.load %arg23[%c0_210, %c0_211] : memref<1x32xf32, #tpu.memory_space<vmem>>, vector<1x32xf32>
    %cst_212 = arith.constant 0.000000e+00 : f32
    %346 = vector.broadcast %cst_212 : f32 to vector<1x32xf32>
    %347 = vector.extract_strided_slice %341 {offsets = [3, 0], sizes = [1, 32], strides = [1, 1]} : vector<8x32xf32> to vector<1x32xf32>
    %348 = arith.truncf %347 : vector<1x32xf32> to vector<1x32xbf16>
    %cst_213 = arith.constant dense<0.000000e+00> : vector<1x32xf32>
    %349 = tpu.matmul %348, %342, %cst_213 {dimension_numbers = #tpu.dot_dimension_numbers<[1], [0], [0], [1], [0, 0, 1, 1], [], []>} : vector<1x32xbf16>, vector<32x32xbf16>, vector<1x32xf32> -> vector<1x32xf32>
    %350 = arith.addf %349, %343 : vector<1x32xf32>
    %351 = arith.negf %350 : vector<1x32xf32>
    %352 = math.exp %351 : vector<1x32xf32>
    %cst_214 = arith.constant 1.000000e+00 : f32
    %353 = vector.broadcast %cst_214 : f32 to vector<1x32xf32>
    %354 = arith.addf %353, %352 : vector<1x32xf32>
    %355 = arith.divf %353, %354 : vector<1x32xf32>
    %cst_215 = arith.constant dense<0.000000e+00> : vector<1x32xf32>
    %356 = tpu.matmul %348, %344, %cst_215 {dimension_numbers = #tpu.dot_dimension_numbers<[1], [0], [0], [1], [0, 0, 1, 1], [], []>} : vector<1x32xbf16>, vector<32x32xbf16>, vector<1x32xf32> -> vector<1x32xf32>
    %357 = arith.addf %356, %345 : vector<1x32xf32>
    %cst_216 = arith.constant 1.000000e+00 : f32
    %358 = vector.broadcast %cst_216 : f32 to vector<1x32xf32>
    %359 = arith.subf %358, %355 : vector<1x32xf32>
    %360 = arith.mulf %359, %346 : vector<1x32xf32>
    %361 = arith.mulf %355, %357 : vector<1x32xf32>
    %362 = arith.addf %360, %361 : vector<1x32xf32>
    %363 = vector.extract_strided_slice %341 {offsets = [7, 0], sizes = [1, 32], strides = [1, 1]} : vector<8x32xf32> to vector<1x32xf32>
    %364 = arith.truncf %363 : vector<1x32xf32> to vector<1x32xbf16>
    %cst_217 = arith.constant dense<0.000000e+00> : vector<1x32xf32>
    %365 = tpu.matmul %364, %342, %cst_217 {dimension_numbers = #tpu.dot_dimension_numbers<[1], [0], [0], [1], [0, 0, 1, 1], [], []>} : vector<1x32xbf16>, vector<32x32xbf16>, vector<1x32xf32> -> vector<1x32xf32>
    %366 = arith.addf %365, %343 : vector<1x32xf32>
    %367 = arith.negf %366 : vector<1x32xf32>
    %368 = math.exp %367 : vector<1x32xf32>
    %cst_218 = arith.constant 1.000000e+00 : f32
    %369 = vector.broadcast %cst_218 : f32 to vector<1x32xf32>
    %370 = arith.addf %369, %368 : vector<1x32xf32>
    %371 = arith.divf %369, %370 : vector<1x32xf32>
    %cst_219 = arith.constant dense<0.000000e+00> : vector<1x32xf32>
    %372 = tpu.matmul %364, %344, %cst_219 {dimension_numbers = #tpu.dot_dimension_numbers<[1], [0], [0], [1], [0, 0, 1, 1], [], []>} : vector<1x32xbf16>, vector<32x32xbf16>, vector<1x32xf32> -> vector<1x32xf32>
    %373 = arith.addf %372, %345 : vector<1x32xf32>
    %cst_220 = arith.constant 1.000000e+00 : f32
    %374 = vector.broadcast %cst_220 : f32 to vector<1x32xf32>
    %375 = arith.subf %374, %371 : vector<1x32xf32>
    %376 = arith.mulf %375, %362 : vector<1x32xf32>
    %377 = arith.mulf %371, %373 : vector<1x32xf32>
    %378 = arith.addf %376, %377 : vector<1x32xf32>
    %379 = vector.shape_cast %378 : vector<1x32xf32> to vector<1x1x32xf32>
    %c0_221 = arith.constant 0 : index
    %c0_222 = arith.constant 0 : index
    %c0_223 = arith.constant 0 : index
    %380 = vector.load %arg24[%c0_221, %c0_222, %c0_223] : memref<1x1x32xf32, #tpu.memory_space<vmem>>, vector<1x1x32xf32>
    tpu.vector_store %arg24[%c0_221, %c0_222, %c0_223], %379 {strides = array<i32>} : memref<1x1x32xf32, #tpu.memory_space<vmem>>, vector<1x1x32xf32>,
    return
  }
  func.func @transform_0(%arg0: i32) -> (i32, i32) {
    %c0_i32 = arith.constant 0 : i32
    %c0_i32_0 = arith.constant 0 : i32
    return %arg0, %c0_i32 : i32, i32
  }
  func.func @transform_1(%arg0: i32) -> (i32, i32) {
    %c0_i32 = arith.constant 0 : i32
    %c0_i32_0 = arith.constant 0 : i32
    %c0_i32_1 = arith.constant 0 : i32
    return %c0_i32, %c0_i32_0 : i32, i32
  }
  func.func @transform_2(%arg0: i32) -> (i32, i32) {
    %c0_i32 = arith.constant 0 : i32
    %c0_i32_0 = arith.constant 0 : i32
    %c0_i32_1 = arith.constant 0 : i32
    return %c0_i32, %c0_i32_0 : i32, i32
  }
  func.func @transform_3(%arg0: i32) -> (i32, i32, i32) {
    %c0_i32 = arith.constant 0 : i32
    %c0_i32_0 = arith.constant 0 : i32
    %c0_i32_1 = arith.constant 0 : i32
    %c0_i32_2 = arith.constant 0 : i32
    return %c0_i32, %c0_i32_0, %c0_i32_1 : i32, i32, i32
  }
  func.func @transform_4(%arg0: i32) -> (i32, i32, i32) {
    %c0_i32 = arith.constant 0 : i32
    %c0_i32_0 = arith.constant 0 : i32
    %c0_i32_1 = arith.constant 0 : i32
    %c0_i32_2 = arith.constant 0 : i32
    return %c0_i32, %c0_i32_0, %c0_i32_1 : i32, i32, i32
  }
  func.func @transform_5(%arg0: i32) -> (i32, i32, i32) {
    %c0_i32 = arith.constant 0 : i32
    %c0_i32_0 = arith.constant 0 : i32
    %c0_i32_1 = arith.constant 0 : i32
    %c0_i32_2 = arith.constant 0 : i32
    return %c0_i32, %c0_i32_0, %c0_i32_1 : i32, i32, i32
  }
  func.func @transform_6(%arg0: i32) -> (i32, i32, i32) {
    %c0_i32 = arith.constant 0 : i32
    %c0_i32_0 = arith.constant 0 : i32
    %c0_i32_1 = arith.constant 0 : i32
    %c0_i32_2 = arith.constant 0 : i32
    return %c0_i32, %c0_i32_0, %c0_i32_1 : i32, i32, i32
  }
  func.func @transform_7(%arg0: i32) -> (i32, i32, i32) {
    %c0_i32 = arith.constant 0 : i32
    %c0_i32_0 = arith.constant 0 : i32
    %c0_i32_1 = arith.constant 0 : i32
    %c0_i32_2 = arith.constant 0 : i32
    return %c0_i32, %c0_i32_0, %c0_i32_1 : i32, i32, i32
  }
  func.func @transform_8(%arg0: i32) -> (i32, i32, i32) {
    %c0_i32 = arith.constant 0 : i32
    %c0_i32_0 = arith.constant 0 : i32
    %c0_i32_1 = arith.constant 0 : i32
    %c0_i32_2 = arith.constant 0 : i32
    return %c0_i32, %c0_i32_0, %c0_i32_1 : i32, i32, i32
  }
  func.func @transform_9(%arg0: i32) -> (i32, i32, i32) {
    %c0_i32 = arith.constant 0 : i32
    %c0_i32_0 = arith.constant 0 : i32
    %c0_i32_1 = arith.constant 0 : i32
    %c0_i32_2 = arith.constant 0 : i32
    return %c0_i32, %c0_i32_0, %c0_i32_1 : i32, i32, i32
  }
  func.func @transform_10(%arg0: i32) -> (i32, i32, i32) {
    %c0_i32 = arith.constant 0 : i32
    %c0_i32_0 = arith.constant 0 : i32
    %c0_i32_1 = arith.constant 0 : i32
    %c0_i32_2 = arith.constant 0 : i32
    return %c0_i32, %c0_i32_0, %c0_i32_1 : i32, i32, i32
  }
  func.func @transform_11(%arg0: i32) -> (i32, i32, i32) {
    %c0_i32 = arith.constant 0 : i32
    %c0_i32_0 = arith.constant 0 : i32
    %c0_i32_1 = arith.constant 0 : i32
    %c0_i32_2 = arith.constant 0 : i32
    return %c0_i32, %c0_i32_0, %c0_i32_1 : i32, i32, i32
  }
  func.func @transform_12(%arg0: i32) -> (i32, i32, i32) {
    %c0_i32 = arith.constant 0 : i32
    %c0_i32_0 = arith.constant 0 : i32
    %c0_i32_1 = arith.constant 0 : i32
    %c0_i32_2 = arith.constant 0 : i32
    return %c0_i32, %c0_i32_0, %c0_i32_1 : i32, i32, i32
  }
  func.func @transform_13(%arg0: i32) -> (i32, i32, i32) {
    %c0_i32 = arith.constant 0 : i32
    %c0_i32_0 = arith.constant 0 : i32
    %c0_i32_1 = arith.constant 0 : i32
    %c0_i32_2 = arith.constant 0 : i32
    return %c0_i32, %c0_i32_0, %c0_i32_1 : i32, i32, i32
  }
  func.func @transform_14(%arg0: i32) -> (i32, i32, i32) {
    %c0_i32 = arith.constant 0 : i32
    %c0_i32_0 = arith.constant 0 : i32
    %c0_i32_1 = arith.constant 0 : i32
    %c0_i32_2 = arith.constant 0 : i32
    return %c0_i32, %c0_i32_0, %c0_i32_1 : i32, i32, i32
  }
  func.func @transform_15(%arg0: i32) -> (i32, i32, i32) {
    %c0_i32 = arith.constant 0 : i32
    %c0_i32_0 = arith.constant 0 : i32
    %c0_i32_1 = arith.constant 0 : i32
    %c0_i32_2 = arith.constant 0 : i32
    return %c0_i32, %c0_i32_0, %c0_i32_1 : i32, i32, i32
  }
  func.func @transform_16(%arg0: i32) -> (i32, i32, i32) {
    %c0_i32 = arith.constant 0 : i32
    %c0_i32_0 = arith.constant 0 : i32
    %c0_i32_1 = arith.constant 0 : i32
    %c0_i32_2 = arith.constant 0 : i32
    return %c0_i32, %c0_i32_0, %c0_i32_1 : i32, i32, i32
  }
  func.func @transform_17(%arg0: i32) -> (i32, i32, i32) {
    %c0_i32 = arith.constant 0 : i32
    %c0_i32_0 = arith.constant 0 : i32
    %c0_i32_1 = arith.constant 0 : i32
    %c0_i32_2 = arith.constant 0 : i32
    return %c0_i32, %c0_i32_0, %c0_i32_1 : i32, i32, i32
  }
  func.func @transform_18(%arg0: i32) -> (i32, i32, i32) {
    %c0_i32 = arith.constant 0 : i32
    %c0_i32_0 = arith.constant 0 : i32
    %c0_i32_1 = arith.constant 0 : i32
    %c0_i32_2 = arith.constant 0 : i32
    return %c0_i32, %c0_i32_0, %c0_i32_1 : i32, i32, i32
  }
  func.func @transform_19(%arg0: i32) -> (i32, i32) {
    %c0_i32 = arith.constant 0 : i32
    %c0_i32_0 = arith.constant 0 : i32
    %c0_i32_1 = arith.constant 0 : i32
    return %c0_i32, %c0_i32_0 : i32, i32
  }
  func.func @transform_20(%arg0: i32) -> (i32, i32) {
    %c0_i32 = arith.constant 0 : i32
    %c0_i32_0 = arith.constant 0 : i32
    %c0_i32_1 = arith.constant 0 : i32
    return %c0_i32, %c0_i32_0 : i32, i32
  }
  func.func @transform_21(%arg0: i32) -> (i32, i32) {
    %c0_i32 = arith.constant 0 : i32
    %c0_i32_0 = arith.constant 0 : i32
    %c0_i32_1 = arith.constant 0 : i32
    return %c0_i32, %c0_i32_0 : i32, i32
  }
  func.func @transform_22(%arg0: i32) -> (i32, i32) {
    %c0_i32 = arith.constant 0 : i32
    %c0_i32_0 = arith.constant 0 : i32
    %c0_i32_1 = arith.constant 0 : i32
    return %c0_i32, %c0_i32_0 : i32, i32
  }
  func.func @transform_23(%arg0: i32) -> (i32, i32, i32) {
    %c0_i32 = arith.constant 0 : i32
    %c0_i32_0 = arith.constant 0 : i32
    %c0_i32_1 = arith.constant 0 : i32
    return %arg0, %c0_i32, %c0_i32_0 : i32, i32, i32
  }
}

</mosaic_0001>

<llo_original>
// kernel: tpu_custom_call.1
$region0: #{tpu_custom_call.1}
  #allocation0 [shape = 'u32[]', space=smem, size = 0x4, offset = 0x4, fixed_abs, tag = 'smem constant byte address 0x4 - core index']
  #allocation1 [shape = 'u32[144,128]{1,0:T(1,128)}', space=vmem, size = 0x12000, scoped, tag = 'internal scratch']
  %s0 = inlined_call_operand.vmem [shape: f32[16,32], index: 0, kind: input, shape index: {}]
  %s1 = inlined_call_operand.vmem [shape: f32[8,32], index: 1, kind: input, shape index: {}]
  %s2 = inlined_call_operand.vmem [shape: f32[8,8], index: 2, kind: input, shape index: {}]
  %s3 = inlined_call_operand.vmem [shape: bf16[4,32,16], index: 3, kind: input, shape index: {}]
  %s4 = inlined_call_operand.vmem [shape: f32[4,1,16], index: 4, kind: input, shape index: {}]
  %s5 = inlined_call_operand.vmem [shape: bf16[4,32,16], index: 5, kind: input, shape index: {}]
  %s6 = inlined_call_operand.vmem [shape: f32[4,1,16], index: 6, kind: input, shape index: {}]
  %s7 = inlined_call_operand.vmem [shape: bf16[4,32,16], index: 7, kind: input, shape index: {}]
  %s8 = inlined_call_operand.vmem [shape: f32[4,1,16], index: 8, kind: input, shape index: {}]
  %s9 = inlined_call_operand.vmem [shape: bf16[4,16,32], index: 9, kind: input, shape index: {}]
  %s10 = inlined_call_operand.vmem [shape: f32[2,1,32], index: 10, kind: input, shape index: {}]
  %s11 = inlined_call_operand.vmem [shape: f32[2,1,32], index: 11, kind: input, shape index: {}]
  %s12 = inlined_call_operand.vmem [shape: f32[2,1,32], index: 12, kind: input, shape index: {}]
  %s13 = inlined_call_operand.vmem [shape: bf16[2,32,64], index: 13, kind: input, shape index: {}]
  %s14 = inlined_call_operand.vmem [shape: f32[2,1,64], index: 14, kind: input, shape index: {}]
  %s15 = inlined_call_operand.vmem [shape: bf16[2,64,32], index: 15, kind: input, shape index: {}]
  %s16 = inlined_call_operand.vmem [shape: f32[2,1,32], index: 16, kind: input, shape index: {}]
  %s17 = inlined_call_operand.vmem [shape: f32[2,1,32], index: 17, kind: input, shape index: {}]
  %s18 = inlined_call_operand.vmem [shape: f32[2,1,32], index: 18, kind: input, shape index: {}]
  %s19 = inlined_call_operand.vmem [shape: bf16[32,32], index: 19, kind: input, shape index: {}]
  %s20 = inlined_call_operand.vmem [shape: f32[1,32], index: 20, kind: input, shape index: {}]
  %s21 = inlined_call_operand.vmem [shape: bf16[32,32], index: 21, kind: input, shape index: {}]
  %s22 = inlined_call_operand.vmem [shape: f32[1,32], index: 22, kind: input, shape index: {}]
  %s23 = inlined_call_operand.hbm [shape: f32[2,1,32], index: 23, kind: output, shape index: {}]
  %s24 = sld [smem:[#allocation0]]
  $region125: #{tpu_custom_call.1} parent=0
    _
  %s26 = ssub.s32 1, %s24
  %s27 = scalar_select 0, %s26, %s24
  $region1: #{tpu_custom_call.1} parent=0
    #allocation2 [shape = 'u8[1024]{0}', space=vmem, size = 0x400, scoped, tag = 'output window, operand 0']
    #allocation3 [shape = 's32[2]{0}', space=sflag, size = 0x8, scoped, tag = 'scoped memory for tpu_custom_call.1']
    %28 = vsyncpa [#allocation3], 0
    %s29 = scalar_lea.sflag [#allocation3], 1
    %30 = vsyncpa %s29, 0
    loop: start=0, step=1, limit=4
    $region2: #{tpu_custom_call.1} parent=1 // loop_pre_header
      _
    $region3: #{tpu_custom_call.1} parent=1 // loop_header
      %s32 = sphi 0, %s36
      %p33 = scmp.ge.s32.totalorder %s32, 4
      %s42 = sphi 0, %s44
      %s45 = sphi 0, %s42
      %s46 = sphi 0, %s45
      %s62 = sphi 0, %s46
      %s66 = sphi 0, %s66
      %s68 = sphi 0, %s66
      %s69 = sphi 0, %s68
      %s83 = sphi 0, %s69
      %s87 = sphi 0, %s87
      %s89 = sphi 0, %s87
      %s90 = sphi 0, %s89
      %s104 = sphi 0, %s90
      %s108 = sphi 0, %s108
      %s110 = sphi 0, %s108
      %s111 = sphi 0, %s110
      %s125 = sphi 0, %s111
      %s129 = sphi 0, %s129
      %s131 = sphi 0, %s129
      %s132 = sphi 0, %s131
      %s146 = sphi 0, %s132
      %s150 = sphi 0, %s150
      %s152 = sphi 0, %s150
      %s153 = sphi 0, %s152
      %s167 = sphi 0, %s153
      %s171 = sphi 0, %s171
      %s173 = sphi 0, %s171
      %s174 = sphi 0, %s173
      %s188 = sphi 0, %s174
      %s192 = sphi 0, %s192
      %s194 = sphi 0, %s192
      %s195 = sphi 0, %s194
      %s209 = sphi 0, %s195
      %s213 = sphi 0, %s213
      %s215 = sphi 0, %s213
      %s216 = sphi 0, %s215
      %s230 = sphi 0, %s216
      %s234 = sphi 0, %s234
      %s236 = sphi 0, %s234
      %s237 = sphi 0, %s236
      %s251 = sphi 0, %s237
      %s255 = sphi 0, %s255
      %s257 = sphi 0, %s255
      %s258 = sphi 0, %s257
      %s272 = sphi 0, %s258
      %s276 = sphi 0, %s276
      %s278 = sphi 0, %s276
      %s279 = sphi 0, %s278
      %s293 = sphi 0, %s279
      %s297 = sphi 0, %s297
      %s299 = sphi 0, %s297
      %s300 = sphi 0, %s299
      %s314 = sphi 0, %s300
      %s318 = sphi 0, %s318
      %s320 = sphi 0, %s318
      %s321 = sphi 0, %s320
      %s335 = sphi 0, %s321
      %s339 = sphi 0, %s339
      %s341 = sphi 0, %s339
      %s342 = sphi 0, %s341
      %s356 = sphi 0, %s342
      %s360 = sphi 0, %s360
      %s362 = sphi 0, %s360
      %s363 = sphi 0, %s362
      %s377 = sphi 0, %s363
      %s381 = sphi 0, %s381
      %s383 = sphi 0, %s381
      %s384 = sphi 0, %s383
      %s398 = sphi 0, %s384
      %s402 = sphi 0, %s402
      %s404 = sphi 0, %s402
      %s405 = sphi 0, %s404
      %s419 = sphi 0, %s405
      %s423 = sphi 0, %s423
      %s425 = sphi 0, %s423
      %s426 = sphi 0, %s425
      %s440 = sphi 0, %s426
      %s444 = sphi 0, %s444
      %s446 = sphi 0, %s444
      %s447 = sphi 0, %s446
      %s461 = sphi 0, %s447
      %s465 = sphi 0, %s465
      %s467 = sphi 0, %s465
      %s468 = sphi 0, %s467
      %s482 = sphi 0, %s468
      %s486 = sphi 0, %s486
      %s488 = sphi 0, %s486
      %s489 = sphi 0, %s488
      %s503 = sphi 0, %s489
      %s507 = sphi 0, %s507
      %s509 = sphi 0, %s507
      %s510 = sphi 0, %s509
      %s524 = sphi 0, %s510
      %s530 = sphi 0, %s532
      %s533 = sphi 0, %s530
      %s534 = sphi 0, %s533
      %s550 = sphi 0, %s534
    $region4: #{tpu_custom_call.1} parent=1 // loop_header_branch
      %35 = sbr.rel (%p33) target = $region8
    $region5: #{tpu_custom_call.1} parent=1 // loop_body
      %s37 = ssub.s32 %s32, 1
      %s38 = ssub.s32 %s32, 2
      %s39 = sadd.s32 %s32, 1
      %s40 = ssub.s32 %s32, %s39
      %p41 = scmp.eq.s32.totalorder %s40, 0
      %s43 = sadd.s32 %s42, 1
      %s44 = scalar_select %p41, %s42, %s43
      %p47 = pneg %p41
      %p48 = scmp.eq.s32.totalorder %s32, 1
      %p49 = por %p47, %p48
      %p50 = scmp.ne.s32.totalorder %s42, %s45
      %p51 = scmp.eq.s32.totalorder %s32, 0
      %p52 = por %p50, %p51
      %p53 = scmp.ne.s32.totalorder %s42, %s45
      %p54 = scmp.eq.s32.totalorder %s37, 1
      %p55 = por %p53, %p54
      %p56 = scmp.ne.s32.totalorder %s45, %s46
      %p57 = scmp.eq.s32.totalorder %s37, 0
      %p58 = por %p56, %p57
      %p59 = scmp.ne.s32.totalorder %s45, %s46
      %p60 = scmp.eq.s32.totalorder %s38, 1
      %p61 = por %p59, %p60
      %p63 = scmp.ne.s32.totalorder %s46, %s62
      %p64 = scmp.eq.s32.totalorder %s38, 0
      %p65 = por %p63, %p64
      %s67 = sadd.s32 %s66, 1
      %p70 = scmp.eq.s32.totalorder %s32, 1
      %p71 = scmp.ne.s32.totalorder %s66, %s68
      %p72 = scmp.eq.s32.totalorder %s32, 0
      %p73 = por %p71, %p72
      %p74 = scmp.ne.s32.totalorder %s66, %s68
      %p75 = scmp.eq.s32.totalorder %s37, 1
      %p76 = por %p74, %p75
      %p77 = scmp.ne.s32.totalorder %s68, %s69
      %p78 = scmp.eq.s32.totalorder %s37, 0
      %p79 = por %p77, %p78
      %p80 = scmp.ne.s32.totalorder %s68, %s69
      %p81 = scmp.eq.s32.totalorder %s38, 1
      %p82 = por %p80, %p81
      %p84 = scmp.ne.s32.totalorder %s69, %s83
      %p85 = scmp.eq.s32.totalorder %s38, 0
      %p86 = por %p84, %p85
      %s88 = sadd.s32 %s87, 1
      %p91 = scmp.eq.s32.totalorder %s32, 1
      %p92 = scmp.ne.s32.totalorder %s87, %s89
      %p93 = scmp.eq.s32.totalorder %s32, 0
      %p94 = por %p92, %p93
      %p95 = scmp.ne.s32.totalorder %s87, %s89
      %p96 = scmp.eq.s32.totalorder %s37, 1
      %p97 = por %p95, %p96
      %p98 = scmp.ne.s32.totalorder %s89, %s90
      %p99 = scmp.eq.s32.totalorder %s37, 0
      %p100 = por %p98, %p99
      %p101 = scmp.ne.s32.totalorder %s89, %s90
      %p102 = scmp.eq.s32.totalorder %s38, 1
      %p103 = por %p101, %p102
      %p105 = scmp.ne.s32.totalorder %s90, %s104
      %p106 = scmp.eq.s32.totalorder %s38, 0
      %p107 = por %p105, %p106
      %s109 = sadd.s32 %s108, 1
      %p112 = scmp.eq.s32.totalorder %s32, 1
      %p113 = scmp.ne.s32.totalorder %s108, %s110
      %p114 = scmp.eq.s32.totalorder %s32, 0
      %p115 = por %p113, %p114
      %p116 = scmp.ne.s32.totalorder %s108, %s110
      %p117 = scmp.eq.s32.totalorder %s37, 1
      %p118 = por %p116, %p117
      %p119 = scmp.ne.s32.totalorder %s110, %s111
      %p120 = scmp.eq.s32.totalorder %s37, 0
      %p121 = por %p119, %p120
      %p122 = scmp.ne.s32.totalorder %s110, %s111
      %p123 = scmp.eq.s32.totalorder %s38, 1
      %p124 = por %p122, %p123
      %p126 = scmp.ne.s32.totalorder %s111, %s125
      %p127 = scmp.eq.s32.totalorder %s38, 0
      %p128 = por %p126, %p127
      %s130 = sadd.s32 %s129, 1
      %p133 = scmp.eq.s32.totalorder %s32, 1
      %p134 = scmp.ne.s32.totalorder %s129, %s131
      %p135 = scmp.eq.s32.totalorder %s32, 0
      %p136 = por %p134, %p135
      %p137 = scmp.ne.s32.totalorder %s129, %s131
      %p138 = scmp.eq.s32.totalorder %s37, 1
      %p139 = por %p137, %p138
      %p140 = scmp.ne.s32.totalorder %s131, %s132
      %p141 = scmp.eq.s32.totalorder %s37, 0
      %p142 = por %p140, %p141
      %p143 = scmp.ne.s32.totalorder %s131, %s132
      %p144 = scmp.eq.s32.totalorder %s38, 1
      %p145 = por %p143, %p144
      %p147 = scmp.ne.s32.totalorder %s132, %s146
      %p148 = scmp.eq.s32.totalorder %s38, 0
      %p149 = por %p147, %p148
      %s151 = sadd.s32 %s150, 1
      %p154 = scmp.eq.s32.totalorder %s32, 1
      %p155 = scmp.ne.s32.totalorder %s150, %s152
      %p156 = scmp.eq.s32.totalorder %s32, 0
      %p157 = por %p155, %p156
      %p158 = scmp.ne.s32.totalorder %s150, %s152
      %p159 = scmp.eq.s32.totalorder %s37, 1
      %p160 = por %p158, %p159
      %p161 = scmp.ne.s32.totalorder %s152, %s153
      %p162 = scmp.eq.s32.totalorder %s37, 0
      %p163 = por %p161, %p162
      %p164 = scmp.ne.s32.totalorder %s152, %s153
      %p165 = scmp.eq.s32.totalorder %s38, 1
      %p166 = por %p164, %p165
      %p168 = scmp.ne.s32.totalorder %s153, %s167
      %p169 = scmp.eq.s32.totalorder %s38, 0
      %p170 = por %p168, %p169
      %s172 = sadd.s32 %s171, 1
      %p175 = scmp.eq.s32.totalorder %s32, 1
      %p176 = scmp.ne.s32.totalorder %s171, %s173
      %p177 = scmp.eq.s32.totalorder %s32, 0
      %p178 = por %p176, %p177
      %p179 = scmp.ne.s32.totalorder %s171, %s173
      %p180 = scmp.eq.s32.totalorder %s37, 1
      %p181 = por %p179, %p180
      %p182 = scmp.ne.s32.totalorder %s173, %s174
      %p183 = scmp.eq.s32.totalorder %s37, 0
      %p184 = por %p182, %p183
      %p185 = scmp.ne.s32.totalorder %s173, %s174
      %p186 = scmp.eq.s32.totalorder %s38, 1
      %p187 = por %p185, %p186
      %p189 = scmp.ne.s32.totalorder %s174, %s188
      %p190 = scmp.eq.s32.totalorder %s38, 0
      %p191 = por %p189, %p190
      %s193 = sadd.s32 %s192, 1
      %p196 = scmp.eq.s32.totalorder %s32, 1
      %p197 = scmp.ne.s32.totalorder %s192, %s194
      %p198 = scmp.eq.s32.totalorder %s32, 0
      %p199 = por %p197, %p198
      %p200 = scmp.ne.s32.totalorder %s192, %s194
      %p201 = scmp.eq.s32.totalorder %s37, 1
      %p202 = por %p200, %p201
      %p203 = scmp.ne.s32.totalorder %s194, %s195
      %p204 = scmp.eq.s32.totalorder %s37, 0
      %p205 = por %p203, %p204
      %p206 = scmp.ne.s32.totalorder %s194, %s195
      %p207 = scmp.eq.s32.totalorder %s38, 1
      %p208 = por %p206, %p207
      %p210 = scmp.ne.s32.totalorder %s195, %s209
      %p211 = scmp.eq.s32.totalorder %s38, 0
      %p212 = por %p210, %p211
      %s214 = sadd.s32 %s213, 1
      %p217 = scmp.eq.s32.totalorder %s32, 1
      %p218 = scmp.ne.s32.totalorder %s213, %s215
      %p219 = scmp.eq.s32.totalorder %s32, 0
      %p220 = por %p218, %p219
      %p221 = scmp.ne.s32.totalorder %s213, %s215
      %p222 = scmp.eq.s32.totalorder %s37, 1
      %p223 = por %p221, %p222
      %p224 = scmp.ne.s32.totalorder %s215, %s216
      %p225 = scmp.eq.s32.totalorder %s37, 0
      %p226 = por %p224, %p225
      %p227 = scmp.ne.s32.totalorder %s215, %s216
      %p228 = scmp.eq.s32.totalorder %s38, 1
      %p229 = por %p227, %p228
      %p231 = scmp.ne.s32.totalorder %s216, %s230
      %p232 = scmp.eq.s32.totalorder %s38, 0
      %p233 = por %p231, %p232
      %s235 = sadd.s32 %s234, 1
      %p238 = scmp.eq.s32.totalorder %s32, 1
      %p239 = scmp.ne.s32.totalorder %s234, %s236
      %p240 = scmp.eq.s32.totalorder %s32, 0
      %p241 = por %p239, %p240
      %p242 = scmp.ne.s32.totalorder %s234, %s236
      %p243 = scmp.eq.s32.totalorder %s37, 1
      %p244 = por %p242, %p243
      %p245 = scmp.ne.s32.totalorder %s236, %s237
      %p246 = scmp.eq.s32.totalorder %s37, 0
      %p247 = por %p245, %p246
      %p248 = scmp.ne.s32.totalorder %s236, %s237
      %p249 = scmp.eq.s32.totalorder %s38, 1
      %p250 = por %p248, %p249
      %p252 = scmp.ne.s32.totalorder %s237, %s251
      %p253 = scmp.eq.s32.totalorder %s38, 0
      %p254 = por %p252, %p253
      %s256 = sadd.s32 %s255, 1
      %p259 = scmp.eq.s32.totalorder %s32, 1
      %p260 = scmp.ne.s32.totalorder %s255, %s257
      %p261 = scmp.eq.s32.totalorder %s32, 0
      %p262 = por %p260, %p261
      %p263 = scmp.ne.s32.totalorder %s255, %s257
      %p264 = scmp.eq.s32.totalorder %s37, 1
      %p265 = por %p263, %p264
      %p266 = scmp.ne.s32.totalorder %s257, %s258
      %p267 = scmp.eq.s32.totalorder %s37, 0
      %p268 = por %p266, %p267
      %p269 = scmp.ne.s32.totalorder %s257, %s258
      %p270 = scmp.eq.s32.totalorder %s38, 1
      %p271 = por %p269, %p270
      %p273 = scmp.ne.s32.totalorder %s258, %s272
      %p274 = scmp.eq.s32.totalorder %s38, 0
      %p275 = por %p273, %p274
      %s277 = sadd.s32 %s276, 1
      %p280 = scmp.eq.s32.totalorder %s32, 1
      %p281 = scmp.ne.s32.totalorder %s276, %s278
      %p282 = scmp.eq.s32.totalorder %s32, 0
      %p283 = por %p281, %p282
      %p284 = scmp.ne.s32.totalorder %s276, %s278
      %p285 = scmp.eq.s32.totalorder %s37, 1
      %p286 = por %p284, %p285
      %p287 = scmp.ne.s32.totalorder %s278, %s279
      %p288 = scmp.eq.s32.totalorder %s37, 0
      %p289 = por %p287, %p288
      %p290 = scmp.ne.s32.totalorder %s278, %s279
      %p291 = scmp.eq.s32.totalorder %s38, 1
      %p292 = por %p290, %p291
      %p294 = scmp.ne.s32.totalorder %s279, %s293
      %p295 = scmp.eq.s32.totalorder %s38, 0
      %p296 = por %p294, %p295
      %s298 = sadd.s32 %s297, 1
      %p301 = scmp.eq.s32.totalorder %s32, 1
      %p302 = scmp.ne.s32.totalorder %s297, %s299
      %p303 = scmp.eq.s32.totalorder %s32, 0
      %p304 = por %p302, %p303
      %p305 = scmp.ne.s32.totalorder %s297, %s299
      %p306 = scmp.eq.s32.totalorder %s37, 1
      %p307 = por %p305, %p306
      %p308 = scmp.ne.s32.totalorder %s299, %s300
      %p309 = scmp.eq.s32.totalorder %s37, 0
      %p310 = por %p308, %p309
      %p311 = scmp.ne.s32.totalorder %s299, %s300
      %p312 = scmp.eq.s32.totalorder %s38, 1
      %p313 = por %p311, %p312
      %p315 = scmp.ne.s32.totalorder %s300, %s314
      %p316 = scmp.eq.s32.totalorder %s38, 0
      %p317 = por %p315, %p316
      %s319 = sadd.s32 %s318, 1
      %p322 = scmp.eq.s32.totalorder %s32, 1
      %p323 = scmp.ne.s32.totalorder %s318, %s320
      %p324 = scmp.eq.s32.totalorder %s32, 0
      %p325 = por %p323, %p324
      %p326 = scmp.ne.s32.totalorder %s318, %s320
      %p327 = scmp.eq.s32.totalorder %s37, 1
      %p328 = por %p326, %p327
      %p329 = scmp.ne.s32.totalorder %s320, %s321
      %p330 = scmp.eq.s32.totalorder %s37, 0
      %p331 = por %p329, %p330
      %p332 = scmp.ne.s32.totalorder %s320, %s321
      %p333 = scmp.eq.s32.totalorder %s38, 1
      %p334 = por %p332, %p333
      %p336 = scmp.ne.s32.totalorder %s321, %s335
      %p337 = scmp.eq.s32.totalorder %s38, 0
      %p338 = por %p336, %p337
      %s340 = sadd.s32 %s339, 1
      %p343 = scmp.eq.s32.totalorder %s32, 1
      %p344 = scmp.ne.s32.totalorder %s339, %s341
      %p345 = scmp.eq.s32.totalorder %s32, 0
      %p346 = por %p344, %p345
      %p347 = scmp.ne.s32.totalorder %s339, %s341
      %p348 = scmp.eq.s32.totalorder %s37, 1
      %p349 = por %p347, %p348
      %p350 = scmp.ne.s32.totalorder %s341, %s342
      %p351 = scmp.eq.s32.totalorder %s37, 0
      %p352 = por %p350, %p351
      %p353 = scmp.ne.s32.totalorder %s341, %s342
      %p354 = scmp.eq.s32.totalorder %s38, 1
      %p355 = por %p353, %p354
      %p357 = scmp.ne.s32.totalorder %s342, %s356
      %p358 = scmp.eq.s32.totalorder %s38, 0
      %p359 = por %p357, %p358
      %s361 = sadd.s32 %s360, 1
      %p364 = scmp.eq.s32.totalorder %s32, 1
      %p365 = scmp.ne.s32.totalorder %s360, %s362
      %p366 = scmp.eq.s32.totalorder %s32, 0
      %p367 = por %p365, %p366
      %p368 = scmp.ne.s32.totalorder %s360, %s362
      %p369 = scmp.eq.s32.totalorder %s37, 1
      %p370 = por %p368, %p369
      %p371 = scmp.ne.s32.totalorder %s362, %s363
      %p372 = scmp.eq.s32.totalorder %s37, 0
      %p373 = por %p371, %p372
      %p374 = scmp.ne.s32.totalorder %s362, %s363
      %p375 = scmp.eq.s32.totalorder %s38, 1
      %p376 = por %p374, %p375
      %p378 = scmp.ne.s32.totalorder %s363, %s377
      %p379 = scmp.eq.s32.totalorder %s38, 0
      %p380 = por %p378, %p379
      %s382 = sadd.s32 %s381, 1
      %p385 = scmp.eq.s32.totalorder %s32, 1
      %p386 = scmp.ne.s32.totalorder %s381, %s383
      %p387 = scmp.eq.s32.totalorder %s32, 0
      %p388 = por %p386, %p387
      %p389 = scmp.ne.s32.totalorder %s381, %s383
      %p390 = scmp.eq.s32.totalorder %s37, 1
      %p391 = por %p389, %p390
      %p392 = scmp.ne.s32.totalorder %s383, %s384
      %p393 = scmp.eq.s32.totalorder %s37, 0
      %p394 = por %p392, %p393
      %p395 = scmp.ne.s32.totalorder %s383, %s384
      %p396 = scmp.eq.s32.totalorder %s38, 1
      %p397 = por %p395, %p396
      %p399 = scmp.ne.s32.totalorder %s384, %s398
      %p400 = scmp.eq.s32.totalorder %s38, 0
      %p401 = por %p399, %p400
      %s403 = sadd.s32 %s402, 1
      %p406 = scmp.eq.s32.totalorder %s32, 1
      %p407 = scmp.ne.s32.totalorder %s402, %s404
      %p408 = scmp.eq.s32.totalorder %s32, 0
      %p409 = por %p407, %p408
      %p410 = scmp.ne.s32.totalorder %s402, %s404
      %p411 = scmp.eq.s32.totalorder %s37, 1
      %p412 = por %p410, %p411
      %p413 = scmp.ne.s32.totalorder %s404, %s405
      %p414 = scmp.eq.s32.totalorder %s37, 0
      %p415 = por %p413, %p414
      %p416 = scmp.ne.s32.totalorder %s404, %s405
      %p417 = scmp.eq.s32.totalorder %s38, 1
      %p418 = por %p416, %p417
      %p420 = scmp.ne.s32.totalorder %s405, %s419
      %p421 = scmp.eq.s32.totalorder %s38, 0
      %p422 = por %p420, %p421
      %s424 = sadd.s32 %s423, 1
      %p427 = scmp.eq.s32.totalorder %s32, 1
      %p428 = scmp.ne.s32.totalorder %s423, %s425
      %p429 = scmp.eq.s32.totalorder %s32, 0
      %p430 = por %p428, %p429
      %p431 = scmp.ne.s32.totalorder %s423, %s425
      %p432 = scmp.eq.s32.totalorder %s37, 1
      %p433 = por %p431, %p432
      %p434 = scmp.ne.s32.totalorder %s425, %s426
      %p435 = scmp.eq.s32.totalorder %s37, 0
      %p436 = por %p434, %p435
      %p437 = scmp.ne.s32.totalorder %s425, %s426
      %p438 = scmp.eq.s32.totalorder %s38, 1
      %p439 = por %p437, %p438
      %p441 = scmp.ne.s32.totalorder %s426, %s440
      %p442 = scmp.eq.s32.totalorder %s38, 0
      %p443 = por %p441, %p442
      %s445 = sadd.s32 %s444, 1
      %p448 = scmp.eq.s32.totalorder %s32, 1
      %p449 = scmp.ne.s32.totalorder %s444, %s446
      %p450 = scmp.eq.s32.totalorder %s32, 0
      %p451 = por %p449, %p450
      %p452 = scmp.ne.s32.totalorder %s444, %s446
      %p453 = scmp.eq.s32.totalorder %s37, 1
      %p454 = por %p452, %p453
      %p455 = scmp.ne.s32.totalorder %s446, %s447
      %p456 = scmp.eq.s32.totalorder %s37, 0
      %p457 = por %p455, %p456
      %p458 = scmp.ne.s32.totalorder %s446, %s447
      %p459 = scmp.eq.s32.totalorder %s38, 1
      %p460 = por %p458, %p459
      %p462 = scmp.ne.s32.totalorder %s447, %s461
      %p463 = scmp.eq.s32.totalorder %s38, 0
      %p464 = por %p462, %p463
      %s466 = sadd.s32 %s465, 1
      %p469 = scmp.eq.s32.totalorder %s32, 1
      %p470 = scmp.ne.s32.totalorder %s465, %s467
      %p471 = scmp.eq.s32.totalorder %s32, 0
      %p472 = por %p470, %p471
      %p473 = scmp.ne.s32.totalorder %s465, %s467
      %p474 = scmp.eq.s32.totalorder %s37, 1
      %p475 = por %p473, %p474
      %p476 = scmp.ne.s32.totalorder %s467, %s468
      %p477 = scmp.eq.s32.totalorder %s37, 0
      %p478 = por %p476, %p477
      %p479 = scmp.ne.s32.totalorder %s467, %s468
      %p480 = scmp.eq.s32.totalorder %s38, 1
      %p481 = por %p479, %p480
      %p483 = scmp.ne.s32.totalorder %s468, %s482
      %p484 = scmp.eq.s32.totalorder %s38, 0
      %p485 = por %p483, %p484
      %s487 = sadd.s32 %s486, 1
      %p490 = scmp.eq.s32.totalorder %s32, 1
      %p491 = scmp.ne.s32.totalorder %s486, %s488
      %p492 = scmp.eq.s32.totalorder %s32, 0
      %p493 = por %p491, %p492
      %p494 = scmp.ne.s32.totalorder %s486, %s488
      %p495 = scmp.eq.s32.totalorder %s37, 1
      %p496 = por %p494, %p495
      %p497 = scmp.ne.s32.totalorder %s488, %s489
      %p498 = scmp.eq.s32.totalorder %s37, 0
      %p499 = por %p497, %p498
      %p500 = scmp.ne.s32.totalorder %s488, %s489
      %p501 = scmp.eq.s32.totalorder %s38, 1
      %p502 = por %p500, %p501
      %p504 = scmp.ne.s32.totalorder %s489, %s503
      %p505 = scmp.eq.s32.totalorder %s38, 0
      %p506 = por %p504, %p505
      %s508 = sadd.s32 %s507, 1
      %p511 = scmp.eq.s32.totalorder %s32, 1
      %p512 = scmp.ne.s32.totalorder %s507, %s509
      %p513 = scmp.eq.s32.totalorder %s32, 0
      %p514 = por %p512, %p513
      %p515 = scmp.ne.s32.totalorder %s507, %s509
      %p516 = scmp.eq.s32.totalorder %s37, 1
      %p517 = por %p515, %p516
      %p518 = scmp.ne.s32.totalorder %s509, %s510
      %p519 = scmp.eq.s32.totalorder %s37, 0
      %p520 = por %p518, %p519
      %p521 = scmp.ne.s32.totalorder %s509, %s510
      %p522 = scmp.eq.s32.totalorder %s38, 1
      %p523 = por %p521, %p522
      %p525 = scmp.ne.s32.totalorder %s510, %s524
      %p526 = scmp.eq.s32.totalorder %s38, 0
      %p527 = por %p525, %p526
      %s528 = ssub.s32 %s32, %s39
      %p529 = scmp.eq.s32.totalorder %s528, 0
      %s531 = sadd.s32 %s530, 1
      %s532 = scalar_select %p529, %s530, %s531
      %p535 = pneg %p529
      %p536 = scmp.eq.s32.totalorder %s32, 1
      %p537 = por %p535, %p536
      %p538 = scmp.ne.s32.totalorder %s530, %s533
      %p539 = scmp.eq.s32.totalorder %s32, 0
      %p540 = por %p538, %p539
      %p541 = scmp.ne.s32.totalorder %s530, %s533
      %p542 = scmp.eq.s32.totalorder %s37, 1
      %p543 = por %p541, %p542
      %p544 = scmp.ne.s32.totalorder %s533, %s534
      %p545 = scmp.eq.s32.totalorder %s37, 0
      %p546 = por %p544, %p545
      %p547 = scmp.ne.s32.totalorder %s533, %s534
      %p548 = scmp.eq.s32.totalorder %s38, 1
      %p549 = por %p547, %p548
      %p551 = scmp.ne.s32.totalorder %s534, %s550
      %p552 = scmp.eq.s32.totalorder %s38, 0
      %p553 = por %p551, %p552
      %p554 = scmp.le.s32.totalorder 1, %s32
      %p555 = scmp.lt.s32.totalorder %s32, 3
      %p556 = pnand %p554, %p555
      %p557 = pneg %p556
      // Predicated region
      $region9: #{tpu_custom_call.1} parent=5 // pred_check
        _
      $region10: #{tpu_custom_call.1} parent=5 // pred_check_branch
        %559 = sbr.rel (%p556) target = $region12
      $region11: #{tpu_custom_call.1} parent=5 // pred_region
        %s560 = ssub.s32 %s32, 1
        // Predicated region
        $region13: #{tpu_custom_call.1} parent=11 // pred_check
          %p561 = pneg %p79
        $region14: #{tpu_custom_call.1} parent=11 // pred_check_branch
          %563 = sbr.rel (%p561) target = $region16
        $region15: #{tpu_custom_call.1} parent=11 // pred_region
          _
        $region16: #{tpu_custom_call.1} parent=11 // pred_fallthru
          _
        // Predicated region
        $region17: #{tpu_custom_call.1} parent=11 // pred_check
          %p564 = pneg %p100
        $region18: #{tpu_custom_call.1} parent=11 // pred_check_branch
          %566 = sbr.rel (%p564) target = $region20
        $region19: #{tpu_custom_call.1} parent=11 // pred_region
          _
        $region20: #{tpu_custom_call.1} parent=11 // pred_fallthru
          _
        // Predicated region
        $region21: #{tpu_custom_call.1} parent=11 // pred_check
          %p567 = pneg %p121
        $region22: #{tpu_custom_call.1} parent=11 // pred_check_branch
          %569 = sbr.rel (%p567) target = $region24
        $region23: #{tpu_custom_call.1} parent=11 // pred_region
          _
        $region24: #{tpu_custom_call.1} parent=11 // pred_fallthru
          _
        // Predicated region
        $region25: #{tpu_custom_call.1} parent=11 // pred_check
          %p570 = pneg %p142
        $region26: #{tpu_custom_call.1} parent=11 // pred_check_branch
          %572 = sbr.rel (%p570) target = $region28
        $region27: #{tpu_custom_call.1} parent=11 // pred_region
          _
        $region28: #{tpu_custom_call.1} parent=11 // pred_fallthru
          _
        // Predicated region
        $region29: #{tpu_custom_call.1} parent=11 // pred_check
          %p573 = pneg %p163
        $region30: #{tpu_custom_call.1} parent=11 // pred_check_branch
          %575 = sbr.rel (%p573) target = $region32
        $region31: #{tpu_custom_call.1} parent=11 // pred_region
          _
        $region32: #{tpu_custom_call.1} parent=11 // pred_fallthru
          _
        // Predicated region
        $region33: #{tpu_custom_call.1} parent=11 // pred_check
          %p576 = pneg %p184
        $region34: #{tpu_custom_call.1} parent=11 // pred_check_branch
          %578 = sbr.rel (%p576) target = $region36
        $region35: #{tpu_custom_call.1} parent=11 // pred_region
          _
        $region36: #{tpu_custom_call.1} parent=11 // pred_fallthru
          _
        // Predicated region
        $region37: #{tpu_custom_call.1} parent=11 // pred_check
          %p579 = pneg %p205
        $region38: #{tpu_custom_call.1} parent=11 // pred_check_branch
          %581 = sbr.rel (%p579) target = $region40
        $region39: #{tpu_custom_call.1} parent=11 // pred_region
          _
        $region40: #{tpu_custom_call.1} parent=11 // pred_fallthru
          _
        // Predicated region
        $region41: #{tpu_custom_call.1} parent=11 // pred_check
          %p582 = pneg %p226
        $region42: #{tpu_custom_call.1} parent=11 // pred_check_branch
          %584 = sbr.rel (%p582) target = $region44
        $region43: #{tpu_custom_call.1} parent=11 // pred_region
          _
        $region44: #{tpu_custom_call.1} parent=11 // pred_fallthru
          _
        // Predicated region
        $region45: #{tpu_custom_call.1} parent=11 // pred_check
          %p585 = pneg %p247
        $region46: #{tpu_custom_call.1} parent=11 // pred_check_branch
          %587 = sbr.rel (%p585) target = $region48
        $region47: #{tpu_custom_call.1} parent=11 // pred_region
          _
        $region48: #{tpu_custom_call.1} parent=11 // pred_fallthru
          _
        // Predicated region
        $region49: #{tpu_custom_call.1} parent=11 // pred_check
          %p588 = pneg %p268
        $region50: #{tpu_custom_call.1} parent=11 // pred_check_branch
          %590 = sbr.rel (%p588) target = $region52
        $region51: #{tpu_custom_call.1} parent=11 // pred_region
          _
        $region52: #{tpu_custom_call.1} parent=11 // pred_fallthru
          _
        // Predicated region
        $region53: #{tpu_custom_call.1} parent=11 // pred_check
          %p591 = pneg %p289
        $region54: #{tpu_custom_call.1} parent=11 // pred_check_branch
          %593 = sbr.rel (%p591) target = $region56
        $region55: #{tpu_custom_call.1} parent=11 // pred_region
          _
        $region56: #{tpu_custom_call.1} parent=11 // pred_fallthru
          _
        // Predicated region
        $region57: #{tpu_custom_call.1} parent=11 // pred_check
          %p594 = pneg %p310
        $region58: #{tpu_custom_call.1} parent=11 // pred_check_branch
          %596 = sbr.rel (%p594) target = $region60
        $region59: #{tpu_custom_call.1} parent=11 // pred_region
          _
        $region60: #{tpu_custom_call.1} parent=11 // pred_fallthru
          _
        // Predicated region
        $region61: #{tpu_custom_call.1} parent=11 // pred_check
          %p597 = pneg %p331
        $region62: #{tpu_custom_call.1} parent=11 // pred_check_branch
          %599 = sbr.rel (%p597) target = $region64
        $region63: #{tpu_custom_call.1} parent=11 // pred_region
          _
        $region64: #{tpu_custom_call.1} parent=11 // pred_fallthru
          _
        // Predicated region
        $region65: #{tpu_custom_call.1} parent=11 // pred_check
          %p600 = pneg %p352
        $region66: #{tpu_custom_call.1} parent=11 // pred_check_branch
          %602 = sbr.rel (%p600) target = $region68
        $region67: #{tpu_custom_call.1} parent=11 // pred_region
          _
        $region68: #{tpu_custom_call.1} parent=11 // pred_fallthru
          _
        // Predicated region
        $region69: #{tpu_custom_call.1} parent=11 // pred_check
          %p603 = pneg %p373
        $region70: #{tpu_custom_call.1} parent=11 // pred_check_branch
          %605 = sbr.rel (%p603) target = $region72
        $region71: #{tpu_custom_call.1} parent=11 // pred_region
          _
        $region72: #{tpu_custom_call.1} parent=11 // pred_fallthru
          _
        // Predicated region
        $region73: #{tpu_custom_call.1} parent=11 // pred_check
          %p606 = pneg %p394
        $region74: #{tpu_custom_call.1} parent=11 // pred_check_branch
          %608 = sbr.rel (%p606) target = $region76
        $region75: #{tpu_custom_call.1} parent=11 // pred_region
          _
        $region76: #{tpu_custom_call.1} parent=11 // pred_fallthru
          _
        // Predicated region
        $region77: #{tpu_custom_call.1} parent=11 // pred_check
          %p609 = pneg %p415
        $region78: #{tpu_custom_call.1} parent=11 // pred_check_branch
          %611 = sbr.rel (%p609) target = $region80
        $region79: #{tpu_custom_call.1} parent=11 // pred_region
          _
        $region80: #{tpu_custom_call.1} parent=11 // pred_fallthru
          _
        // Predicated region
        $region81: #{tpu_custom_call.1} parent=11 // pred_check
          %p612 = pneg %p436
        $region82: #{tpu_custom_call.1} parent=11 // pred_check_branch
          %614 = sbr.rel (%p612) target = $region84
        $region83: #{tpu_custom_call.1} parent=11 // pred_region
          _
        $region84: #{tpu_custom_call.1} parent=11 // pred_fallthru
          _
        // Predicated region
        $region85: #{tpu_custom_call.1} parent=11 // pred_check
          %p615 = pneg %p457
        $region86: #{tpu_custom_call.1} parent=11 // pred_check_branch
          %617 = sbr.rel (%p615) target = $region88
        $region87: #{tpu_custom_call.1} parent=11 // pred_region
          _
        $region88: #{tpu_custom_call.1} parent=11 // pred_fallthru
          _
        // Predicated region
        $region89: #{tpu_custom_call.1} parent=11 // pred_check
          %p618 = pneg %p478
        $region90: #{tpu_custom_call.1} parent=11 // pred_check_branch
          %620 = sbr.rel (%p618) target = $region92
        $region91: #{tpu_custom_call.1} parent=11 // pred_region
          _
        $region92: #{tpu_custom_call.1} parent=11 // pred_fallthru
          _
        // Predicated region
        $region93: #{tpu_custom_call.1} parent=11 // pred_check
          %p621 = pneg %p499
        $region94: #{tpu_custom_call.1} parent=11 // pred_check_branch
          %623 = sbr.rel (%p621) target = $region96
        $region95: #{tpu_custom_call.1} parent=11 // pred_region
          _
        $region96: #{tpu_custom_call.1} parent=11 // pred_fallthru
          _
        // Predicated region
        $region97: #{tpu_custom_call.1} parent=11 // pred_check
          %p624 = pneg %p520
        $region98: #{tpu_custom_call.1} parent=11 // pred_check_branch
          %626 = sbr.rel (%p624) target = $region100
        $region99: #{tpu_custom_call.1} parent=11 // pred_region
          _
        $region100: #{tpu_custom_call.1} parent=11 // pred_fallthru
          _
      $region12: #{tpu_custom_call.1} parent=5 // pred_fallthru
        _
      %p627 = scmp.lt.s32.totalorder %s32, 2
      // Predicated region
      $region101: #{tpu_custom_call.1} parent=5 // pred_check
        %p628 = pneg %p627
      $region102: #{tpu_custom_call.1} parent=5 // pred_check_branch
        %630 = sbr.rel (%p628) target = $region104
      $region103: #{tpu_custom_call.1} parent=5 // pred_region
        // Predicated region
        $region105: #{tpu_custom_call.1} parent=103 // pred_check
          %p631 = pneg %p52
        $region106: #{tpu_custom_call.1} parent=103 // pred_check_branch
          %633 = sbr.rel (%p631) target = $region108
        $region107: #{tpu_custom_call.1} parent=103 // pred_region
          %p634 = scmp.lt.s32.totalorder %s32, 1
          %s635 = scalar_select %p634, %s32, 1
          %s636 = smul.addr %s635, 8
          %s637 = scalar_lea.vmem %s0, %s636
        $region108: #{tpu_custom_call.1} parent=103 // pred_fallthru
          _
      $region104: #{tpu_custom_call.1} parent=5 // pred_fallthru
        _
      %p638 = scmp.le.s32.totalorder 1, %s32
      %p639 = scmp.lt.s32.totalorder %s32, 3
      %p640 = pnand %p638, %p639
      %p641 = pneg %p640
      // Predicated region
      $region109: #{tpu_custom_call.1} parent=5 // pred_check
        _
      $region110: #{tpu_custom_call.1} parent=5 // pred_check_branch
        %643 = sbr.rel (%p640) target = $region112
      $region111: #{tpu_custom_call.1} parent=5 // pred_region
        %s644 = ssub.s32 %s32, 1
        %p645 = scmp.lt.s32.totalorder %s37, 1
        %s646 = scalar_select %p645, %s37, 1
        %s647 = smul.addr %s646, 8
        %s648 = scalar_lea.vmem %s0, %s647
        %p649 = pneg %p58
        %p650 = pneg %p55
        %p651 = pneg %p79
        %p652 = pneg %p76
        %p653 = pneg %p100
        %p654 = pneg %p97
        %p655 = pneg %p121
        %p656 = pneg %p118
        %p657 = pneg %p142
        %p658 = pneg %p139
        %p659 = pneg %p163
        %p660 = pneg %p160
        %p661 = pneg %p184
        %p662 = pneg %p181
        %p663 = pneg %p205
        %p664 = pneg %p202
        %p665 = pneg %p226
        %p666 = pneg %p223
        %p667 = pneg %p247
        %p668 = pneg %p244
        %p669 = pneg %p268
        %p670 = pneg %p265
        %p671 = pneg %p289
        %p672 = pneg %p286
        %p673 = pneg %p310
        %p674 = pneg %p307
        %p675 = pneg %p331
        %p676 = pneg %p328
        %p677 = pneg %p352
        %p678 = pneg %p349
        %p679 = pneg %p373
        %p680 = pneg %p370
        %p681 = pneg %p394
        %p682 = pneg %p391
        %p683 = pneg %p415
        %p684 = pneg %p412
        %p685 = pneg %p436
        %p686 = pneg %p433
        %p687 = pneg %p457
        %p688 = pneg %p454
        %p689 = pneg %p478
        %p690 = pneg %p475
        %p691 = pneg %p499
        %p692 = pneg %p496
        %p693 = pneg %p520
        %p694 = pneg %p517
        %p695 = pneg %p546
        %p696 = pneg %p543
        %s697 = sand.u32 %s533, 1
        %s698 = scalar_lea.sflag [#allocation3], %s697
        %s699 = sand.u32 %s533, 1
        %s700 = scalar_lea.vmem [#allocation2], %s699
        %p701 = scmp.lt.s32.totalorder %s37, 1
        %s702 = scalar_select %p701, %s37, 1
        %s703 = smul.addr %s702, 8
        %s704 = scalar_lea.vmem %s0, %s703
        %v706 = vld [vmem:[%s704] sm:$0xff]
        %v707 = vmul.f32 %v706, 5.656854
        %v708 = vld [vmem:[%s1] sm:$0xff]
        %v709 = vadd.f32 %v707, %v708
        %v710 = vld [vmem:[%s2] sm:$0xff]
        %v711 = vpack.c.bf16 %v709, %v709
        %v712 = vld [vmem:[%s3] sm:$0xf]
        %v713 = vld [vmem:[%s3 + $0x4] sm:$0xf]
        %v714 = vld [vmem:[%s3 + $0x8] sm:$0xf]
        %v715 = vld [vmem:[%s3 + $0xc] sm:$0xf]
        %v716 = vld [vmem:[%s4] sm:$0x1]
        %v718 = vlaneseq
        %v719 = vshrl.u32 %v718, 7
        %v720 = vsub.s32 0, %v719
        %v721 = vrot.slane %v716, %v720
        %v727 = vunpack.c.l.b16 %v712
        %v728 = vunpack.c.l.b16 %v713
        %v729 = vunpack.c.l.b16 %v714
        %v730 = vunpack.c.l.b16 %v715
        %v731 = vpack.c.b16 %v728, %v727
        %v732 = vpack.c.b16 %v730, %v729
        %vm735 = vcmask 261120
        %v737 = vsel %vm735, %v711, 0
        %739 = vmatprep.subr.bf16.mxu0 0
        %740 = vmatpush1.bf16.msra.mxu0 %v731
        %741 = vmatprep.subr.bf16.mxu0 0
        %742 = vmatpush1.bf16.msra.mxu0 %v732
        %743 = vmatprep.subr.bf16.mxu0 0
        %744 = vmatpush1.bf16.msra.mxu0 0
        %745 = vmatprep.subr.bf16.mxu0 0
        %746 = vmatpush1.bf16.msra.mxu0 0
        %747 = vmatprep.subr.bf16.mxu0 0
        %748 = vmatpush1.bf16.msra.mxu0 0
        %749 = vmatprep.subr.bf16.mxu0 0
        %750 = vmatpush1.bf16.msra.mxu0 0
        %751 = vmatprep.subr.bf16.mxu0 0
        %752 = vmatpush1.bf16.msra.mxu0 0
        %753 = vmatprep.subr.bf16.mxu0 0
        %754 = vmatpush1.bf16.msra.mxu0 0
        %755 = vmatprep.subr.bf16.mxu0 0
        %756 = vmatpush1.bf16.msra.mxu0 0
        %757 = vmatprep.subr.bf16.mxu0 0
        %758 = vmatpush1.bf16.msra.mxu0 0
        %759 = vmatprep.subr.bf16.mxu0 0
        %760 = vmatpush1.bf16.msra.mxu0 0
        %761 = vmatprep.subr.bf16.mxu0 0
        %762 = vmatpush1.bf16.msra.mxu0 0
        %763 = vmatprep.subr.bf16.mxu0 0
        %764 = vmatpush1.bf16.msra.mxu0 0
        %765 = vmatprep.subr.bf16.mxu0 0
        %766 = vmatpush1.bf16.msra.mxu0 0
        %767 = vmatprep.subr.bf16.mxu0 0
        %768 = vmatpush1.bf16.msra.mxu0 0
        %769 = vmatprep.subr.bf16.mxu0 0
        %770 = vmatpush1.bf16.msra.mxu0 0
        %771 = vmatprep.mubr.bf16.mxu0 0
        %772 = vmatmul.mubr.bf16.gmra.mrb[0].mxu0 %v737
        %v773 = vpop.f32.mrb[0].mxu0
        %v774 = vadd.f32 %v721, %v773
        %v775 = vpop.f32.mrb[0].mxu0
        %v776 = vpop.f32.mrb[0].mxu0
        %v777 = vpop.f32.mrb[0].mxu0
        %778 = vdwg.mxu0
        %v779 = vld [vmem:[%s5] sm:$0xf]
        %v780 = vld [vmem:[%s5 + $0x4] sm:$0xf]
        %v781 = vld [vmem:[%s5 + $0x8] sm:$0xf]
        %v782 = vld [vmem:[%s5 + $0xc] sm:$0xf]
        %v783 = vld [vmem:[%s6] sm:$0x1]
        %v785 = vlaneseq
        %v786 = vshrl.u32 %v785, 7
        %v787 = vsub.s32 0, %v786
        %v788 = vrot.slane %v783, %v787
        %v794 = vunpack.c.l.b16 %v779
        %v795 = vunpack.c.l.b16 %v780
        %v796 = vunpack.c.l.b16 %v781
        %v797 = vunpack.c.l.b16 %v782
        %v798 = vpack.c.b16 %v795, %v794
        %v799 = vpack.c.b16 %v797, %v796
        %802 = vmatprep.subr.bf16.mxu0 0
        %803 = vmatpush1.bf16.msra.mxu0 %v798
        %804 = vmatprep.subr.bf16.mxu0 0
        %805 = vmatpush1.bf16.msra.mxu0 %v799
        %806 = vmatprep.subr.bf16.mxu0 0
        %807 = vmatpush1.bf16.msra.mxu0 0
        %808 = vmatprep.subr.bf16.mxu0 0
        %809 = vmatpush1.bf16.msra.mxu0 0
        %810 = vmatprep.subr.bf16.mxu0 0
        %811 = vmatpush1.bf16.msra.mxu0 0
        %812 = vmatprep.subr.bf16.mxu0 0
        %813 = vmatpush1.bf16.msra.mxu0 0
        %814 = vmatprep.subr.bf16.mxu0 0
        %815 = vmatpush1.bf16.msra.mxu0 0
        %816 = vmatprep.subr.bf16.mxu0 0
        %817 = vmatpush1.bf16.msra.mxu0 0
        %818 = vmatprep.subr.bf16.mxu0 0
        %819 = vmatpush1.bf16.msra.mxu0 0
        %820 = vmatprep.subr.bf16.mxu0 0
        %821 = vmatpush1.bf16.msra.mxu0 0
        %822 = vmatprep.subr.bf16.mxu0 0
        %823 = vmatpush1.bf16.msra.mxu0 0
        %824 = vmatprep.subr.bf16.mxu0 0
        %825 = vmatpush1.bf16.msra.mxu0 0
        %826 = vmatprep.subr.bf16.mxu0 0
        %827 = vmatpush1.bf16.msra.mxu0 0
        %828 = vmatprep.subr.bf16.mxu0 0
        %829 = vmatpush1.bf16.msra.mxu0 0
        %830 = vmatprep.subr.bf16.mxu0 0
        %831 = vmatpush1.bf16.msra.mxu0 0
        %832 = vmatprep.subr.bf16.mxu0 0
        %833 = vmatpush1.bf16.msra.mxu0 0
        %834 = vmatprep.mubr.bf16.mxu0 0
        %835 = vmatmul.mubr.bf16.gmra.mrb[0].mxu0 %v737
        %v836 = vpop.f32.mrb[0].mxu0
        %v837 = vadd.f32 %v788, %v836
        %v838 = vpop.f32.mrb[0].mxu0
        %v839 = vpop.f32.mrb[0].mxu0
        %v840 = vpop.f32.mrb[0].mxu0
        %841 = vdwg.mxu0
        %v842 = vld [vmem:[%s7] sm:$0xf]
        %v843 = vld [vmem:[%s7 + $0x4] sm:$0xf]
        %v844 = vld [vmem:[%s7 + $0x8] sm:$0xf]
        %v845 = vld [vmem:[%s7 + $0xc] sm:$0xf]
        %v846 = vld [vmem:[%s8] sm:$0x1]
        %v848 = vlaneseq
        %v849 = vshrl.u32 %v848, 7
        %v850 = vsub.s32 0, %v849
        %v851 = vrot.slane %v846, %v850
        %v857 = vunpack.c.l.b16 %v842
        %v858 = vunpack.c.l.b16 %v843
        %v859 = vunpack.c.l.b16 %v844
        %v860 = vunpack.c.l.b16 %v845
        %v861 = vpack.c.b16 %v858, %v857
        %v862 = vpack.c.b16 %v860, %v859
        %865 = vmatprep.subr.bf16.mxu0 0
        %866 = vmatpush1.bf16.msra.mxu0 %v861
        %867 = vmatprep.subr.bf16.mxu0 0
        %868 = vmatpush1.bf16.msra.mxu0 %v862
        %869 = vmatprep.subr.bf16.mxu0 0
        %870 = vmatpush1.bf16.msra.mxu0 0
        %871 = vmatprep.subr.bf16.mxu0 0
        %872 = vmatpush1.bf16.msra.mxu0 0
        %873 = vmatprep.subr.bf16.mxu0 0
        %874 = vmatpush1.bf16.msra.mxu0 0
        %875 = vmatprep.subr.bf16.mxu0 0
        %876 = vmatpush1.bf16.msra.mxu0 0
        %877 = vmatprep.subr.bf16.mxu0 0
        %878 = vmatpush1.bf16.msra.mxu0 0
        %879 = vmatprep.subr.bf16.mxu0 0
        %880 = vmatpush1.bf16.msra.mxu0 0
        %881 = vmatprep.subr.bf16.mxu0 0
        %882 = vmatpush1.bf16.msra.mxu0 0
        %883 = vmatprep.subr.bf16.mxu0 0
        %884 = vmatpush1.bf16.msra.mxu0 0
        %885 = vmatprep.subr.bf16.mxu0 0
        %886 = vmatpush1.bf16.msra.mxu0 0
        %887 = vmatprep.subr.bf16.mxu0 0
        %888 = vmatpush1.bf16.msra.mxu0 0
        %889 = vmatprep.subr.bf16.mxu0 0
        %890 = vmatpush1.bf16.msra.mxu0 0
        %891 = vmatprep.subr.bf16.mxu0 0
        %892 = vmatpush1.bf16.msra.mxu0 0
        %893 = vmatprep.subr.bf16.mxu0 0
        %894 = vmatpush1.bf16.msra.mxu0 0
        %895 = vmatprep.subr.bf16.mxu0 0
        %896 = vmatpush1.bf16.msra.mxu0 0
        %897 = vmatprep.mubr.bf16.mxu0 0
        %898 = vmatmul.mubr.bf16.gmra.mrb[0].mxu0 %v737
        %v899 = vpop.f32.mrb[0].mxu0
        %v900 = vadd.f32 %v851, %v899
        %v901 = vpop.f32.mrb[0].mxu0
        %v902 = vpop.f32.mrb[0].mxu0
        %v903 = vpop.f32.mrb[0].mxu0
        %904 = vdwg.mxu0
        %v905 = vpack.c.bf16 %v774, %v774
        %v906 = vpack.c.bf16 %v837, %v837
        %vm907 = vcmask 130048
        %v909 = vsel %vm907, %v905, 0
        %v912 = vsel %vm907, %v906, 0
        %914 = vmatprep.subr.bf16.mxu0 0
        %915 = vmatpush1.bf16.xpose.msra.mxu0 %v912
        %916 = vmatprep.subr.bf16.mxu0 0
        %917 = vmatpush1.bf16.xpose.msra.mxu0 0
        %918 = vmatprep.subr.bf16.mxu0 0
        %919 = vmatpush1.bf16.xpose.msra.mxu0 0
        %920 = vmatprep.subr.bf16.mxu0 0
        %921 = vmatpush1.bf16.xpose.msra.mxu0 0
        %922 = vmatprep.subr.bf16.mxu0 0
        %923 = vmatpush1.bf16.xpose.msra.mxu0 0
        %924 = vmatprep.subr.bf16.mxu0 0
        %925 = vmatpush1.bf16.xpose.msra.mxu0 0
        %926 = vmatprep.subr.bf16.mxu0 0
        %927 = vmatpush1.bf16.xpose.msra.mxu0 0
        %928 = vmatprep.subr.bf16.mxu0 0
        %929 = vmatpush1.bf16.xpose.msra.mxu0 0
        %930 = vmatprep.subr.bf16.mxu0 0
        %931 = vmatpush1.bf16.xpose.msra.mxu0 0
        %932 = vmatprep.subr.bf16.mxu0 0
        %933 = vmatpush1.bf16.xpose.msra.mxu0 0
        %934 = vmatprep.subr.bf16.mxu0 0
        %935 = vmatpush1.bf16.xpose.msra.mxu0 0
        %936 = vmatprep.subr.bf16.mxu0 0
        %937 = vmatpush1.bf16.xpose.msra.mxu0 0
        %938 = vmatprep.subr.bf16.mxu0 0
        %939 = vmatpush1.bf16.xpose.msra.mxu0 0
        %940 = vmatprep.subr.bf16.mxu0 0
        %941 = vmatpush1.bf16.xpose.msra.mxu0 0
        %942 = vmatprep.subr.bf16.mxu0 0
        %943 = vmatpush1.bf16.xpose.msra.mxu0 0
        %944 = vmatprep.subr.bf16.mxu0 0
        %945 = vmatpush1.bf16.xpose.msra.mxu0 0
        %946 = vmatprep.mubr.bf16.mxu0 0
        %947 = vmatmul.mubr.bf16.gmra.mrb[0].mxu0 %v909
        %v948 = vpop.f32.mrb[0].mxu0
        %v949 = vadd.f32 0.0, %v948
        %v950 = vpop.f32.mrb[0].mxu0
        %v951 = vpop.f32.mrb[0].mxu0
        %v952 = vpop.f32.mrb[0].mxu0
        %953 = vdwg.mxu0
        %v954 = vmul.f32 %v949, 0.25
        %v955 = vadd.f32 %v954, %v710
        %vm956 = vcmask 64512
        %v957 = vsel %vm956, %v955, -inf
        %958 = vmax.xlane.f32.xlu0 %v957
        %v959 = vpop.xlane.xlu0 %958
        %v960 = vsub.f32 %v955, %v959
        %v961 = vmul.f32 %v960, 1.442695
        %v962 = vpow.pop %v961
        %v963 = vsel %vm956, %v962, 0.0
        %964 = vadd.xlane.f32.xlu0 %v963
        %v965 = vpop.xlane.xlu0 %964
        %v966 = vrcp.pop %v965
        %v967 = vmul.f32 %v962, %v966
        %v968 = vpack.c.bf16 %v967, %v967
        %v969 = vpack.c.bf16 %v900, %v900
        %v971 = vsel %vm956, %v968, 0
        %vm973 = vcmask 1043456
        %v975 = vsel %vm973, %v969, 0
        %977 = vmatprep.subr.bf16.mxu0 0
        %978 = vmatpush1.bf16.msra.mxu0 %v975
        %979 = vmatprep.subr.bf16.mxu0 0
        %980 = vmatpush1.bf16.msra.mxu0 0
        %981 = vmatprep.subr.bf16.mxu0 0
        %982 = vmatpush1.bf16.msra.mxu0 0
        %983 = vmatprep.subr.bf16.mxu0 0
        %984 = vmatpush1.bf16.msra.mxu0 0
        %985 = vmatprep.subr.bf16.mxu0 0
        %986 = vmatpush1.bf16.msra.mxu0 0
        %987 = vmatprep.subr.bf16.mxu0 0
        %988 = vmatpush1.bf16.msra.mxu0 0
        %989 = vmatprep.subr.bf16.mxu0 0
        %990 = vmatpush1.bf16.msra.mxu0 0
        %991 = vmatprep.subr.bf16.mxu0 0
        %992 = vmatpush1.bf16.msra.mxu0 0
        %993 = vmatprep.subr.bf16.mxu0 0
        %994 = vmatpush1.bf16.msra.mxu0 0
        %995 = vmatprep.subr.bf16.mxu0 0
        %996 = vmatpush1.bf16.msra.mxu0 0
        %997 = vmatprep.subr.bf16.mxu0 0
        %998 = vmatpush1.bf16.msra.mxu0 0
        %999 = vmatprep.subr.bf16.mxu0 0
        %1000 = vmatpush1.bf16.msra.mxu0 0
        %1001 = vmatprep.subr.bf16.mxu0 0
        %1002 = vmatpush1.bf16.msra.mxu0 0
        %1003 = vmatprep.subr.bf16.mxu0 0
        %1004 = vmatpush1.bf16.msra.mxu0 0
        %1005 = vmatprep.subr.bf16.mxu0 0
        %1006 = vmatpush1.bf16.msra.mxu0 0
        %1007 = vmatprep.subr.bf16.mxu0 0
        %1008 = vmatpush1.bf16.msra.mxu0 0
        %1009 = vmatprep.mubr.bf16.mxu0 0
        %1010 = vmatmul.mubr.bf16.gmra.mrb[0].mxu0 %v971
        %v1011 = vpop.f32.mrb[0].mxu0
        %v1012 = vadd.f32 0.0, %v1011
        %v1013 = vpop.f32.mrb[0].mxu0
        %v1014 = vpop.f32.mrb[0].mxu0
        %v1015 = vpop.f32.mrb[0].mxu0
        %1016 = vdwg.mxu0
        %v1017 = vpack.c.bf16 %v1012, %v1012
        %v1018 = vld [vmem:[%s9] sm:$0xf]
        %v1019 = vld [vmem:[%s9 + $0x4] sm:$0xf]
        %s1020 = scalar_lea.vmem %s3, 16
        %v1021 = vld [vmem:[%s1020] sm:$0xf]
        %v1022 = vld [vmem:[%s1020 + $0x4] sm:$0xf]
        %v1023 = vld [vmem:[%s1020 + $0x8] sm:$0xf]
        %v1024 = vld [vmem:[%s1020 + $0xc] sm:$0xf]
        %s1025 = scalar_lea.vmem %s4, 1
        %v1026 = vld [vmem:[%s1025] sm:$0x1]
        %v1028 = vlaneseq
        %v1029 = vshrl.u32 %v1028, 7
        %v1030 = vsub.s32 0, %v1029
        %v1031 = vrot.slane %v1026, %v1030
        %v1037 = vunpack.c.l.b16 %v1021
        %v1038 = vunpack.c.l.b16 %v1022
        %v1039 = vunpack.c.l.b16 %v1023
        %v1040 = vunpack.c.l.b16 %v1024
        %v1041 = vpack.c.b16 %v1038, %v1037
        %v1042 = vpack.c.b16 %v1040, %v1039
        %1045 = vmatprep.subr.bf16.mxu0 0
        %1046 = vmatpush1.bf16.msra.mxu0 %v1041
        %1047 = vmatprep.subr.bf16.mxu0 0
        %1048 = vmatpush1.bf16.msra.mxu0 %v1042
        %1049 = vmatprep.subr.bf16.mxu0 0
        %1050 = vmatpush1.bf16.msra.mxu0 0
        %1051 = vmatprep.subr.bf16.mxu0 0
        %1052 = vmatpush1.bf16.msra.mxu0 0
        %1053 = vmatprep.subr.bf16.mxu0 0
        %1054 = vmatpush1.bf16.msra.mxu0 0
        %1055 = vmatprep.subr.bf16.mxu0 0
        %1056 = vmatpush1.bf16.msra.mxu0 0
        %1057 = vmatprep.subr.bf16.mxu0 0
        %1058 = vmatpush1.bf16.msra.mxu0 0
        %1059 = vmatprep.subr.bf16.mxu0 0
        %1060 = vmatpush1.bf16.msra.mxu0 0
        %1061 = vmatprep.subr.bf16.mxu0 0
        %1062 = vmatpush1.bf16.msra.mxu0 0
        %1063 = vmatprep.subr.bf16.mxu0 0
        %1064 = vmatpush1.bf16.msra.mxu0 0
        %1065 = vmatprep.subr.bf16.mxu0 0
        %1066 = vmatpush1.bf16.msra.mxu0 0
        %1067 = vmatprep.subr.bf16.mxu0 0
        %1068 = vmatpush1.bf16.msra.mxu0 0
        %1069 = vmatprep.subr.bf16.mxu0 0
        %1070 = vmatpush1.bf16.msra.mxu0 0
        %1071 = vmatprep.subr.bf16.mxu0 0
        %1072 = vmatpush1.bf16.msra.mxu0 0
        %1073 = vmatprep.subr.bf16.mxu0 0
        %1074 = vmatpush1.bf16.msra.mxu0 0
        %1075 = vmatprep.subr.bf16.mxu0 0
        %1076 = vmatpush1.bf16.msra.mxu0 0
        %1077 = vmatprep.mubr.bf16.mxu0 0
        %1078 = vmatmul.mubr.bf16.gmra.mrb[0].mxu0 %v737
        %v1079 = vpop.f32.mrb[0].mxu0
        %v1080 = vadd.f32 %v1031, %v1079
        %v1081 = vpop.f32.mrb[0].mxu0
        %v1082 = vpop.f32.mrb[0].mxu0
        %v1083 = vpop.f32.mrb[0].mxu0
        %1084 = vdwg.mxu0
        %s1085 = scalar_lea.vmem %s5, 16
        %v1086 = vld [vmem:[%s1085] sm:$0xf]
        %v1087 = vld [vmem:[%s1085 + $0x4] sm:$0xf]
        %v1088 = vld [vmem:[%s1085 + $0x8] sm:$0xf]
        %v1089 = vld [vmem:[%s1085 + $0xc] sm:$0xf]
        %s1090 = scalar_lea.vmem %s6, 1
        %v1091 = vld [vmem:[%s1090] sm:$0x1]
        %v1093 = vlaneseq
        %v1094 = vshrl.u32 %v1093, 7
        %v1095 = vsub.s32 0, %v1094
        %v1096 = vrot.slane %v1091, %v1095
        %v1102 = vunpack.c.l.b16 %v1086
        %v1103 = vunpack.c.l.b16 %v1087
        %v1104 = vunpack.c.l.b16 %v1088
        %v1105 = vunpack.c.l.b16 %v1089
        %v1106 = vpack.c.b16 %v1103, %v1102
        %v1107 = vpack.c.b16 %v1105, %v1104
        %1110 = vmatprep.subr.bf16.mxu0 0
        %1111 = vmatpush1.bf16.msra.mxu0 %v1106
        %1112 = vmatprep.subr.bf16.mxu0 0
        %1113 = vmatpush1.bf16.msra.mxu0 %v1107
        %1114 = vmatprep.subr.bf16.mxu0 0
        %1115 = vmatpush1.bf16.msra.mxu0 0
        %1116 = vmatprep.subr.bf16.mxu0 0
        %1117 = vmatpush1.bf16.msra.mxu0 0
        %1118 = vmatprep.subr.bf16.mxu0 0
        %1119 = vmatpush1.bf16.msra.mxu0 0
        %1120 = vmatprep.subr.bf16.mxu0 0
        %1121 = vmatpush1.bf16.msra.mxu0 0
        %1122 = vmatprep.subr.bf16.mxu0 0
        %1123 = vmatpush1.bf16.msra.mxu0 0
        %1124 = vmatprep.subr.bf16.mxu0 0
        %1125 = vmatpush1.bf16.msra.mxu0 0
        %1126 = vmatprep.subr.bf16.mxu0 0
        %1127 = vmatpush1.bf16.msra.mxu0 0
        %1128 = vmatprep.subr.bf16.mxu0 0
        %1129 = vmatpush1.bf16.msra.mxu0 0
        %1130 = vmatprep.subr.bf16.mxu0 0
        %1131 = vmatpush1.bf16.msra.mxu0 0
        %1132 = vmatprep.subr.bf16.mxu0 0
        %1133 = vmatpush1.bf16.msra.mxu0 0
        %1134 = vmatprep.subr.bf16.mxu0 0
        %1135 = vmatpush1.bf16.msra.mxu0 0
        %1136 = vmatprep.subr.bf16.mxu0 0
        %1137 = vmatpush1.bf16.msra.mxu0 0
        %1138 = vmatprep.subr.bf16.mxu0 0
        %1139 = vmatpush1.bf16.msra.mxu0 0
        %1140 = vmatprep.subr.bf16.mxu0 0
        %1141 = vmatpush1.bf16.msra.mxu0 0
        %1142 = vmatprep.mubr.bf16.mxu0 0
        %1143 = vmatmul.mubr.bf16.gmra.mrb[0].mxu0 %v737
        %v1144 = vpop.f32.mrb[0].mxu0
        %v1145 = vadd.f32 %v1096, %v1144
        %v1146 = vpop.f32.mrb[0].mxu0
        %v1147 = vpop.f32.mrb[0].mxu0
        %v1148 = vpop.f32.mrb[0].mxu0
        %1149 = vdwg.mxu0
        %s1150 = scalar_lea.vmem %s7, 16
        %v1151 = vld [vmem:[%s1150] sm:$0xf]
        %v1152 = vld [vmem:[%s1150 + $0x4] sm:$0xf]
        %v1153 = vld [vmem:[%s1150 + $0x8] sm:$0xf]
        %v1154 = vld [vmem:[%s1150 + $0xc] sm:$0xf]
        %s1155 = scalar_lea.vmem %s8, 1
        %v1156 = vld [vmem:[%s1155] sm:$0x1]
        %v1158 = vlaneseq
        %v1159 = vshrl.u32 %v1158, 7
        %v1160 = vsub.s32 0, %v1159
        %v1161 = vrot.slane %v1156, %v1160
        %v1167 = vunpack.c.l.b16 %v1151
        %v1168 = vunpack.c.l.b16 %v1152
        %v1169 = vunpack.c.l.b16 %v1153
        %v1170 = vunpack.c.l.b16 %v1154
        %v1171 = vpack.c.b16 %v1168, %v1167
        %v1172 = vpack.c.b16 %v1170, %v1169
        %1175 = vmatprep.subr.bf16.mxu0 0
        %1176 = vmatpush1.bf16.msra.mxu0 %v1171
        %1177 = vmatprep.subr.bf16.mxu0 0
        %1178 = vmatpush1.bf16.msra.mxu0 %v1172
        %1179 = vmatprep.subr.bf16.mxu0 0
        %1180 = vmatpush1.bf16.msra.mxu0 0
        %1181 = vmatprep.subr.bf16.mxu0 0
        %1182 = vmatpush1.bf16.msra.mxu0 0
        %1183 = vmatprep.subr.bf16.mxu0 0
        %1184 = vmatpush1.bf16.msra.mxu0 0
        %1185 = vmatprep.subr.bf16.mxu0 0
        %1186 = vmatpush1.bf16.msra.mxu0 0
        %1187 = vmatprep.subr.bf16.mxu0 0
        %1188 = vmatpush1.bf16.msra.mxu0 0
        %1189 = vmatprep.subr.bf16.mxu0 0
        %1190 = vmatpush1.bf16.msra.mxu0 0
        %1191 = vmatprep.subr.bf16.mxu0 0
        %1192 = vmatpush1.bf16.msra.mxu0 0
        %1193 = vmatprep.subr.bf16.mxu0 0
        %1194 = vmatpush1.bf16.msra.mxu0 0
        %1195 = vmatprep.subr.bf16.mxu0 0
        %1196 = vmatpush1.bf16.msra.mxu0 0
        %1197 = vmatprep.subr.bf16.mxu0 0
        %1198 = vmatpush1.bf16.msra.mxu0 0
        %1199 = vmatprep.subr.bf16.mxu0 0
        %1200 = vmatpush1.bf16.msra.mxu0 0
        %1201 = vmatprep.subr.bf16.mxu0 0
        %1202 = vmatpush1.bf16.msra.mxu0 0
        %1203 = vmatprep.subr.bf16.mxu0 0
        %1204 = vmatpush1.bf16.msra.mxu0 0
        %1205 = vmatprep.subr.bf16.mxu0 0
        %1206 = vmatpush1.bf16.msra.mxu0 0
        %1207 = vmatprep.mubr.bf16.mxu0 0
        %1208 = vmatmul.mubr.bf16.gmra.mrb[0].mxu0 %v737
        %v1209 = vpop.f32.mrb[0].mxu0
        %v1210 = vadd.f32 %v1161, %v1209
        %v1211 = vpop.f32.mrb[0].mxu0
        %v1212 = vpop.f32.mrb[0].mxu0
        %v1213 = vpop.f32.mrb[0].mxu0
        %1214 = vdwg.mxu0
        %v1215 = vpack.c.bf16 %v1080, %v1080
        %v1216 = vpack.c.bf16 %v1145, %v1145
        %v1218 = vsel %vm907, %v1215, 0
        %v1221 = vsel %vm907, %v1216, 0
        %1223 = vmatprep.subr.bf16.mxu0 0
        %1224 = vmatpush1.bf16.xpose.msra.mxu0 %v1221
        %1225 = vmatprep.subr.bf16.mxu0 0
        %1226 = vmatpush1.bf16.xpose.msra.mxu0 0
        %1227 = vmatprep.subr.bf16.mxu0 0
        %1228 = vmatpush1.bf16.xpose.msra.mxu0 0
        %1229 = vmatprep.subr.bf16.mxu0 0
        %1230 = vmatpush1.bf16.xpose.msra.mxu0 0
        %1231 = vmatprep.subr.bf16.mxu0 0
        %1232 = vmatpush1.bf16.xpose.msra.mxu0 0
        %1233 = vmatprep.subr.bf16.mxu0 0
        %1234 = vmatpush1.bf16.xpose.msra.mxu0 0
        %1235 = vmatprep.subr.bf16.mxu0 0
        %1236 = vmatpush1.bf16.xpose.msra.mxu0 0
        %1237 = vmatprep.subr.bf16.mxu0 0
        %1238 = vmatpush1.bf16.xpose.msra.mxu0 0
        %1239 = vmatprep.subr.bf16.mxu0 0
        %1240 = vmatpush1.bf16.xpose.msra.mxu0 0
        %1241 = vmatprep.subr.bf16.mxu0 0
        %1242 = vmatpush1.bf16.xpose.msra.mxu0 0
        %1243 = vmatprep.subr.bf16.mxu0 0
        %1244 = vmatpush1.bf16.xpose.msra.mxu0 0
        %1245 = vmatprep.subr.bf16.mxu0 0
        %1246 = vmatpush1.bf16.xpose.msra.mxu0 0
        %1247 = vmatprep.subr.bf16.mxu0 0
        %1248 = vmatpush1.bf16.xpose.msra.mxu0 0
        %1249 = vmatprep.subr.bf16.mxu0 0
        %1250 = vmatpush1.bf16.xpose.msra.mxu0 0
        %1251 = vmatprep.subr.bf16.mxu0 0
        %1252 = vmatpush1.bf16.xpose.msra.mxu0 0
        %1253 = vmatprep.subr.bf16.mxu0 0
        %1254 = vmatpush1.bf16.xpose.msra.mxu0 0
        %1255 = vmatprep.mubr.bf16.mxu0 0
        %1256 = vmatmul.mubr.bf16.gmra.mrb[0].mxu0 %v1218
        %v1257 = vpop.f32.mrb[0].mxu0
        %v1258 = vadd.f32 0.0, %v1257
        %v1259 = vpop.f32.mrb[0].mxu0
        %v1260 = vpop.f32.mrb[0].mxu0
        %v1261 = vpop.f32.mrb[0].mxu0
        %1262 = vdwg.mxu0
        %v1263 = vmul.f32 %v1258, 0.25
        %v1264 = vadd.f32 %v1263, %v710
        %v1265 = vsel %vm956, %v1264, -inf
        %1266 = vmax.xlane.f32.xlu0 %v1265
        %v1267 = vpop.xlane.xlu0 %1266
        %v1268 = vsub.f32 %v1264, %v1267
        %v1269 = vmul.f32 %v1268, 1.442695
        %v1270 = vpow.pop %v1269
        %v1271 = vsel %vm956, %v1270, 0.0
        %1272 = vadd.xlane.f32.xlu0 %v1271
        %v1273 = vpop.xlane.xlu0 %1272
        %v1274 = vrcp.pop %v1273
        %v1275 = vmul.f32 %v1270, %v1274
        %v1276 = vpack.c.bf16 %v1275, %v1275
        %v1277 = vpack.c.bf16 %v1210, %v1210
        %v1279 = vsel %vm956, %v1276, 0
        %v1282 = vsel %vm973, %v1277, 0
        %1284 = vmatprep.subr.bf16.mxu0 0
        %1285 = vmatpush1.bf16.msra.mxu0 %v1282
        %1286 = vmatprep.subr.bf16.mxu0 0
        %1287 = vmatpush1.bf16.msra.mxu0 0
        %1288 = vmatprep.subr.bf16.mxu0 0
        %1289 = vmatpush1.bf16.msra.mxu0 0
        %1290 = vmatprep.subr.bf16.mxu0 0
        %1291 = vmatpush1.bf16.msra.mxu0 0
        %1292 = vmatprep.subr.bf16.mxu0 0
        %1293 = vmatpush1.bf16.msra.mxu0 0
        %1294 = vmatprep.subr.bf16.mxu0 0
        %1295 = vmatpush1.bf16.msra.mxu0 0
        %1296 = vmatprep.subr.bf16.mxu0 0
        %1297 = vmatpush1.bf16.msra.mxu0 0
        %1298 = vmatprep.subr.bf16.mxu0 0
        %1299 = vmatpush1.bf16.msra.mxu0 0
        %1300 = vmatprep.subr.bf16.mxu0 0
        %1301 = vmatpush1.bf16.msra.mxu0 0
        %1302 = vmatprep.subr.bf16.mxu0 0
        %1303 = vmatpush1.bf16.msra.mxu0 0
        %1304 = vmatprep.subr.bf16.mxu0 0
        %1305 = vmatpush1.bf16.msra.mxu0 0
        %1306 = vmatprep.subr.bf16.mxu0 0
        %1307 = vmatpush1.bf16.msra.mxu0 0
        %1308 = vmatprep.subr.bf16.mxu0 0
        %1309 = vmatpush1.bf16.msra.mxu0 0
        %1310 = vmatprep.subr.bf16.mxu0 0
        %1311 = vmatpush1.bf16.msra.mxu0 0
        %1312 = vmatprep.subr.bf16.mxu0 0
        %1313 = vmatpush1.bf16.msra.mxu0 0
        %1314 = vmatprep.subr.bf16.mxu0 0
        %1315 = vmatpush1.bf16.msra.mxu0 0
        %1316 = vmatprep.mubr.bf16.mxu0 0
        %1317 = vmatmul.mubr.bf16.gmra.mrb[0].mxu0 %v1279
        %v1318 = vpop.f32.mrb[0].mxu0
        %v1319 = vadd.f32 0.0, %v1318
        %v1320 = vpop.f32.mrb[0].mxu0
        %v1321 = vpop.f32.mrb[0].mxu0
        %v1322 = vpop.f32.mrb[0].mxu0
        %1323 = vdwg.mxu0
        %v1324 = vpack.c.bf16 %v1319, %v1319
        %s1325 = scalar_lea.vmem %s9, 8
        %v1326 = vld [vmem:[%s1325] sm:$0xf]
        %v1327 = vld [vmem:[%s1325 + $0x4] sm:$0xf]
        %v1330 = vunpack.c.l.b16 %v1326
        %v1331 = vunpack.c.l.b16 %v1327
        %v1332 = vpack.c.b16 %v1331, %v1330
        %v1335 = vsel %vm907, %v1324, 0
        %1337 = vmatprep.subr.bf16.mxu0 0
        %1338 = vmatpush1.bf16.msra.mxu0 %v1332
        %1339 = vmatprep.subr.bf16.mxu0 0
        %1340 = vmatpush1.bf16.msra.mxu0 0
        %1341 = vmatprep.subr.bf16.mxu0 0
        %1342 = vmatpush1.bf16.msra.mxu0 0
        %1343 = vmatprep.subr.bf16.mxu0 0
        %1344 = vmatpush1.bf16.msra.mxu0 0
        %1345 = vmatprep.subr.bf16.mxu0 0
        %1346 = vmatpush1.bf16.msra.mxu0 0
        %1347 = vmatprep.subr.bf16.mxu0 0
        %1348 = vmatpush1.bf16.msra.mxu0 0
        %1349 = vmatprep.subr.bf16.mxu0 0
        %1350 = vmatpush1.bf16.msra.mxu0 0
        %1351 = vmatprep.subr.bf16.mxu0 0
        %1352 = vmatpush1.bf16.msra.mxu0 0
        %1353 = vmatprep.subr.bf16.mxu0 0
        %1354 = vmatpush1.bf16.msra.mxu0 0
        %1355 = vmatprep.subr.bf16.mxu0 0
        %1356 = vmatpush1.bf16.msra.mxu0 0
        %1357 = vmatprep.subr.bf16.mxu0 0
        %1358 = vmatpush1.bf16.msra.mxu0 0
        %1359 = vmatprep.subr.bf16.mxu0 0
        %1360 = vmatpush1.bf16.msra.mxu0 0
        %1361 = vmatprep.subr.bf16.mxu0 0
        %1362 = vmatpush1.bf16.msra.mxu0 0
        %1363 = vmatprep.subr.bf16.mxu0 0
        %1364 = vmatpush1.bf16.msra.mxu0 0
        %1365 = vmatprep.subr.bf16.mxu0 0
        %1366 = vmatpush1.bf16.msra.mxu0 0
        %1367 = vmatprep.subr.bf16.mxu0 0
        %1368 = vmatpush1.bf16.msra.mxu0 0
        %1369 = vmatprep.mubr.bf16.mxu0 0
        %1370 = vmatmul.mubr.bf16.gmra.mrb[0].mxu0 %v1335
        %v1371 = vpop.f32.mrb[0].mxu0
        %v1372 = vadd.f32 0.0, %v1371
        %v1373 = vpop.f32.mrb[0].mxu0
        %v1374 = vpop.f32.mrb[0].mxu0
        %v1375 = vpop.f32.mrb[0].mxu0
        %1376 = vdwg.mxu0
        %v1379 = vunpack.c.l.b16 %v1018
        %v1380 = vunpack.c.l.b16 %v1019
        %v1381 = vpack.c.b16 %v1380, %v1379
        %v1384 = vsel %vm907, %v1017, 0
        %1386 = vmatprep.subr.bf16.mxu0 0
        %1387 = vmatpush1.bf16.msra.mxu0 %v1381
        %1388 = vmatprep.subr.bf16.mxu0 0
        %1389 = vmatpush1.bf16.msra.mxu0 0
        %1390 = vmatprep.subr.bf16.mxu0 0
        %1391 = vmatpush1.bf16.msra.mxu0 0
        %1392 = vmatprep.subr.bf16.mxu0 0
        %1393 = vmatpush1.bf16.msra.mxu0 0
        %1394 = vmatprep.subr.bf16.mxu0 0
        %1395 = vmatpush1.bf16.msra.mxu0 0
        %1396 = vmatprep.subr.bf16.mxu0 0
        %1397 = vmatpush1.bf16.msra.mxu0 0
        %1398 = vmatprep.subr.bf16.mxu0 0
        %1399 = vmatpush1.bf16.msra.mxu0 0
        %1400 = vmatprep.subr.bf16.mxu0 0
        %1401 = vmatpush1.bf16.msra.mxu0 0
        %1402 = vmatprep.subr.bf16.mxu0 0
        %1403 = vmatpush1.bf16.msra.mxu0 0
        %1404 = vmatprep.subr.bf16.mxu0 0
        %1405 = vmatpush1.bf16.msra.mxu0 0
        %1406 = vmatprep.subr.bf16.mxu0 0
        %1407 = vmatpush1.bf16.msra.mxu0 0
        %1408 = vmatprep.subr.bf16.mxu0 0
        %1409 = vmatpush1.bf16.msra.mxu0 0
        %1410 = vmatprep.subr.bf16.mxu0 0
        %1411 = vmatpush1.bf16.msra.mxu0 0
        %1412 = vmatprep.subr.bf16.mxu0 0
        %1413 = vmatpush1.bf16.msra.mxu0 0
        %1414 = vmatprep.subr.bf16.mxu0 0
        %1415 = vmatpush1.bf16.msra.mxu0 0
        %1416 = vmatprep.subr.bf16.mxu0 0
        %1417 = vmatpush1.bf16.msra.mxu0 0
        %1418 = vmatprep.mubr.bf16.mxu0 0
        %1419 = vmatmul.mubr.bf16.gmra.mrb[0].mxu0 %v1384
        %v1420 = vpop.f32.mrb[0].mxu0
        %v1421 = vadd.f32 %v1372, %v1420
        %v1422 = vpop.f32.mrb[0].mxu0
        %v1423 = vpop.f32.mrb[0].mxu0
        %v1424 = vpop.f32.mrb[0].mxu0
        %1425 = vdwg.mxu0
        %v1426 = vld [vmem:[%s10] sm:$0x1]
        %v1428 = vlaneseq
        %v1429 = vshrl.u32 %v1428, 7
        %v1430 = vsub.s32 0, %v1429
        %v1431 = vrot.slane %v1426, %v1430
        %v1433 = vadd.f32 %v1421, %v1431
        %v1434 = vadd.f32 %v709, %v1433
        %v1435 = vld [vmem:[%s11] sm:$0x1]
        %v1436 = vld [vmem:[%s12] sm:$0x1]
        %v1437 = vsel %vm735, %v1434, 0.0
        %1438 = vadd.xlane.f32.xlu0 %v1437
        %v1439 = vpop.xlane.xlu0 %1438
        %v1440 = vrcp.pop 32.0
        %v1441 = vmul.f32 %v1439, %v1440
        %v1442 = vsub.f32 %v1434, %v1441
        %v1443 = vmul.f32 %v1442, %v1442
        %v1444 = vsel %vm735, %v1443, 0.0
        %1445 = vadd.xlane.f32.xlu0 %v1444
        %v1446 = vpop.xlane.xlu0 %1445
        %v1447 = vmul.f32 %v1446, %v1440
        %v1448 = vadd.f32 %v1447, 1e-05
        %v1449 = vrsqrt.pop %v1448
        %v1450 = vmul.f32 %v1442, %v1449
        %v1452 = vlaneseq
        %v1453 = vshrl.u32 %v1452, 7
        %v1454 = vsub.s32 0, %v1453
        %v1455 = vrot.slane %v1435, %v1454
        %v1457 = vmul.f32 %v1450, %v1455
        %v1459 = vlaneseq
        %v1460 = vshrl.u32 %v1459, 7
        %v1461 = vsub.s32 0, %v1460
        %v1462 = vrot.slane %v1436, %v1461
        %v1464 = vadd.f32 %v1457, %v1462
        %v1465 = vpack.c.bf16 %v1464, %v1464
        %v1466 = vld [vmem:[%s13] sm:$0xf]
        %v1467 = vld [vmem:[%s13 + $0x4] sm:$0xf]
        %v1468 = vld [vmem:[%s13 + $0x8] sm:$0xf]
        %v1469 = vld [vmem:[%s13 + $0xc] sm:$0xf]
        %v1470 = vld [vmem:[%s14] sm:$0x1]
        %v1472 = vlaneseq
        %v1473 = vshrl.u32 %v1472, 7
        %v1474 = vsub.s32 0, %v1473
        %v1475 = vrot.slane %v1470, %v1474
        %v1481 = vunpack.c.l.b16 %v1466
        %v1482 = vunpack.c.l.b16 %v1467
        %v1483 = vunpack.c.l.b16 %v1468
        %v1484 = vunpack.c.l.b16 %v1469
        %v1485 = vpack.c.b16 %v1482, %v1481
        %v1486 = vpack.c.b16 %v1484, %v1483
        %v1490 = vsel %vm735, %v1465, 0
        %1492 = vmatprep.subr.bf16.mxu0 0
        %1493 = vmatpush1.bf16.msra.mxu0 %v1485
        %1494 = vmatprep.subr.bf16.mxu0 0
        %1495 = vmatpush1.bf16.msra.mxu0 %v1486
        %1496 = vmatprep.subr.bf16.mxu0 0
        %1497 = vmatpush1.bf16.msra.mxu0 0
        %1498 = vmatprep.subr.bf16.mxu0 0
        %1499 = vmatpush1.bf16.msra.mxu0 0
        %1500 = vmatprep.subr.bf16.mxu0 0
        %1501 = vmatpush1.bf16.msra.mxu0 0
        %1502 = vmatprep.subr.bf16.mxu0 0
        %1503 = vmatpush1.bf16.msra.mxu0 0
        %1504 = vmatprep.subr.bf16.mxu0 0
        %1505 = vmatpush1.bf16.msra.mxu0 0
        %1506 = vmatprep.subr.bf16.mxu0 0
        %1507 = vmatpush1.bf16.msra.mxu0 0
        %1508 = vmatprep.subr.bf16.mxu0 0
        %1509 = vmatpush1.bf16.msra.mxu0 0
        %1510 = vmatprep.subr.bf16.mxu0 0
        %1511 = vmatpush1.bf16.msra.mxu0 0
        %1512 = vmatprep.subr.bf16.mxu0 0
        %1513 = vmatpush1.bf16.msra.mxu0 0
        %1514 = vmatprep.subr.bf16.mxu0 0
        %1515 = vmatpush1.bf16.msra.mxu0 0
        %1516 = vmatprep.subr.bf16.mxu0 0
        %1517 = vmatpush1.bf16.msra.mxu0 0
        %1518 = vmatprep.subr.bf16.mxu0 0
        %1519 = vmatpush1.bf16.msra.mxu0 0
        %1520 = vmatprep.subr.bf16.mxu0 0
        %1521 = vmatpush1.bf16.msra.mxu0 0
        %1522 = vmatprep.subr.bf16.mxu0 0
        %1523 = vmatpush1.bf16.msra.mxu0 0
        %1524 = vmatprep.mubr.bf16.mxu0 0
        %1525 = vmatmul.mubr.bf16.gmra.mrb[0].mxu0 %v1490
        %v1526 = vpop.f32.mrb[0].mxu0
        %v1527 = vadd.f32 %v1475, %v1526
        %v1528 = vpop.f32.mrb[0].mxu0
        %v1529 = vpop.f32.mrb[0].mxu0
        %v1530 = vpop.f32.mrb[0].mxu0
        %1531 = vdwg.mxu0
        %v1532 = vmax.f32 %v1527, 0.0
        %v1533 = vpack.c.bf16 %v1532, %v1532
        %v1534 = vld [vmem:[%s15] sm:$0xf]
        %v1535 = vld [vmem:[%s15 + $0x4] sm:$0xf]
        %v1536 = vld [vmem:[%s15 + $0x8] sm:$0xf]
        %v1537 = vld [vmem:[%s15 + $0xc] sm:$0xf]
        %v1538 = vld [vmem:[%s15 + $0x10] sm:$0xf]
        %v1539 = vld [vmem:[%s15 + $0x14] sm:$0xf]
        %v1540 = vld [vmem:[%s15 + $0x18] sm:$0xf]
        %v1541 = vld [vmem:[%s15 + $0x1c] sm:$0xf]
        %v1542 = vld [vmem:[%s16] sm:$0x1]
        %v1544 = vlaneseq
        %v1545 = vshrl.u32 %v1544, 7
        %v1546 = vsub.s32 0, %v1545
        %v1547 = vrot.slane %v1542, %v1546
        %v1557 = vunpack.c.l.b16 %v1534
        %v1558 = vunpack.c.l.b16 %v1535
        %v1559 = vunpack.c.l.b16 %v1536
        %v1560 = vunpack.c.l.b16 %v1537
        %v1561 = vunpack.c.l.b16 %v1538
        %v1562 = vunpack.c.l.b16 %v1539
        %v1563 = vunpack.c.l.b16 %v1540
        %v1564 = vunpack.c.l.b16 %v1541
        %v1565 = vpack.c.b16 %v1558, %v1557
        %v1566 = vpack.c.b16 %v1560, %v1559
        %v1567 = vpack.c.b16 %v1562, %v1561
        %v1568 = vpack.c.b16 %v1564, %v1563
        %vm1573 = vcmask 523264
        %v1575 = vsel %vm1573, %v1533, 0
        %1577 = vmatprep.subr.bf16.mxu0 0
        %1578 = vmatpush1.bf16.msra.mxu0 %v1565
        %1579 = vmatprep.subr.bf16.mxu0 0
        %1580 = vmatpush1.bf16.msra.mxu0 %v1566
        %1581 = vmatprep.subr.bf16.mxu0 0
        %1582 = vmatpush1.bf16.msra.mxu0 %v1567
        %1583 = vmatprep.subr.bf16.mxu0 0
        %1584 = vmatpush1.bf16.msra.mxu0 %v1568
        %1585 = vmatprep.subr.bf16.mxu0 0
        %1586 = vmatpush1.bf16.msra.mxu0 0
        %1587 = vmatprep.subr.bf16.mxu0 0
        %1588 = vmatpush1.bf16.msra.mxu0 0
        %1589 = vmatprep.subr.bf16.mxu0 0
        %1590 = vmatpush1.bf16.msra.mxu0 0
        %1591 = vmatprep.subr.bf16.mxu0 0
        %1592 = vmatpush1.bf16.msra.mxu0 0
        %1593 = vmatprep.subr.bf16.mxu0 0
        %1594 = vmatpush1.bf16.msra.mxu0 0
        %1595 = vmatprep.subr.bf16.mxu0 0
        %1596 = vmatpush1.bf16.msra.mxu0 0
        %1597 = vmatprep.subr.bf16.mxu0 0
        %1598 = vmatpush1.bf16.msra.mxu0 0
        %1599 = vmatprep.subr.bf16.mxu0 0
        %1600 = vmatpush1.bf16.msra.mxu0 0
        %1601 = vmatprep.subr.bf16.mxu0 0
        %1602 = vmatpush1.bf16.msra.mxu0 0
        %1603 = vmatprep.subr.bf16.mxu0 0
        %1604 = vmatpush1.bf16.msra.mxu0 0
        %1605 = vmatprep.subr.bf16.mxu0 0
        %1606 = vmatpush1.bf16.msra.mxu0 0
        %1607 = vmatprep.subr.bf16.mxu0 0
        %1608 = vmatpush1.bf16.msra.mxu0 0
        %1609 = vmatprep.mubr.bf16.mxu0 0
        %1610 = vmatmul.mubr.bf16.gmra.mrb[0].mxu0 %v1575
        %v1611 = vpop.f32.mrb[0].mxu0
        %v1612 = vadd.f32 %v1547, %v1611
        %v1613 = vpop.f32.mrb[0].mxu0
        %v1614 = vpop.f32.mrb[0].mxu0
        %v1615 = vpop.f32.mrb[0].mxu0
        %1616 = vdwg.mxu0
        %v1617 = vadd.f32 %v1464, %v1612
        %v1618 = vld [vmem:[%s17] sm:$0x1]
        %v1619 = vld [vmem:[%s18] sm:$0x1]
        %v1620 = vsel %vm735, %v1617, 0.0
        %1621 = vadd.xlane.f32.xlu0 %v1620
        %v1622 = vpop.xlane.xlu0 %1621
        %v1623 = vmul.f32 %v1622, %v1440
        %v1624 = vsub.f32 %v1617, %v1623
        %v1625 = vmul.f32 %v1624, %v1624
        %v1626 = vsel %vm735, %v1625, 0.0
        %1627 = vadd.xlane.f32.xlu0 %v1626
        %v1628 = vpop.xlane.xlu0 %1627
        %v1629 = vmul.f32 %v1628, %v1440
        %v1630 = vadd.f32 %v1629, 1e-05
        %v1631 = vrsqrt.pop %v1630
        %v1632 = vmul.f32 %v1624, %v1631
        %v1634 = vlaneseq
        %v1635 = vshrl.u32 %v1634, 7
        %v1636 = vsub.s32 0, %v1635
        %v1637 = vrot.slane %v1618, %v1636
        %v1639 = vmul.f32 %v1632, %v1637
        %v1641 = vlaneseq
        %v1642 = vshrl.u32 %v1641, 7
        %v1643 = vsub.s32 0, %v1642
        %v1644 = vrot.slane %v1619, %v1643
        %v1646 = vadd.f32 %v1639, %v1644
        %v1647 = vpack.c.bf16 %v1646, %v1646
        %s1648 = scalar_lea.vmem %s3, 32
        %v1649 = vld [vmem:[%s1648] sm:$0xf]
        %v1650 = vld [vmem:[%s1648 + $0x4] sm:$0xf]
        %v1651 = vld [vmem:[%s1648 + $0x8] sm:$0xf]
        %v1652 = vld [vmem:[%s1648 + $0xc] sm:$0xf]
        %s1653 = scalar_lea.vmem %s4, 2
        %v1654 = vld [vmem:[%s1653] sm:$0x1]
        %v1656 = vlaneseq
        %v1657 = vshrl.u32 %v1656, 7
        %v1658 = vsub.s32 0, %v1657
        %v1659 = vrot.slane %v1654, %v1658
        %v1665 = vunpack.c.l.b16 %v1649
        %v1666 = vunpack.c.l.b16 %v1650
        %v1667 = vunpack.c.l.b16 %v1651
        %v1668 = vunpack.c.l.b16 %v1652
        %v1669 = vpack.c.b16 %v1666, %v1665
        %v1670 = vpack.c.b16 %v1668, %v1667
        %v1674 = vsel %vm735, %v1647, 0
        %1676 = vmatprep.subr.bf16.mxu0 0
        %1677 = vmatpush1.bf16.msra.mxu0 %v1669
        %1678 = vmatprep.subr.bf16.mxu0 0
        %1679 = vmatpush1.bf16.msra.mxu0 %v1670
        %1680 = vmatprep.subr.bf16.mxu0 0
        %1681 = vmatpush1.bf16.msra.mxu0 0
        %1682 = vmatprep.subr.bf16.mxu0 0
        %1683 = vmatpush1.bf16.msra.mxu0 0
        %1684 = vmatprep.subr.bf16.mxu0 0
        %1685 = vmatpush1.bf16.msra.mxu0 0
        %1686 = vmatprep.subr.bf16.mxu0 0
        %1687 = vmatpush1.bf16.msra.mxu0 0
        %1688 = vmatprep.subr.bf16.mxu0 0
        %1689 = vmatpush1.bf16.msra.mxu0 0
        %1690 = vmatprep.subr.bf16.mxu0 0
        %1691 = vmatpush1.bf16.msra.mxu0 0
        %1692 = vmatprep.subr.bf16.mxu0 0
        %1693 = vmatpush1.bf16.msra.mxu0 0
        %1694 = vmatprep.subr.bf16.mxu0 0
        %1695 = vmatpush1.bf16.msra.mxu0 0
        %1696 = vmatprep.subr.bf16.mxu0 0
        %1697 = vmatpush1.bf16.msra.mxu0 0
        %1698 = vmatprep.subr.bf16.mxu0 0
        %1699 = vmatpush1.bf16.msra.mxu0 0
        %1700 = vmatprep.subr.bf16.mxu0 0
        %1701 = vmatpush1.bf16.msra.mxu0 0
        %1702 = vmatprep.subr.bf16.mxu0 0
        %1703 = vmatpush1.bf16.msra.mxu0 0
        %1704 = vmatprep.subr.bf16.mxu0 0
        %1705 = vmatpush1.bf16.msra.mxu0 0
        %1706 = vmatprep.subr.bf16.mxu0 0
        %1707 = vmatpush1.bf16.msra.mxu0 0
        %1708 = vmatprep.mubr.bf16.mxu0 0
        %1709 = vmatmul.mubr.bf16.gmra.mrb[0].mxu0 %v1674
        %v1710 = vpop.f32.mrb[0].mxu0
        %v1711 = vadd.f32 %v1659, %v1710
        %v1712 = vpop.f32.mrb[0].mxu0
        %v1713 = vpop.f32.mrb[0].mxu0
        %v1714 = vpop.f32.mrb[0].mxu0
        %1715 = vdwg.mxu0
        %s1716 = scalar_lea.vmem %s5, 32
        %v1717 = vld [vmem:[%s1716] sm:$0xf]
        %v1718 = vld [vmem:[%s1716 + $0x4] sm:$0xf]
        %v1719 = vld [vmem:[%s1716 + $0x8] sm:$0xf]
        %v1720 = vld [vmem:[%s1716 + $0xc] sm:$0xf]
        %s1721 = scalar_lea.vmem %s6, 2
        %v1722 = vld [vmem:[%s1721] sm:$0x1]
        %v1724 = vlaneseq
        %v1725 = vshrl.u32 %v1724, 7
        %v1726 = vsub.s32 0, %v1725
        %v1727 = vrot.slane %v1722, %v1726
        %v1733 = vunpack.c.l.b16 %v1717
        %v1734 = vunpack.c.l.b16 %v1718
        %v1735 = vunpack.c.l.b16 %v1719
        %v1736 = vunpack.c.l.b16 %v1720
        %v1737 = vpack.c.b16 %v1734, %v1733
        %v1738 = vpack.c.b16 %v1736, %v1735
        %1741 = vmatprep.subr.bf16.mxu0 0
        %1742 = vmatpush1.bf16.msra.mxu0 %v1737
        %1743 = vmatprep.subr.bf16.mxu0 0
        %1744 = vmatpush1.bf16.msra.mxu0 %v1738
        %1745 = vmatprep.subr.bf16.mxu0 0
        %1746 = vmatpush1.bf16.msra.mxu0 0
        %1747 = vmatprep.subr.bf16.mxu0 0
        %1748 = vmatpush1.bf16.msra.mxu0 0
        %1749 = vmatprep.subr.bf16.mxu0 0
        %1750 = vmatpush1.bf16.msra.mxu0 0
        %1751 = vmatprep.subr.bf16.mxu0 0
        %1752 = vmatpush1.bf16.msra.mxu0 0
        %1753 = vmatprep.subr.bf16.mxu0 0
        %1754 = vmatpush1.bf16.msra.mxu0 0
        %1755 = vmatprep.subr.bf16.mxu0 0
        %1756 = vmatpush1.bf16.msra.mxu0 0
        %1757 = vmatprep.subr.bf16.mxu0 0
        %1758 = vmatpush1.bf16.msra.mxu0 0
        %1759 = vmatprep.subr.bf16.mxu0 0
        %1760 = vmatpush1.bf16.msra.mxu0 0
        %1761 = vmatprep.subr.bf16.mxu0 0
        %1762 = vmatpush1.bf16.msra.mxu0 0
        %1763 = vmatprep.subr.bf16.mxu0 0
        %1764 = vmatpush1.bf16.msra.mxu0 0
        %1765 = vmatprep.subr.bf16.mxu0 0
        %1766 = vmatpush1.bf16.msra.mxu0 0
        %1767 = vmatprep.subr.bf16.mxu0 0
        %1768 = vmatpush1.bf16.msra.mxu0 0
        %1769 = vmatprep.subr.bf16.mxu0 0
        %1770 = vmatpush1.bf16.msra.mxu0 0
        %1771 = vmatprep.subr.bf16.mxu0 0
        %1772 = vmatpush1.bf16.msra.mxu0 0
        %1773 = vmatprep.mubr.bf16.mxu0 0
        %1774 = vmatmul.mubr.bf16.gmra.mrb[0].mxu0 %v1674
        %v1775 = vpop.f32.mrb[0].mxu0
        %v1776 = vadd.f32 %v1727, %v1775
        %v1777 = vpop.f32.mrb[0].mxu0
        %v1778 = vpop.f32.mrb[0].mxu0
        %v1779 = vpop.f32.mrb[0].mxu0
        %1780 = vdwg.mxu0
        %s1781 = scalar_lea.vmem %s7, 32
        %v1782 = vld [vmem:[%s1781] sm:$0xf]
        %v1783 = vld [vmem:[%s1781 + $0x4] sm:$0xf]
        %v1784 = vld [vmem:[%s1781 + $0x8] sm:$0xf]
        %v1785 = vld [vmem:[%s1781 + $0xc] sm:$0xf]
        %s1786 = scalar_lea.vmem %s8, 2
        %v1787 = vld [vmem:[%s1786] sm:$0x1]
        %v1789 = vlaneseq
        %v1790 = vshrl.u32 %v1789, 7
        %v1791 = vsub.s32 0, %v1790
        %v1792 = vrot.slane %v1787, %v1791
        %v1798 = vunpack.c.l.b16 %v1782
        %v1799 = vunpack.c.l.b16 %v1783
        %v1800 = vunpack.c.l.b16 %v1784
        %v1801 = vunpack.c.l.b16 %v1785
        %v1802 = vpack.c.b16 %v1799, %v1798
        %v1803 = vpack.c.b16 %v1801, %v1800
        %1806 = vmatprep.subr.bf16.mxu0 0
        %1807 = vmatpush1.bf16.msra.mxu0 %v1802
        %1808 = vmatprep.subr.bf16.mxu0 0
        %1809 = vmatpush1.bf16.msra.mxu0 %v1803
        %1810 = vmatprep.subr.bf16.mxu0 0
        %1811 = vmatpush1.bf16.msra.mxu0 0
        %1812 = vmatprep.subr.bf16.mxu0 0
        %1813 = vmatpush1.bf16.msra.mxu0 0
        %1814 = vmatprep.subr.bf16.mxu0 0
        %1815 = vmatpush1.bf16.msra.mxu0 0
        %1816 = vmatprep.subr.bf16.mxu0 0
        %1817 = vmatpush1.bf16.msra.mxu0 0
        %1818 = vmatprep.subr.bf16.mxu0 0
        %1819 = vmatpush1.bf16.msra.mxu0 0
        %1820 = vmatprep.subr.bf16.mxu0 0
        %1821 = vmatpush1.bf16.msra.mxu0 0
        %1822 = vmatprep.subr.bf16.mxu0 0
        %1823 = vmatpush1.bf16.msra.mxu0 0
        %1824 = vmatprep.subr.bf16.mxu0 0
        %1825 = vmatpush1.bf16.msra.mxu0 0
        %1826 = vmatprep.subr.bf16.mxu0 0
        %1827 = vmatpush1.bf16.msra.mxu0 0
        %1828 = vmatprep.subr.bf16.mxu0 0
        %1829 = vmatpush1.bf16.msra.mxu0 0
        %1830 = vmatprep.subr.bf16.mxu0 0
        %1831 = vmatpush1.bf16.msra.mxu0 0
        %1832 = vmatprep.subr.bf16.mxu0 0
        %1833 = vmatpush1.bf16.msra.mxu0 0
        %1834 = vmatprep.subr.bf16.mxu0 0
        %1835 = vmatpush1.bf16.msra.mxu0 0
        %1836 = vmatprep.subr.bf16.mxu0 0
        %1837 = vmatpush1.bf16.msra.mxu0 0
        %1838 = vmatprep.mubr.bf16.mxu0 0
        %1839 = vmatmul.mubr.bf16.gmra.mrb[0].mxu0 %v1674
        %v1840 = vpop.f32.mrb[0].mxu0
        %v1841 = vadd.f32 %v1792, %v1840
        %v1842 = vpop.f32.mrb[0].mxu0
        %v1843 = vpop.f32.mrb[0].mxu0
        %v1844 = vpop.f32.mrb[0].mxu0
        %1845 = vdwg.mxu0
        %v1846 = vpack.c.bf16 %v1711, %v1711
        %v1847 = vpack.c.bf16 %v1776, %v1776
        %v1849 = vsel %vm907, %v1846, 0
        %v1852 = vsel %vm907, %v1847, 0
        %1854 = vmatprep.subr.bf16.mxu0 0
        %1855 = vmatpush1.bf16.xpose.msra.mxu0 %v1852
        %1856 = vmatprep.subr.bf16.mxu0 0
        %1857 = vmatpush1.bf16.xpose.msra.mxu0 0
        %1858 = vmatprep.subr.bf16.mxu0 0
        %1859 = vmatpush1.bf16.xpose.msra.mxu0 0
        %1860 = vmatprep.subr.bf16.mxu0 0
        %1861 = vmatpush1.bf16.xpose.msra.mxu0 0
        %1862 = vmatprep.subr.bf16.mxu0 0
        %1863 = vmatpush1.bf16.xpose.msra.mxu0 0
        %1864 = vmatprep.subr.bf16.mxu0 0
        %1865 = vmatpush1.bf16.xpose.msra.mxu0 0
        %1866 = vmatprep.subr.bf16.mxu0 0
        %1867 = vmatpush1.bf16.xpose.msra.mxu0 0
        %1868 = vmatprep.subr.bf16.mxu0 0
        %1869 = vmatpush1.bf16.xpose.msra.mxu0 0
        %1870 = vmatprep.subr.bf16.mxu0 0
        %1871 = vmatpush1.bf16.xpose.msra.mxu0 0
        %1872 = vmatprep.subr.bf16.mxu0 0
        %1873 = vmatpush1.bf16.xpose.msra.mxu0 0
        %1874 = vmatprep.subr.bf16.mxu0 0
        %1875 = vmatpush1.bf16.xpose.msra.mxu0 0
        %1876 = vmatprep.subr.bf16.mxu0 0
        %1877 = vmatpush1.bf16.xpose.msra.mxu0 0
        %1878 = vmatprep.subr.bf16.mxu0 0
        %1879 = vmatpush1.bf16.xpose.msra.mxu0 0
        %1880 = vmatprep.subr.bf16.mxu0 0
        %1881 = vmatpush1.bf16.xpose.msra.mxu0 0
        %1882 = vmatprep.subr.bf16.mxu0 0
        %1883 = vmatpush1.bf16.xpose.msra.mxu0 0
        %1884 = vmatprep.subr.bf16.mxu0 0
        %1885 = vmatpush1.bf16.xpose.msra.mxu0 0
        %1886 = vmatprep.mubr.bf16.mxu0 0
        %1887 = vmatmul.mubr.bf16.gmra.mrb[0].mxu0 %v1849
        %v1888 = vpop.f32.mrb[0].mxu0
        %v1889 = vadd.f32 0.0, %v1888
        %v1890 = vpop.f32.mrb[0].mxu0
        %v1891 = vpop.f32.mrb[0].mxu0
        %v1892 = vpop.f32.mrb[0].mxu0
        %1893 = vdwg.mxu0
        %v1894 = vmul.f32 %v1889, 0.25
        %v1895 = vadd.f32 %v1894, %v710
        %v1896 = vsel %vm956, %v1895, -inf
        %1897 = vmax.xlane.f32.xlu0 %v1896
        %v1898 = vpop.xlane.xlu0 %1897
        %v1899 = vsub.f32 %v1895, %v1898
        %v1900 = vmul.f32 %v1899, 1.442695
        %v1901 = vpow.pop %v1900
        %v1902 = vsel %vm956, %v1901, 0.0
        %1903 = vadd.xlane.f32.xlu0 %v1902
        %v1904 = vpop.xlane.xlu0 %1903
        %v1905 = vrcp.pop %v1904
        %v1906 = vmul.f32 %v1901, %v1905
        %v1907 = vpack.c.bf16 %v1906, %v1906
        %v1908 = vpack.c.bf16 %v1841, %v1841
        %v1910 = vsel %vm956, %v1907, 0
        %v1913 = vsel %vm973, %v1908, 0
        %1915 = vmatprep.subr.bf16.mxu0 0
        %1916 = vmatpush1.bf16.msra.mxu0 %v1913
        %1917 = vmatprep.subr.bf16.mxu0 0
        %1918 = vmatpush1.bf16.msra.mxu0 0
        %1919 = vmatprep.subr.bf16.mxu0 0
        %1920 = vmatpush1.bf16.msra.mxu0 0
        %1921 = vmatprep.subr.bf16.mxu0 0
        %1922 = vmatpush1.bf16.msra.mxu0 0
        %1923 = vmatprep.subr.bf16.mxu0 0
        %1924 = vmatpush1.bf16.msra.mxu0 0
        %1925 = vmatprep.subr.bf16.mxu0 0
        %1926 = vmatpush1.bf16.msra.mxu0 0
        %1927 = vmatprep.subr.bf16.mxu0 0
        %1928 = vmatpush1.bf16.msra.mxu0 0
        %1929 = vmatprep.subr.bf16.mxu0 0
        %1930 = vmatpush1.bf16.msra.mxu0 0
        %1931 = vmatprep.subr.bf16.mxu0 0
        %1932 = vmatpush1.bf16.msra.mxu0 0
        %1933 = vmatprep.subr.bf16.mxu0 0
        %1934 = vmatpush1.bf16.msra.mxu0 0
        %1935 = vmatprep.subr.bf16.mxu0 0
        %1936 = vmatpush1.bf16.msra.mxu0 0
        %1937 = vmatprep.subr.bf16.mxu0 0
        %1938 = vmatpush1.bf16.msra.mxu0 0
        %1939 = vmatprep.subr.bf16.mxu0 0
        %1940 = vmatpush1.bf16.msra.mxu0 0
        %1941 = vmatprep.subr.bf16.mxu0 0
        %1942 = vmatpush1.bf16.msra.mxu0 0
        %1943 = vmatprep.subr.bf16.mxu0 0
        %1944 = vmatpush1.bf16.msra.mxu0 0
        %1945 = vmatprep.subr.bf16.mxu0 0
        %1946 = vmatpush1.bf16.msra.mxu0 0
        %1947 = vmatprep.mubr.bf16.mxu0 0
        %1948 = vmatmul.mubr.bf16.gmra.mrb[0].mxu0 %v1910
        %v1949 = vpop.f32.mrb[0].mxu0
        %v1950 = vadd.f32 0.0, %v1949
        %v1951 = vpop.f32.mrb[0].mxu0
        %v1952 = vpop.f32.mrb[0].mxu0
        %v1953 = vpop.f32.mrb[0].mxu0
        %1954 = vdwg.mxu0
        %v1955 = vpack.c.bf16 %v1950, %v1950
        %s1956 = scalar_lea.vmem %s9, 16
        %v1957 = vld [vmem:[%s1956] sm:$0xf]
        %v1958 = vld [vmem:[%s1956 + $0x4] sm:$0xf]
        %s1959 = scalar_lea.vmem %s3, 48
        %v1960 = vld [vmem:[%s1959] sm:$0xf]
        %v1961 = vld [vmem:[%s1959 + $0x4] sm:$0xf]
        %v1962 = vld [vmem:[%s1959 + $0x8] sm:$0xf]
        %v1963 = vld [vmem:[%s1959 + $0xc] sm:$0xf]
        %s1964 = scalar_lea.vmem %s4, 3
        %v1965 = vld [vmem:[%s1964] sm:$0x1]
        %v1967 = vlaneseq
        %v1968 = vshrl.u32 %v1967, 7
        %v1969 = vsub.s32 0, %v1968
        %v1970 = vrot.slane %v1965, %v1969
        %v1976 = vunpack.c.l.b16 %v1960
        %v1977 = vunpack.c.l.b16 %v1961
        %v1978 = vunpack.c.l.b16 %v1962
        %v1979 = vunpack.c.l.b16 %v1963
        %v1980 = vpack.c.b16 %v1977, %v1976
        %v1981 = vpack.c.b16 %v1979, %v1978
        %1984 = vmatprep.subr.bf16.mxu0 0
        %1985 = vmatpush1.bf16.msra.mxu0 %v1980
        %1986 = vmatprep.subr.bf16.mxu0 0
        %1987 = vmatpush1.bf16.msra.mxu0 %v1981
        %1988 = vmatprep.subr.bf16.mxu0 0
        %1989 = vmatpush1.bf16.msra.mxu0 0
        %1990 = vmatprep.subr.bf16.mxu0 0
        %1991 = vmatpush1.bf16.msra.mxu0 0
        %1992 = vmatprep.subr.bf16.mxu0 0
        %1993 = vmatpush1.bf16.msra.mxu0 0
        %1994 = vmatprep.subr.bf16.mxu0 0
        %1995 = vmatpush1.bf16.msra.mxu0 0
        %1996 = vmatprep.subr.bf16.mxu0 0
        %1997 = vmatpush1.bf16.msra.mxu0 0
        %1998 = vmatprep.subr.bf16.mxu0 0
        %1999 = vmatpush1.bf16.msra.mxu0 0
        %2000 = vmatprep.subr.bf16.mxu0 0
        %2001 = vmatpush1.bf16.msra.mxu0 0
        %2002 = vmatprep.subr.bf16.mxu0 0
        %2003 = vmatpush1.bf16.msra.mxu0 0
        %2004 = vmatprep.subr.bf16.mxu0 0
        %2005 = vmatpush1.bf16.msra.mxu0 0
        %2006 = vmatprep.subr.bf16.mxu0 0
        %2007 = vmatpush1.bf16.msra.mxu0 0
        %2008 = vmatprep.subr.bf16.mxu0 0
        %2009 = vmatpush1.bf16.msra.mxu0 0
        %2010 = vmatprep.subr.bf16.mxu0 0
        %2011 = vmatpush1.bf16.msra.mxu0 0
        %2012 = vmatprep.subr.bf16.mxu0 0
        %2013 = vmatpush1.bf16.msra.mxu0 0
        %2014 = vmatprep.subr.bf16.mxu0 0
        %2015 = vmatpush1.bf16.msra.mxu0 0
        %2016 = vmatprep.mubr.bf16.mxu0 0
        %2017 = vmatmul.mubr.bf16.gmra.mrb[0].mxu0 %v1674
        %v2018 = vpop.f32.mrb[0].mxu0
        %v2019 = vadd.f32 %v1970, %v2018
        %v2020 = vpop.f32.mrb[0].mxu0
        %v2021 = vpop.f32.mrb[0].mxu0
        %v2022 = vpop.f32.mrb[0].mxu0
        %2023 = vdwg.mxu0
        %s2024 = scalar_lea.vmem %s5, 48
        %v2025 = vld [vmem:[%s2024] sm:$0xf]
        %v2026 = vld [vmem:[%s2024 + $0x4] sm:$0xf]
        %v2027 = vld [vmem:[%s2024 + $0x8] sm:$0xf]
        %v2028 = vld [vmem:[%s2024 + $0xc] sm:$0xf]
        %s2029 = scalar_lea.vmem %s6, 3
        %v2030 = vld [vmem:[%s2029] sm:$0x1]
        %v2032 = vlaneseq
        %v2033 = vshrl.u32 %v2032, 7
        %v2034 = vsub.s32 0, %v2033
        %v2035 = vrot.slane %v2030, %v2034
        %v2041 = vunpack.c.l.b16 %v2025
        %v2042 = vunpack.c.l.b16 %v2026
        %v2043 = vunpack.c.l.b16 %v2027
        %v2044 = vunpack.c.l.b16 %v2028
        %v2045 = vpack.c.b16 %v2042, %v2041
        %v2046 = vpack.c.b16 %v2044, %v2043
        %2049 = vmatprep.subr.bf16.mxu0 0
        %2050 = vmatpush1.bf16.msra.mxu0 %v2045
        %2051 = vmatprep.subr.bf16.mxu0 0
        %2052 = vmatpush1.bf16.msra.mxu0 %v2046
        %2053 = vmatprep.subr.bf16.mxu0 0
        %2054 = vmatpush1.bf16.msra.mxu0 0
        %2055 = vmatprep.subr.bf16.mxu0 0
        %2056 = vmatpush1.bf16.msra.mxu0 0
        %2057 = vmatprep.subr.bf16.mxu0 0
        %2058 = vmatpush1.bf16.msra.mxu0 0
        %2059 = vmatprep.subr.bf16.mxu0 0
        %2060 = vmatpush1.bf16.msra.mxu0 0
        %2061 = vmatprep.subr.bf16.mxu0 0
        %2062 = vmatpush1.bf16.msra.mxu0 0
        %2063 = vmatprep.subr.bf16.mxu0 0
        %2064 = vmatpush1.bf16.msra.mxu0 0
        %2065 = vmatprep.subr.bf16.mxu0 0
        %2066 = vmatpush1.bf16.msra.mxu0 0
        %2067 = vmatprep.subr.bf16.mxu0 0
        %2068 = vmatpush1.bf16.msra.mxu0 0
        %2069 = vmatprep.subr.bf16.mxu0 0
        %2070 = vmatpush1.bf16.msra.mxu0 0
        %2071 = vmatprep.subr.bf16.mxu0 0
        %2072 = vmatpush1.bf16.msra.mxu0 0
        %2073 = vmatprep.subr.bf16.mxu0 0
        %2074 = vmatpush1.bf16.msra.mxu0 0
        %2075 = vmatprep.subr.bf16.mxu0 0
        %2076 = vmatpush1.bf16.msra.mxu0 0
        %2077 = vmatprep.subr.bf16.mxu0 0
        %2078 = vmatpush1.bf16.msra.mxu0 0
        %2079 = vmatprep.subr.bf16.mxu0 0
        %2080 = vmatpush1.bf16.msra.mxu0 0
        %2081 = vmatprep.mubr.bf16.mxu0 0
        %2082 = vmatmul.mubr.bf16.gmra.mrb[0].mxu0 %v1674
        %v2083 = vpop.f32.mrb[0].mxu0
        %v2084 = vadd.f32 %v2035, %v2083
        %v2085 = vpop.f32.mrb[0].mxu0
        %v2086 = vpop.f32.mrb[0].mxu0
        %v2087 = vpop.f32.mrb[0].mxu0
        %2088 = vdwg.mxu0
        %s2089 = scalar_lea.vmem %s7, 48
        %v2090 = vld [vmem:[%s2089] sm:$0xf]
        %v2091 = vld [vmem:[%s2089 + $0x4] sm:$0xf]
        %v2092 = vld [vmem:[%s2089 + $0x8] sm:$0xf]
        %v2093 = vld [vmem:[%s2089 + $0xc] sm:$0xf]
        %s2094 = scalar_lea.vmem %s8, 3
        %v2095 = vld [vmem:[%s2094] sm:$0x1]
        %v2097 = vlaneseq
        %v2098 = vshrl.u32 %v2097, 7
        %v2099 = vsub.s32 0, %v2098
        %v2100 = vrot.slane %v2095, %v2099
        %v2106 = vunpack.c.l.b16 %v2090
        %v2107 = vunpack.c.l.b16 %v2091
        %v2108 = vunpack.c.l.b16 %v2092
        %v2109 = vunpack.c.l.b16 %v2093
        %v2110 = vpack.c.b16 %v2107, %v2106
        %v2111 = vpack.c.b16 %v2109, %v2108
        %2114 = vmatprep.subr.bf16.mxu0 0
        %2115 = vmatpush1.bf16.msra.mxu0 %v2110
        %2116 = vmatprep.subr.bf16.mxu0 0
        %2117 = vmatpush1.bf16.msra.mxu0 %v2111
        %2118 = vmatprep.subr.bf16.mxu0 0
        %2119 = vmatpush1.bf16.msra.mxu0 0
        %2120 = vmatprep.subr.bf16.mxu0 0
        %2121 = vmatpush1.bf16.msra.mxu0 0
        %2122 = vmatprep.subr.bf16.mxu0 0
        %2123 = vmatpush1.bf16.msra.mxu0 0
        %2124 = vmatprep.subr.bf16.mxu0 0
        %2125 = vmatpush1.bf16.msra.mxu0 0
        %2126 = vmatprep.subr.bf16.mxu0 0
        %2127 = vmatpush1.bf16.msra.mxu0 0
        %2128 = vmatprep.subr.bf16.mxu0 0
        %2129 = vmatpush1.bf16.msra.mxu0 0
        %2130 = vmatprep.subr.bf16.mxu0 0
        %2131 = vmatpush1.bf16.msra.mxu0 0
        %2132 = vmatprep.subr.bf16.mxu0 0
        %2133 = vmatpush1.bf16.msra.mxu0 0
        %2134 = vmatprep.subr.bf16.mxu0 0
        %2135 = vmatpush1.bf16.msra.mxu0 0
        %2136 = vmatprep.subr.bf16.mxu0 0
        %2137 = vmatpush1.bf16.msra.mxu0 0
        %2138 = vmatprep.subr.bf16.mxu0 0
        %2139 = vmatpush1.bf16.msra.mxu0 0
        %2140 = vmatprep.subr.bf16.mxu0 0
        %2141 = vmatpush1.bf16.msra.mxu0 0
        %2142 = vmatprep.subr.bf16.mxu0 0
        %2143 = vmatpush1.bf16.msra.mxu0 0
        %2144 = vmatprep.subr.bf16.mxu0 0
        %2145 = vmatpush1.bf16.msra.mxu0 0
        %2146 = vmatprep.mubr.bf16.mxu0 0
        %2147 = vmatmul.mubr.bf16.gmra.mrb[0].mxu0 %v1674
        %v2148 = vpop.f32.mrb[0].mxu0
        %v2149 = vadd.f32 %v2100, %v2148
        %v2150 = vpop.f32.mrb[0].mxu0
        %v2151 = vpop.f32.mrb[0].mxu0
        %v2152 = vpop.f32.mrb[0].mxu0
        %2153 = vdwg.mxu0
        %v2154 = vpack.c.bf16 %v2019, %v2019
        %v2155 = vpack.c.bf16 %v2084, %v2084
        %v2157 = vsel %vm907, %v2154, 0
        %v2160 = vsel %vm907, %v2155, 0
        %2162 = vmatprep.subr.bf16.mxu0 0
        %2163 = vmatpush1.bf16.xpose.msra.mxu0 %v2160
        %2164 = vmatprep.subr.bf16.mxu0 0
        %2165 = vmatpush1.bf16.xpose.msra.mxu0 0
        %2166 = vmatprep.subr.bf16.mxu0 0
        %2167 = vmatpush1.bf16.xpose.msra.mxu0 0
        %2168 = vmatprep.subr.bf16.mxu0 0
        %2169 = vmatpush1.bf16.xpose.msra.mxu0 0
        %2170 = vmatprep.subr.bf16.mxu0 0
        %2171 = vmatpush1.bf16.xpose.msra.mxu0 0
        %2172 = vmatprep.subr.bf16.mxu0 0
        %2173 = vmatpush1.bf16.xpose.msra.mxu0 0
        %2174 = vmatprep.subr.bf16.mxu0 0
        %2175 = vmatpush1.bf16.xpose.msra.mxu0 0
        %2176 = vmatprep.subr.bf16.mxu0 0
        %2177 = vmatpush1.bf16.xpose.msra.mxu0 0
        %2178 = vmatprep.subr.bf16.mxu0 0
        %2179 = vmatpush1.bf16.xpose.msra.mxu0 0
        %2180 = vmatprep.subr.bf16.mxu0 0
        %2181 = vmatpush1.bf16.xpose.msra.mxu0 0
        %2182 = vmatprep.subr.bf16.mxu0 0
        %2183 = vmatpush1.bf16.xpose.msra.mxu0 0
        %2184 = vmatprep.subr.bf16.mxu0 0
        %2185 = vmatpush1.bf16.xpose.msra.mxu0 0
        %2186 = vmatprep.subr.bf16.mxu0 0
        %2187 = vmatpush1.bf16.xpose.msra.mxu0 0
        %2188 = vmatprep.subr.bf16.mxu0 0
        %2189 = vmatpush1.bf16.xpose.msra.mxu0 0
        %2190 = vmatprep.subr.bf16.mxu0 0
        %2191 = vmatpush1.bf16.xpose.msra.mxu0 0
        %2192 = vmatprep.subr.bf16.mxu0 0
        %2193 = vmatpush1.bf16.xpose.msra.mxu0 0
        %2194 = vmatprep.mubr.bf16.mxu0 0
        %2195 = vmatmul.mubr.bf16.gmra.mrb[0].mxu0 %v2157
        %v2196 = vpop.f32.mrb[0].mxu0
        %v2197 = vadd.f32 0.0, %v2196
        %v2198 = vpop.f32.mrb[0].mxu0
        %v2199 = vpop.f32.mrb[0].mxu0
        %v2200 = vpop.f32.mrb[0].mxu0
        %2201 = vdwg.mxu0
        %v2202 = vmul.f32 %v2197, 0.25
        %v2203 = vadd.f32 %v2202, %v710
        %v2204 = vsel %vm956, %v2203, -inf
        %2205 = vmax.xlane.f32.xlu0 %v2204
        %v2206 = vpop.xlane.xlu0 %2205
        %v2207 = vsub.f32 %v2203, %v2206
        %v2208 = vmul.f32 %v2207, 1.442695
        %v2209 = vpow.pop %v2208
        %v2210 = vsel %vm956, %v2209, 0.0
        %2211 = vadd.xlane.f32.xlu0 %v2210
        %v2212 = vpop.xlane.xlu0 %2211
        %v2213 = vrcp.pop %v2212
        %v2214 = vmul.f32 %v2209, %v2213
        %v2215 = vpack.c.bf16 %v2214, %v2214
        %v2216 = vpack.c.bf16 %v2149, %v2149
        %v2218 = vsel %vm956, %v2215, 0
        %v2221 = vsel %vm973, %v2216, 0
        %2223 = vmatprep.subr.bf16.mxu0 0
        %2224 = vmatpush1.bf16.msra.mxu0 %v2221
        %2225 = vmatprep.subr.bf16.mxu0 0
        %2226 = vmatpush1.bf16.msra.mxu0 0
        %2227 = vmatprep.subr.bf16.mxu0 0
        %2228 = vmatpush1.bf16.msra.mxu0 0
        %2229 = vmatprep.subr.bf16.mxu0 0
        %2230 = vmatpush1.bf16.msra.mxu0 0
        %2231 = vmatprep.subr.bf16.mxu0 0
        %2232 = vmatpush1.bf16.msra.mxu0 0
        %2233 = vmatprep.subr.bf16.mxu0 0
        %2234 = vmatpush1.bf16.msra.mxu0 0
        %2235 = vmatprep.subr.bf16.mxu0 0
        %2236 = vmatpush1.bf16.msra.mxu0 0
        %2237 = vmatprep.subr.bf16.mxu0 0
        %2238 = vmatpush1.bf16.msra.mxu0 0
        %2239 = vmatprep.subr.bf16.mxu0 0
        %2240 = vmatpush1.bf16.msra.mxu0 0
        %2241 = vmatprep.subr.bf16.mxu0 0
        %2242 = vmatpush1.bf16.msra.mxu0 0
        %2243 = vmatprep.subr.bf16.mxu0 0
        %2244 = vmatpush1.bf16.msra.mxu0 0
        %2245 = vmatprep.subr.bf16.mxu0 0
        %2246 = vmatpush1.bf16.msra.mxu0 0
        %2247 = vmatprep.subr.bf16.mxu0 0
        %2248 = vmatpush1.bf16.msra.mxu0 0
        %2249 = vmatprep.subr.bf16.mxu0 0
        %2250 = vmatpush1.bf16.msra.mxu0 0
        %2251 = vmatprep.subr.bf16.mxu0 0
        %2252 = vmatpush1.bf16.msra.mxu0 0
        %2253 = vmatprep.subr.bf16.mxu0 0
        %2254 = vmatpush1.bf16.msra.mxu0 0
        %2255 = vmatprep.mubr.bf16.mxu0 0
        %2256 = vmatmul.mubr.bf16.gmra.mrb[0].mxu0 %v2218
        %v2257 = vpop.f32.mrb[0].mxu0
        %v2258 = vadd.f32 0.0, %v2257
        %v2259 = vpop.f32.mrb[0].mxu0
        %v2260 = vpop.f32.mrb[0].mxu0
        %v2261 = vpop.f32.mrb[0].mxu0
        %2262 = vdwg.mxu0
        %v2263 = vpack.c.bf16 %v2258, %v2258
        %s2264 = scalar_lea.vmem %s9, 24
        %v2265 = vld [vmem:[%s2264] sm:$0xf]
        %v2266 = vld [vmem:[%s2264 + $0x4] sm:$0xf]
        %v2269 = vunpack.c.l.b16 %v2265
        %v2270 = vunpack.c.l.b16 %v2266
        %v2271 = vpack.c.b16 %v2270, %v2269
        %v2274 = vsel %vm907, %v2263, 0
        %2276 = vmatprep.subr.bf16.mxu0 0
        %2277 = vmatpush1.bf16.msra.mxu0 %v2271
        %2278 = vmatprep.subr.bf16.mxu0 0
        %2279 = vmatpush1.bf16.msra.mxu0 0
        %2280 = vmatprep.subr.bf16.mxu0 0
        %2281 = vmatpush1.bf16.msra.mxu0 0
        %2282 = vmatprep.subr.bf16.mxu0 0
        %2283 = vmatpush1.bf16.msra.mxu0 0
        %2284 = vmatprep.subr.bf16.mxu0 0
        %2285 = vmatpush1.bf16.msra.mxu0 0
        %2286 = vmatprep.subr.bf16.mxu0 0
        %2287 = vmatpush1.bf16.msra.mxu0 0
        %2288 = vmatprep.subr.bf16.mxu0 0
        %2289 = vmatpush1.bf16.msra.mxu0 0
        %2290 = vmatprep.subr.bf16.mxu0 0
        %2291 = vmatpush1.bf16.msra.mxu0 0
        %2292 = vmatprep.subr.bf16.mxu0 0
        %2293 = vmatpush1.bf16.msra.mxu0 0
        %2294 = vmatprep.subr.bf16.mxu0 0
        %2295 = vmatpush1.bf16.msra.mxu0 0
        %2296 = vmatprep.subr.bf16.mxu0 0
        %2297 = vmatpush1.bf16.msra.mxu0 0
        %2298 = vmatprep.subr.bf16.mxu0 0
        %2299 = vmatpush1.bf16.msra.mxu0 0
        %2300 = vmatprep.subr.bf16.mxu0 0
        %2301 = vmatpush1.bf16.msra.mxu0 0
        %2302 = vmatprep.subr.bf16.mxu0 0
        %2303 = vmatpush1.bf16.msra.mxu0 0
        %2304 = vmatprep.subr.bf16.mxu0 0
        %2305 = vmatpush1.bf16.msra.mxu0 0
        %2306 = vmatprep.subr.bf16.mxu0 0
        %2307 = vmatpush1.bf16.msra.mxu0 0
        %2308 = vmatprep.mubr.bf16.mxu0 0
        %2309 = vmatmul.mubr.bf16.gmra.mrb[0].mxu0 %v2274
        %v2310 = vpop.f32.mrb[0].mxu0
        %v2311 = vadd.f32 0.0, %v2310
        %v2312 = vpop.f32.mrb[0].mxu0
        %v2313 = vpop.f32.mrb[0].mxu0
        %v2314 = vpop.f32.mrb[0].mxu0
        %2315 = vdwg.mxu0
        %v2318 = vunpack.c.l.b16 %v1957
        %v2319 = vunpack.c.l.b16 %v1958
        %v2320 = vpack.c.b16 %v2319, %v2318
        %v2323 = vsel %vm907, %v1955, 0
        %2325 = vmatprep.subr.bf16.mxu0 0
        %2326 = vmatpush1.bf16.msra.mxu0 %v2320
        %2327 = vmatprep.subr.bf16.mxu0 0
        %2328 = vmatpush1.bf16.msra.mxu0 0
        %2329 = vmatprep.subr.bf16.mxu0 0
        %2330 = vmatpush1.bf16.msra.mxu0 0
        %2331 = vmatprep.subr.bf16.mxu0 0
        %2332 = vmatpush1.bf16.msra.mxu0 0
        %2333 = vmatprep.subr.bf16.mxu0 0
        %2334 = vmatpush1.bf16.msra.mxu0 0
        %2335 = vmatprep.subr.bf16.mxu0 0
        %2336 = vmatpush1.bf16.msra.mxu0 0
        %2337 = vmatprep.subr.bf16.mxu0 0
        %2338 = vmatpush1.bf16.msra.mxu0 0
        %2339 = vmatprep.subr.bf16.mxu0 0
        %2340 = vmatpush1.bf16.msra.mxu0 0
        %2341 = vmatprep.subr.bf16.mxu0 0
        %2342 = vmatpush1.bf16.msra.mxu0 0
        %2343 = vmatprep.subr.bf16.mxu0 0
        %2344 = vmatpush1.bf16.msra.mxu0 0
        %2345 = vmatprep.subr.bf16.mxu0 0
        %2346 = vmatpush1.bf16.msra.mxu0 0
        %2347 = vmatprep.subr.bf16.mxu0 0
        %2348 = vmatpush1.bf16.msra.mxu0 0
        %2349 = vmatprep.subr.bf16.mxu0 0
        %2350 = vmatpush1.bf16.msra.mxu0 0
        %2351 = vmatprep.subr.bf16.mxu0 0
        %2352 = vmatpush1.bf16.msra.mxu0 0
        %2353 = vmatprep.subr.bf16.mxu0 0
        %2354 = vmatpush1.bf16.msra.mxu0 0
        %2355 = vmatprep.subr.bf16.mxu0 0
        %2356 = vmatpush1.bf16.msra.mxu0 0
        %2357 = vmatprep.mubr.bf16.mxu0 0
        %2358 = vmatmul.mubr.bf16.gmra.mrb[0].mxu0 %v2323
        %v2359 = vpop.f32.mrb[0].mxu0
        %v2360 = vadd.f32 %v2311, %v2359
        %v2361 = vpop.f32.mrb[0].mxu0
        %v2362 = vpop.f32.mrb[0].mxu0
        %v2363 = vpop.f32.mrb[0].mxu0
        %2364 = vdwg.mxu0
        %s2365 = scalar_lea.vmem %s10, 1
        %v2366 = vld [vmem:[%s2365] sm:$0x1]
        %v2368 = vlaneseq
        %v2369 = vshrl.u32 %v2368, 7
        %v2370 = vsub.s32 0, %v2369
        %v2371 = vrot.slane %v2366, %v2370
        %v2373 = vadd.f32 %v2360, %v2371
        %v2374 = vadd.f32 %v1646, %v2373
        %s2375 = scalar_lea.vmem %s11, 1
        %v2376 = vld [vmem:[%s2375] sm:$0x1]
        %s2377 = scalar_lea.vmem %s12, 1
        %v2378 = vld [vmem:[%s2377] sm:$0x1]
        %v2379 = vsel %vm735, %v2374, 0.0
        %2380 = vadd.xlane.f32.xlu0 %v2379
        %v2381 = vpop.xlane.xlu0 %2380
        %v2382 = vmul.f32 %v2381, %v1440
        %v2383 = vsub.f32 %v2374, %v2382
        %v2384 = vmul.f32 %v2383, %v2383
        %v2385 = vsel %vm735, %v2384, 0.0
        %2386 = vadd.xlane.f32.xlu0 %v2385
        %v2387 = vpop.xlane.xlu0 %2386
        %v2388 = vmul.f32 %v2387, %v1440
        %v2389 = vadd.f32 %v2388, 1e-05
        %v2390 = vrsqrt.pop %v2389
        %v2391 = vmul.f32 %v2383, %v2390
        %v2393 = vlaneseq
        %v2394 = vshrl.u32 %v2393, 7
        %v2395 = vsub.s32 0, %v2394
        %v2396 = vrot.slane %v2376, %v2395
        %v2398 = vmul.f32 %v2391, %v2396
        %v2400 = vlaneseq
        %v2401 = vshrl.u32 %v2400, 7
        %v2402 = vsub.s32 0, %v2401
        %v2403 = vrot.slane %v2378, %v2402
        %v2405 = vadd.f32 %v2398, %v2403
        %v2406 = vpack.c.bf16 %v2405, %v2405
        %s2407 = scalar_lea.vmem %s13, 16
        %v2408 = vld [vmem:[%s2407] sm:$0xf]
        %v2409 = vld [vmem:[%s2407 + $0x4] sm:$0xf]
        %v2410 = vld [vmem:[%s2407 + $0x8] sm:$0xf]
        %v2411 = vld [vmem:[%s2407 + $0xc] sm:$0xf]
        %s2412 = scalar_lea.vmem %s14, 1
        %v2413 = vld [vmem:[%s2412] sm:$0x1]
        %v2415 = vlaneseq
        %v2416 = vshrl.u32 %v2415, 7
        %v2417 = vsub.s32 0, %v2416
        %v2418 = vrot.slane %v2413, %v2417
        %v2424 = vunpack.c.l.b16 %v2408
        %v2425 = vunpack.c.l.b16 %v2409
        %v2426 = vunpack.c.l.b16 %v2410
        %v2427 = vunpack.c.l.b16 %v2411
        %v2428 = vpack.c.b16 %v2425, %v2424
        %v2429 = vpack.c.b16 %v2427, %v2426
        %v2433 = vsel %vm735, %v2406, 0
        %2435 = vmatprep.subr.bf16.mxu0 0
        %2436 = vmatpush1.bf16.msra.mxu0 %v2428
        %2437 = vmatprep.subr.bf16.mxu0 0
        %2438 = vmatpush1.bf16.msra.mxu0 %v2429
        %2439 = vmatprep.subr.bf16.mxu0 0
        %2440 = vmatpush1.bf16.msra.mxu0 0
        %2441 = vmatprep.subr.bf16.mxu0 0
        %2442 = vmatpush1.bf16.msra.mxu0 0
        %2443 = vmatprep.subr.bf16.mxu0 0
        %2444 = vmatpush1.bf16.msra.mxu0 0
        %2445 = vmatprep.subr.bf16.mxu0 0
        %2446 = vmatpush1.bf16.msra.mxu0 0
        %2447 = vmatprep.subr.bf16.mxu0 0
        %2448 = vmatpush1.bf16.msra.mxu0 0
        %2449 = vmatprep.subr.bf16.mxu0 0
        %2450 = vmatpush1.bf16.msra.mxu0 0
        %2451 = vmatprep.subr.bf16.mxu0 0
        %2452 = vmatpush1.bf16.msra.mxu0 0
        %2453 = vmatprep.subr.bf16.mxu0 0
        %2454 = vmatpush1.bf16.msra.mxu0 0
        %2455 = vmatprep.subr.bf16.mxu0 0
        %2456 = vmatpush1.bf16.msra.mxu0 0
        %2457 = vmatprep.subr.bf16.mxu0 0
        %2458 = vmatpush1.bf16.msra.mxu0 0
        %2459 = vmatprep.subr.bf16.mxu0 0
        %2460 = vmatpush1.bf16.msra.mxu0 0
        %2461 = vmatprep.subr.bf16.mxu0 0
        %2462 = vmatpush1.bf16.msra.mxu0 0
        %2463 = vmatprep.subr.bf16.mxu0 0
        %2464 = vmatpush1.bf16.msra.mxu0 0
        %2465 = vmatprep.subr.bf16.mxu0 0
        %2466 = vmatpush1.bf16.msra.mxu0 0
        %2467 = vmatprep.mubr.bf16.mxu0 0
        %2468 = vmatmul.mubr.bf16.gmra.mrb[0].mxu0 %v2433
        %v2469 = vpop.f32.mrb[0].mxu0
        %v2470 = vadd.f32 %v2418, %v2469
        %v2471 = vpop.f32.mrb[0].mxu0
        %v2472 = vpop.f32.mrb[0].mxu0
        %v2473 = vpop.f32.mrb[0].mxu0
        %2474 = vdwg.mxu0
        %v2475 = vmax.f32 %v2470, 0.0
        %v2476 = vpack.c.bf16 %v2475, %v2475
        %s2477 = scalar_lea.vmem %s15, 32
        %v2478 = vld [vmem:[%s2477] sm:$0xf]
        %v2479 = vld [vmem:[%s2477 + $0x4] sm:$0xf]
        %v2480 = vld [vmem:[%s2477 + $0x8] sm:$0xf]
        %v2481 = vld [vmem:[%s2477 + $0xc] sm:$0xf]
        %v2482 = vld [vmem:[%s2477 + $0x10] sm:$0xf]
        %v2483 = vld [vmem:[%s2477 + $0x14] sm:$0xf]
        %v2484 = vld [vmem:[%s2477 + $0x18] sm:$0xf]
        %v2485 = vld [vmem:[%s2477 + $0x1c] sm:$0xf]
        %s2486 = scalar_lea.vmem %s16, 1
        %v2487 = vld [vmem:[%s2486] sm:$0x1]
        %v2489 = vlaneseq
        %v2490 = vshrl.u32 %v2489, 7
        %v2491 = vsub.s32 0, %v2490
        %v2492 = vrot.slane %v2487, %v2491
        %v2502 = vunpack.c.l.b16 %v2478
        %v2503 = vunpack.c.l.b16 %v2479
        %v2504 = vunpack.c.l.b16 %v2480
        %v2505 = vunpack.c.l.b16 %v2481
        %v2506 = vunpack.c.l.b16 %v2482
        %v2507 = vunpack.c.l.b16 %v2483
        %v2508 = vunpack.c.l.b16 %v2484
        %v2509 = vunpack.c.l.b16 %v2485
        %v2510 = vpack.c.b16 %v2503, %v2502
        %v2511 = vpack.c.b16 %v2505, %v2504
        %v2512 = vpack.c.b16 %v2507, %v2506
        %v2513 = vpack.c.b16 %v2509, %v2508
        %v2519 = vsel %vm1573, %v2476, 0
        %2521 = vmatprep.subr.bf16.mxu0 0
        %2522 = vmatpush1.bf16.msra.mxu0 %v2510
        %2523 = vmatprep.subr.bf16.mxu0 0
        %2524 = vmatpush1.bf16.msra.mxu0 %v2511
        %2525 = vmatprep.subr.bf16.mxu0 0
        %2526 = vmatpush1.bf16.msra.mxu0 %v2512
        %2527 = vmatprep.subr.bf16.mxu0 0
        %2528 = vmatpush1.bf16.msra.mxu0 %v2513
        %2529 = vmatprep.subr.bf16.mxu0 0
        %2530 = vmatpush1.bf16.msra.mxu0 0
        %2531 = vmatprep.subr.bf16.mxu0 0
        %2532 = vmatpush1.bf16.msra.mxu0 0
        %2533 = vmatprep.subr.bf16.mxu0 0
        %2534 = vmatpush1.bf16.msra.mxu0 0
        %2535 = vmatprep.subr.bf16.mxu0 0
        %2536 = vmatpush1.bf16.msra.mxu0 0
        %2537 = vmatprep.subr.bf16.mxu0 0
        %2538 = vmatpush1.bf16.msra.mxu0 0
        %2539 = vmatprep.subr.bf16.mxu0 0
        %2540 = vmatpush1.bf16.msra.mxu0 0
        %2541 = vmatprep.subr.bf16.mxu0 0
        %2542 = vmatpush1.bf16.msra.mxu0 0
        %2543 = vmatprep.subr.bf16.mxu0 0
        %2544 = vmatpush1.bf16.msra.mxu0 0
        %2545 = vmatprep.subr.bf16.mxu0 0
        %2546 = vmatpush1.bf16.msra.mxu0 0
        %2547 = vmatprep.subr.bf16.mxu0 0
        %2548 = vmatpush1.bf16.msra.mxu0 0
        %2549 = vmatprep.subr.bf16.mxu0 0
        %2550 = vmatpush1.bf16.msra.mxu0 0
        %2551 = vmatprep.subr.bf16.mxu0 0
        %2552 = vmatpush1.bf16.msra.mxu0 0
        %2553 = vmatprep.mubr.bf16.mxu0 0
        %2554 = vmatmul.mubr.bf16.gmra.mrb[0].mxu0 %v2519
        %v2555 = vpop.f32.mrb[0].mxu0
        %v2556 = vadd.f32 %v2492, %v2555
        %v2557 = vpop.f32.mrb[0].mxu0
        %v2558 = vpop.f32.mrb[0].mxu0
        %v2559 = vpop.f32.mrb[0].mxu0
        %2560 = vdwg.mxu0
        %v2561 = vadd.f32 %v2405, %v2556
        %s2562 = scalar_lea.vmem %s17, 1
        %v2563 = vld [vmem:[%s2562] sm:$0x1]
        %s2564 = scalar_lea.vmem %s18, 1
        %v2565 = vld [vmem:[%s2564] sm:$0x1]
        %v2566 = vsel %vm735, %v2561, 0.0
        %2567 = vadd.xlane.f32.xlu0 %v2566
        %v2568 = vpop.xlane.xlu0 %2567
        %v2569 = vmul.f32 %v2568, %v1440
        %v2570 = vsub.f32 %v2561, %v2569
        %v2571 = vmul.f32 %v2570, %v2570
        %v2572 = vsel %vm735, %v2571, 0.0
        %2573 = vadd.xlane.f32.xlu0 %v2572
        %v2574 = vpop.xlane.xlu0 %2573
        %v2575 = vmul.f32 %v2574, %v1440
        %v2576 = vadd.f32 %v2575, 1e-05
        %v2577 = vrsqrt.pop %v2576
        %v2578 = vmul.f32 %v2570, %v2577
        %v2580 = vlaneseq
        %v2581 = vshrl.u32 %v2580, 7
        %v2582 = vsub.s32 0, %v2581
        %v2583 = vrot.slane %v2563, %v2582
        %v2585 = vmul.f32 %v2578, %v2583
        %v2587 = vlaneseq
        %v2588 = vshrl.u32 %v2587, 7
        %v2589 = vsub.s32 0, %v2588
        %v2590 = vrot.slane %v2565, %v2589
        %v2592 = vadd.f32 %v2585, %v2590
        %v2593 = vld [vmem:[%s19] sm:$0xf]
        %v2594 = vld [vmem:[%s19 + $0x4] sm:$0xf]
        %v2595 = vld [vmem:[%s19 + $0x8] sm:$0xf]
        %v2596 = vld [vmem:[%s19 + $0xc] sm:$0xf]
        %v2597 = vld [vmem:[%s20] sm:$0x1]
        %v2598 = vld [vmem:[%s21] sm:$0xf]
        %v2599 = vld [vmem:[%s21 + $0x4] sm:$0xf]
        %v2600 = vld [vmem:[%s21 + $0x8] sm:$0xf]
        %v2601 = vld [vmem:[%s21 + $0xc] sm:$0xf]
        %v2602 = vld [vmem:[%s22] sm:$0x1]
        %v2603 = vpack.c.bf16 %v2592, %v2592
        %v2605 = vshrl.u32 %v2603, 16
        %v2607 = vrot.slane %v2605, 1
        %v2612 = vunpack.c.l.b16 %v2593
        %v2613 = vunpack.c.l.b16 %v2594
        %v2614 = vunpack.c.l.b16 %v2595
        %v2615 = vunpack.c.l.b16 %v2596
        %v2616 = vpack.c.b16 %v2613, %v2612
        %v2617 = vpack.c.b16 %v2615, %v2614
        %v2621 = vsel %vm735, %v2607, 0
        %2623 = vmatprep.subr.bf16.mxu0 0
        %2624 = vmatpush1.bf16.msra.mxu0 %v2616
        %2625 = vmatprep.subr.bf16.mxu0 0
        %2626 = vmatpush1.bf16.msra.mxu0 %v2617
        %2627 = vmatprep.subr.bf16.mxu0 0
        %2628 = vmatpush1.bf16.msra.mxu0 0
        %2629 = vmatprep.subr.bf16.mxu0 0
        %2630 = vmatpush1.bf16.msra.mxu0 0
        %2631 = vmatprep.subr.bf16.mxu0 0
        %2632 = vmatpush1.bf16.msra.mxu0 0
        %2633 = vmatprep.subr.bf16.mxu0 0
        %2634 = vmatpush1.bf16.msra.mxu0 0
        %2635 = vmatprep.subr.bf16.mxu0 0
        %2636 = vmatpush1.bf16.msra.mxu0 0
        %2637 = vmatprep.subr.bf16.mxu0 0
        %2638 = vmatpush1.bf16.msra.mxu0 0
        %2639 = vmatprep.subr.bf16.mxu0 0
        %2640 = vmatpush1.bf16.msra.mxu0 0
        %2641 = vmatprep.subr.bf16.mxu0 0
        %2642 = vmatpush1.bf16.msra.mxu0 0
        %2643 = vmatprep.subr.bf16.mxu0 0
        %2644 = vmatpush1.bf16.msra.mxu0 0
        %2645 = vmatprep.subr.bf16.mxu0 0
        %2646 = vmatpush1.bf16.msra.mxu0 0
        %2647 = vmatprep.subr.bf16.mxu0 0
        %2648 = vmatpush1.bf16.msra.mxu0 0
        %2649 = vmatprep.subr.bf16.mxu0 0
        %2650 = vmatpush1.bf16.msra.mxu0 0
        %2651 = vmatprep.subr.bf16.mxu0 0
        %2652 = vmatpush1.bf16.msra.mxu0 0
        %2653 = vmatprep.subr.bf16.mxu0 0
        %2654 = vmatpush1.bf16.msra.mxu0 0
        %2655 = vmatprep.mubr.bf16.mxu0 0
        %2656 = vmatmul.mubr.bf16.gmra.mrb[0].mxu0 %v2621
        %v2657 = vpop.f32.mrb[0].mxu0
        %v2658 = vadd.f32 %v2597, %v2657
        %v2659 = vpop.f32.mrb[0].mxu0
        %v2660 = vpop.f32.mrb[0].mxu0
        %v2661 = vpop.f32.mrb[0].mxu0
        %2662 = vdwg.mxu0
        %v2663 = vxor.u32 %v2658, 2147483648
        %v2664 = vmul.f32 %v2663, 1.442695
        %v2665 = vpow.pop %v2664
        %v2666 = vadd.f32 %v2665, 1.0
        %v2667 = vrcp.pop %v2666
        %v2668 = vmul.f32 1.0, %v2667
        %v2673 = vunpack.c.l.b16 %v2598
        %v2674 = vunpack.c.l.b16 %v2599
        %v2675 = vunpack.c.l.b16 %v2600
        %v2676 = vunpack.c.l.b16 %v2601
        %v2677 = vpack.c.b16 %v2674, %v2673
        %v2678 = vpack.c.b16 %v2676, %v2675
        %2681 = vmatprep.subr.bf16.mxu0 0
        %2682 = vmatpush1.bf16.msra.mxu0 %v2677
        %2683 = vmatprep.subr.bf16.mxu0 0
        %2684 = vmatpush1.bf16.msra.mxu0 %v2678
        %2685 = vmatprep.subr.bf16.mxu0 0
        %2686 = vmatpush1.bf16.msra.mxu0 0
        %2687 = vmatprep.subr.bf16.mxu0 0
        %2688 = vmatpush1.bf16.msra.mxu0 0
        %2689 = vmatprep.subr.bf16.mxu0 0
        %2690 = vmatpush1.bf16.msra.mxu0 0
        %2691 = vmatprep.subr.bf16.mxu0 0
        %2692 = vmatpush1.bf16.msra.mxu0 0
        %2693 = vmatprep.subr.bf16.mxu0 0
        %2694 = vmatpush1.bf16.msra.mxu0 0
        %2695 = vmatprep.subr.bf16.mxu0 0
        %2696 = vmatpush1.bf16.msra.mxu0 0
        %2697 = vmatprep.subr.bf16.mxu0 0
        %2698 = vmatpush1.bf16.msra.mxu0 0
        %2699 = vmatprep.subr.bf16.mxu0 0
        %2700 = vmatpush1.bf16.msra.mxu0 0
        %2701 = vmatprep.subr.bf16.mxu0 0
        %2702 = vmatpush1.bf16.msra.mxu0 0
        %2703 = vmatprep.subr.bf16.mxu0 0
        %2704 = vmatpush1.bf16.msra.mxu0 0
        %2705 = vmatprep.subr.bf16.mxu0 0
        %2706 = vmatpush1.bf16.msra.mxu0 0
        %2707 = vmatprep.subr.bf16.mxu0 0
        %2708 = vmatpush1.bf16.msra.mxu0 0
        %2709 = vmatprep.subr.bf16.mxu0 0
        %2710 = vmatpush1.bf16.msra.mxu0 0
        %2711 = vmatprep.subr.bf16.mxu0 0
        %2712 = vmatpush1.bf16.msra.mxu0 0
        %2713 = vmatprep.mubr.bf16.mxu0 0
        %2714 = vmatmul.mubr.bf16.gmra.mrb[0].mxu0 %v2621
        %v2715 = vpop.f32.mrb[0].mxu0
        %v2716 = vadd.f32 %v2602, %v2715
        %v2717 = vpop.f32.mrb[0].mxu0
        %v2718 = vpop.f32.mrb[0].mxu0
        %v2719 = vpop.f32.mrb[0].mxu0
        %2720 = vdwg.mxu0
        %v2721 = vsub.f32 1.0, %v2668
        %v2722 = vmul.f32 %v2721, 0.0
        %v2723 = vmul.f32 %v2668, %v2716
        %v2724 = vadd.f32 %v2722, %v2723
        %v2725 = vrot.slane %v2605, 3
        %v2727 = vsel %vm735, %v2725, 0
        %2729 = vmatprep.subr.bf16.mxu0 0
        %2730 = vmatpush1.bf16.msra.mxu0 %v2616
        %2731 = vmatprep.subr.bf16.mxu0 0
        %2732 = vmatpush1.bf16.msra.mxu0 %v2617
        %2733 = vmatprep.subr.bf16.mxu0 0
        %2734 = vmatpush1.bf16.msra.mxu0 0
        %2735 = vmatprep.subr.bf16.mxu0 0
        %2736 = vmatpush1.bf16.msra.mxu0 0
        %2737 = vmatprep.subr.bf16.mxu0 0
        %2738 = vmatpush1.bf16.msra.mxu0 0
        %2739 = vmatprep.subr.bf16.mxu0 0
        %2740 = vmatpush1.bf16.msra.mxu0 0
        %2741 = vmatprep.subr.bf16.mxu0 0
        %2742 = vmatpush1.bf16.msra.mxu0 0
        %2743 = vmatprep.subr.bf16.mxu0 0
        %2744 = vmatpush1.bf16.msra.mxu0 0
        %2745 = vmatprep.subr.bf16.mxu0 0
        %2746 = vmatpush1.bf16.msra.mxu0 0
        %2747 = vmatprep.subr.bf16.mxu0 0
        %2748 = vmatpush1.bf16.msra.mxu0 0
        %2749 = vmatprep.subr.bf16.mxu0 0
        %2750 = vmatpush1.bf16.msra.mxu0 0
        %2751 = vmatprep.subr.bf16.mxu0 0
        %2752 = vmatpush1.bf16.msra.mxu0 0
        %2753 = vmatprep.subr.bf16.mxu0 0
        %2754 = vmatpush1.bf16.msra.mxu0 0
        %2755 = vmatprep.subr.bf16.mxu0 0
        %2756 = vmatpush1.bf16.msra.mxu0 0
        %2757 = vmatprep.subr.bf16.mxu0 0
        %2758 = vmatpush1.bf16.msra.mxu0 0
        %2759 = vmatprep.subr.bf16.mxu0 0
        %2760 = vmatpush1.bf16.msra.mxu0 0
        %2761 = vmatprep.mubr.bf16.mxu0 0
        %2762 = vmatmul.mubr.bf16.gmra.mrb[0].mxu0 %v2727
        %v2763 = vpop.f32.mrb[0].mxu0
        %v2764 = vadd.f32 %v2597, %v2763
        %v2765 = vpop.f32.mrb[0].mxu0
        %v2766 = vpop.f32.mrb[0].mxu0
        %v2767 = vpop.f32.mrb[0].mxu0
        %2768 = vdwg.mxu0
        %v2769 = vxor.u32 %v2764, 2147483648
        %v2770 = vmul.f32 %v2769, 1.442695
        %v2771 = vpow.pop %v2770
        %v2772 = vadd.f32 %v2771, 1.0
        %v2773 = vrcp.pop %v2772
        %v2774 = vmul.f32 1.0, %v2773
        %2775 = vmatprep.subr.bf16.mxu0 0
        %2776 = vmatpush1.bf16.msra.mxu0 %v2677
        %2777 = vmatprep.subr.bf16.mxu0 0
        %2778 = vmatpush1.bf16.msra.mxu0 %v2678
        %2779 = vmatprep.subr.bf16.mxu0 0
        %2780 = vmatpush1.bf16.msra.mxu0 0
        %2781 = vmatprep.subr.bf16.mxu0 0
        %2782 = vmatpush1.bf16.msra.mxu0 0
        %2783 = vmatprep.subr.bf16.mxu0 0
        %2784 = vmatpush1.bf16.msra.mxu0 0
        %2785 = vmatprep.subr.bf16.mxu0 0
        %2786 = vmatpush1.bf16.msra.mxu0 0
        %2787 = vmatprep.subr.bf16.mxu0 0
        %2788 = vmatpush1.bf16.msra.mxu0 0
        %2789 = vmatprep.subr.bf16.mxu0 0
        %2790 = vmatpush1.bf16.msra.mxu0 0
        %2791 = vmatprep.subr.bf16.mxu0 0
        %2792 = vmatpush1.bf16.msra.mxu0 0
        %2793 = vmatprep.subr.bf16.mxu0 0
        %2794 = vmatpush1.bf16.msra.mxu0 0
        %2795 = vmatprep.subr.bf16.mxu0 0
        %2796 = vmatpush1.bf16.msra.mxu0 0
        %2797 = vmatprep.subr.bf16.mxu0 0
        %2798 = vmatpush1.bf16.msra.mxu0 0
        %2799 = vmatprep.subr.bf16.mxu0 0
        %2800 = vmatpush1.bf16.msra.mxu0 0
        %2801 = vmatprep.subr.bf16.mxu0 0
        %2802 = vmatpush1.bf16.msra.mxu0 0
        %2803 = vmatprep.subr.bf16.mxu0 0
        %2804 = vmatpush1.bf16.msra.mxu0 0
        %2805 = vmatprep.subr.bf16.mxu0 0
        %2806 = vmatpush1.bf16.msra.mxu0 0
        %2807 = vmatprep.mubr.bf16.mxu0 0
        %2808 = vmatmul.mubr.bf16.gmra.mrb[0].mxu0 %v2727
        %v2809 = vpop.f32.mrb[0].mxu0
        %v2810 = vadd.f32 %v2602, %v2809
        %v2811 = vpop.f32.mrb[0].mxu0
        %v2812 = vpop.f32.mrb[0].mxu0
        %v2813 = vpop.f32.mrb[0].mxu0
        %2814 = vdwg.mxu0
        %v2815 = vsub.f32 1.0, %v2774
        %v2816 = vmul.f32 %v2815, %v2724
        %v2817 = vmul.f32 %v2774, %v2810
        %v2818 = vadd.f32 %v2816, %v2817
        %vm2819 = vcmask 253952
        %2820 = vst.msk [vmem:[%s700] sm:$0x1] %vm2819, %v2818
        %s2821 = sand.u32 %s533, 1
        %s2822 = scalar_lea.sflag [#allocation3], %s2821
        %s2823 = sand.u32 %s533, 1
        %s2824 = scalar_lea.vmem [#allocation2], %s2823
        // Predicated region
        $region113: #{tpu_custom_call.1} parent=111 // pred_check
          %p2825 = pneg %p543
        $region114: #{tpu_custom_call.1} parent=111 // pred_check_branch
          %2827 = sbr.rel (%p2825) target = $region116
        $region115: #{tpu_custom_call.1} parent=111 // pred_region
          %s2829 = ssub.s32 16, 16
          %2830 = vsyncadd %s2822, %s2829
          %s2831 = smul.addr %s37, 16
          %s2832 = scalar_lea.hbm %s23, %s2831
          %s2834 = sshll.u32 %s2824, 4
          %s2835 = int_to_ptr.vmem [resolvable:$true] %s2834
          %2837 = dma.vmem_to_hbm [thread:$0]  %s2835, 16, %s2832, %s2822
        $region116: #{tpu_custom_call.1} parent=111 // pred_fallthru
          _
      $region112: #{tpu_custom_call.1} parent=5 // pred_fallthru
        _
      %p2838 = scmp.le.s32.totalorder 2, %s32
      // Predicated region
      $region117: #{tpu_custom_call.1} parent=5 // pred_check
        %p2839 = pneg %p2838
      $region118: #{tpu_custom_call.1} parent=5 // pred_check_branch
        %2841 = sbr.rel (%p2839) target = $region120
      $region119: #{tpu_custom_call.1} parent=5 // pred_region
        %s2842 = ssub.s32 %s32, 2
        // Predicated region
        $region121: #{tpu_custom_call.1} parent=119 // pred_check
          %p2843 = pneg %p549
        $region122: #{tpu_custom_call.1} parent=119 // pred_check_branch
          %2845 = sbr.rel (%p2843) target = $region124
        $region123: #{tpu_custom_call.1} parent=119 // pred_region
          %s2846 = sand.u32 %s534, 1
          %s2847 = scalar_lea.sflag [#allocation3], %s2846
          %s2848 = sand.u32 %s534, 1
          %s2849 = scalar_lea.vmem [#allocation2], %s2848
          %2850 = dma.done %s2847, 16
        $region124: #{tpu_custom_call.1} parent=119 // pred_fallthru
          _
      $region120: #{tpu_custom_call.1} parent=5 // pred_fallthru
        _
    $region6: #{tpu_custom_call.1} parent=1 // loop_footer
      %s36 = sadd.s32 1, %s32
    $region7: #{tpu_custom_call.1} parent=1 // loop_footer_branch
      %31 = sbr.rel target = $region3
    $region8: #{tpu_custom_call.1} parent=1 // loop_exit
      _
    %2851 = vsyncpa [#allocation3], 1
    %s2852 = scalar_lea.sflag [#allocation3], 1
    %2853 = vsyncpa %s2852, 1

</llo_original>
